<compile_context>
chip_gen: v7x
topology: tpu7x:2x2x1
jax: 0.10.0
libtpu: 0.0.40
codegen_flags: <defaults>
</compile_context>

<pallas_src>
import functools
import math

import jax
import jax.numpy as jnp
from jax.experimental import pallas as pl
from jax.experimental.pallas import tpu as pltpu


def _conv_taps_bias_relu_kernel(x_ref, w_ref, b_ref, o_ref, *,
                                tile_h, W_out, KH, KW):
    """Fused stride-1 conv + bias + ReLU for one (image, output-row block).

    x_ref: (1, H_pad, W_pad, C_in)    halo-padded NHWC image (compute dtype)
    w_ref: (KH*KW, C_in, C_out)       per-tap weights (compute dtype)
    b_ref: (1, C_out)                 bias, f32
    o_ref: (1, tile_h * W_out, C_out) output rows (flattened (h, w))
    """
    hb = pl.program_id(1)
    h0 = hb * tile_h                      # first output row of this block
    rows = tile_h * W_out
    c_in = x_ref.shape[-1]
    c_out = o_ref.shape[-1]

    acc = jnp.zeros((rows, c_out), jnp.float32)
    # Static unroll over the KH*KW taps: each tap is a shifted window of the
    # resident padded image -> one (rows, C_in) x (C_in, C_out) MXU matmul.
    for kh in range(KH):
        for kw in range(KW):
            xs = x_ref[0, pl.ds(h0 + kh, tile_h), pl.ds(kw, W_out), :]
            # Merge (tile_h, W_out) into the GEMM row dim; the lane dim
            # (C_in) is unchanged, so this reshape is layout-trivial when
            # W_out % 8 == 0 and a cheap sublane repack otherwise.
            xs = xs.reshape(rows, c_in)
            acc = acc + jnp.dot(xs, w_ref[kh * KW + kw],
                                preferred_element_type=jnp.float32)
    acc = acc + b_ref[...]                # (1, C_out) broadcasts; f32 epilogue
    o_ref[0] = jnp.maximum(acc, 0.0).astype(o_ref.dtype)


def basic_block_forward(x, weight, bias, *, stride=1, pad=1,
                        compute_dtype=jnp.bfloat16,
                        target_rows_per_step=512):
    """ReLU(Conv2d(x)).  x: (N, C_in, H, W) NCHW; weight: (C_out, C_in, KH, KW)."""
    N, C_in, H, W = x.shape
    C_out, C_in_w, KH, KW = weight.shape
    assert C_in == C_in_w, "channel mismatch"

    # Stride-1 conv geometry; stride > 1 handled by exact output subsampling.
    H1 = H + 2 * pad - KH + 1
    W1 = W + 2 * pad - KW + 1
    assert H1 >= 1 and W1 >= 1, "conv output is empty"

    # ---- row-block tiling --------------------------------------------------
    tile_h = max(1, min(H1, target_rows_per_step // max(1, W1)))
    n_hblk = pl.cdiv(H1, tile_h)
    if N * n_hblk < 2 and H1 >= 2:        # keep >= 2 grid steps (v7x megacore)
        tile_h = -(-H1 // 2)
        n_hblk = pl.cdiv(H1, tile_h)
    if n_hblk > 1 and (tile_h * W1) % 8 != 0:   # sublane-align the out block
        g = 8 // math.gcd(8, W1)
        tile_h = min(H1, -(-tile_h // g) * g)
        n_hblk = pl.cdiv(H1, tile_h)
    H1p = n_hblk * tile_h                 # padded output-row count

    # ---- layout plumbing only (no compute): NCHW -> NHWC, halo pad, cast ---
    x_nhwc = jnp.transpose(x, (0, 2, 3, 1))
    x_pad = jnp.pad(
        x_nhwc,
        ((0, 0), (pad, pad + (H1p - H1)), (pad, pad), (0, 0)),
    ).astype(compute_dtype)               # (N, H1p + KH - 1, W + 2*pad, C_in)
    W_padded = W + 2 * pad

    # weight (C_out, C_in, KH, KW) -> (KH*KW, C_in, C_out), tap-major (kh, kw)
    w_taps = jnp.transpose(weight, (2, 3, 1, 0)).reshape(
        KH * KW, C_in, C_out).astype(compute_dtype)
    b2 = bias.reshape(1, C_out).astype(jnp.float32)

    kernel = functools.partial(_conv_taps_bias_relu_kernel,
                               tile_h=tile_h, W_out=W1, KH=KH, KW=KW)

    out = pl.pallas_call(
        kernel,
        out_shape=jax.ShapeDtypeStruct((N, H1p * W1, C_out), x.dtype),
        grid_spec=pltpu.PrefetchScalarGridSpec(
            num_scalar_prefetch=0,
            grid=(N, n_hblk),
            in_specs=[
                # Whole halo-padded image of batch element n stays resident
                # for its row blocks (tiny here; see TODO for huge maps).
                pl.BlockSpec((1, H1p + KH - 1, W_padded, C_in),
                             lambda n, hb: (n, 0, 0, 0)),
                pl.BlockSpec((KH * KW, C_in, C_out), lambda n, hb: (0, 0, 0)),
                pl.BlockSpec((1, C_out), lambda n, hb: (0, 0)),
            ],
            out_specs=pl.BlockSpec((1, tile_h * W1, C_out),
                                   lambda n, hb: (n, hb, 0)),
        ),
        compiler_params=pltpu.CompilerParams(
            dimension_semantics=("parallel", "parallel"),
        ),
    )(x_pad, w_taps, b2)

    out = out.reshape(N, H1p, W1, C_out)[:, :H1]      # drop ragged padding
    if stride != 1:
        out = out[:, ::stride, ::stride, :]           # exact strided conv
    return jnp.transpose(out, (0, 3, 1, 2))           # back to NCHW


if __name__ == "__main__":
    key = jax.random.PRNGKey(0)
    k1, k2, k3 = jax.random.split(key, 3)

    # Small shapes consistent with the module: batch=2, in_c=4, 16x16 spatial.
    N, C_in, H, W = 2, 4, 16, 16
    C_out, KH, KW = 8, 3, 3

    x = jax.random.normal(k1, (N, C_in, H, W), dtype=jnp.float32)
    weight = jax.random.normal(k2, (C_out, C_in, KH, KW), dtype=jnp.float32)
    weight = weight / jnp.sqrt(float(C_in * KH * KW))
    bias = 0.1 * jax.random.normal(k3, (C_out,), dtype=jnp.float32)

    # Reference: full-precision XLA conv + bias + ReLU (== PyTorch forward).
    y_conv = jax.lax.conv_general_dilated(
        x, weight, window_strides=(1, 1), padding=((1, 1), (1, 1)),
        dimension_numbers=("NCHW", "OIHW", "NCHW"),
        precision=jax.lax.Precision.HIGHEST)
    y_ref = jnp.maximum(y_conv + bias.reshape(1, -1, 1, 1), 0.0)

    # 1) f32 streaming path -- tight check.
    y32 = jax.block_until_ready(
        basic_block_forward(x, weight, bias, compute_dtype=jnp.float32))
    assert y32.shape == y_ref.shape, (y32.shape, y_ref.shape)
    err32 = float(jnp.max(jnp.abs(y32 - y_ref)))
    assert jnp.allclose(y32, y_ref, atol=1e-3, rtol=1e-3), \
        f"f32 mismatch, max_err={err32}"

    # 2) default bf16-streaming path (f32 accumulate/epilogue) -- loose check.
    ybf = jax.block_until_ready(basic_block_forward(x, weight, bias))
    errbf = float(jnp.max(jnp.abs(ybf - y_ref)))
    assert jnp.allclose(ybf, y_ref, atol=5e-2, rtol=5e-2), \
        f"bf16 mismatch, max_err={errbf}"

    print("KERNEL_OK")
</pallas_src>

<mosaic_0001>
module attributes {stable_mosaic.version = 11 : i64} {
  func.func @_conv_taps_bias_relu_kernel(%arg0: i32, %arg1: i32, %arg2: memref<1x18x18x4xf32, #tpu.memory_space<vmem>>, %arg3: memref<9x4x8xf32, #tpu.memory_space<vmem>>, %arg4: memref<1x8xf32, #tpu.memory_space<vmem>>, %arg5: memref<1x256x8xf32, #tpu.memory_space<vmem>>) attributes {dimension_semantics = [#tpu.dimension_semantics<parallel>, #tpu.dimension_semantics<parallel>], iteration_bounds = array<i64: 2, 1>, scalar_prefetch = 0 : i64, scratch_operands = 0 : i64, tpu.core_type = #tpu.core_type<tc>, window_params = [{transform_indices = @transform_0, window_bounds = array<i64: 1, 18, 18, 4>}, {pipeline_mode = #tpu.pipeline_mode<synchronous>, transform_indices = @transform_1, window_bounds = array<i64: 9, 4, 8>}, {pipeline_mode = #tpu.pipeline_mode<synchronous>, transform_indices = @transform_2, window_bounds = array<i64: 1, 8>}, {transform_indices = @transform_3, window_bounds = array<i64: 1, 256, 8>}]} {
    %c16_i32 = arith.constant 16 : i32
    %0 = arith.muli %arg1, %c16_i32 : i32
    %cst = arith.constant 0.000000e+00 : f32
    %1 = vector.broadcast %cst : f32 to vector<256x8xf32>
    %c0_i32 = arith.constant 0 : i32
    %2 = arith.addi %0, %c0_i32 : i32
    %c0 = arith.constant 0 : index
    %3 = arith.index_cast %2 : i32 to index
    %c0_0 = arith.constant 0 : index
    %c0_1 = arith.constant 0 : index
    %4 = vector.load %arg2[%c0, %3, %c0_0, %c0_1] : memref<1x18x18x4xf32, #tpu.memory_space<vmem>>, vector<1x16x16x4xf32>
    %5 = vector.shape_cast %4 : vector<1x16x16x4xf32> to vector<16x16x4xf32>
    %6 = vector.shape_cast %5 : vector<16x16x4xf32> to vector<256x4xf32>
    %c0_2 = arith.constant 0 : index
    %c0_3 = arith.constant 0 : index
    %c0_4 = arith.constant 0 : index
    %7 = vector.load %arg3[%c0_2, %c0_3, %c0_4] : memref<9x4x8xf32, #tpu.memory_space<vmem>>, vector<1x4x8xf32>
    %8 = vector.shape_cast %7 : vector<1x4x8xf32> to vector<4x8xf32>
    %cst_5 = arith.constant dense<0.000000e+00> : vector<256x8xf32>
    %9 = tpu.matmul %6, %8, %cst_5 {dimension_numbers = #tpu.dot_dimension_numbers<[1], [0], [0], [1], [0, 0, 1, 1], [], []>} : vector<256x4xf32>, vector<4x8xf32>, vector<256x8xf32> -> vector<256x8xf32>
    %10 = arith.addf %1, %9 : vector<256x8xf32>
    %c0_i32_6 = arith.constant 0 : i32
    %11 = arith.addi %0, %c0_i32_6 : i32
    %c0_7 = arith.constant 0 : index
    %12 = arith.index_cast %11 : i32 to index
    %c1 = arith.constant 1 : index
    %c0_8 = arith.constant 0 : index
    %13 = vector.load %arg2[%c0_7, %12, %c1, %c0_8] : memref<1x18x18x4xf32, #tpu.memory_space<vmem>>, vector<1x16x16x4xf32>
    %14 = vector.shape_cast %13 : vector<1x16x16x4xf32> to vector<16x16x4xf32>
    %15 = vector.shape_cast %14 : vector<16x16x4xf32> to vector<256x4xf32>
    %c1_9 = arith.constant 1 : index
    %c0_10 = arith.constant 0 : index
    %c0_11 = arith.constant 0 : index
    %16 = vector.load %arg3[%c1_9, %c0_10, %c0_11] : memref<9x4x8xf32, #tpu.memory_space<vmem>>, vector<1x4x8xf32>
    %17 = vector.shape_cast %16 : vector<1x4x8xf32> to vector<4x8xf32>
    %cst_12 = arith.constant dense<0.000000e+00> : vector<256x8xf32>
    %18 = tpu.matmul %15, %17, %cst_12 {dimension_numbers = #tpu.dot_dimension_numbers<[1], [0], [0], [1], [0, 0, 1, 1], [], []>} : vector<256x4xf32>, vector<4x8xf32>, vector<256x8xf32> -> vector<256x8xf32>
    %19 = arith.addf %10, %18 : vector<256x8xf32>
    %c0_i32_13 = arith.constant 0 : i32
    %20 = arith.addi %0, %c0_i32_13 : i32
    %c0_14 = arith.constant 0 : index
    %21 = arith.index_cast %20 : i32 to index
    %c2 = arith.constant 2 : index
    %c0_15 = arith.constant 0 : index
    %22 = vector.load %arg2[%c0_14, %21, %c2, %c0_15] : memref<1x18x18x4xf32, #tpu.memory_space<vmem>>, vector<1x16x16x4xf32>
    %23 = vector.shape_cast %22 : vector<1x16x16x4xf32> to vector<16x16x4xf32>
    %24 = vector.shape_cast %23 : vector<16x16x4xf32> to vector<256x4xf32>
    %c2_16 = arith.constant 2 : index
    %c0_17 = arith.constant 0 : index
    %c0_18 = arith.constant 0 : index
    %25 = vector.load %arg3[%c2_16, %c0_17, %c0_18] : memref<9x4x8xf32, #tpu.memory_space<vmem>>, vector<1x4x8xf32>
    %26 = vector.shape_cast %25 : vector<1x4x8xf32> to vector<4x8xf32>
    %cst_19 = arith.constant dense<0.000000e+00> : vector<256x8xf32>
    %27 = tpu.matmul %24, %26, %cst_19 {dimension_numbers = #tpu.dot_dimension_numbers<[1], [0], [0], [1], [0, 0, 1, 1], [], []>} : vector<256x4xf32>, vector<4x8xf32>, vector<256x8xf32> -> vector<256x8xf32>
    %28 = arith.addf %19, %27 : vector<256x8xf32>
    %c1_i32 = arith.constant 1 : i32
    %29 = arith.addi %0, %c1_i32 : i32
    %c0_20 = arith.constant 0 : index
    %30 = arith.index_cast %29 : i32 to index
    %c0_21 = arith.constant 0 : index
    %c0_22 = arith.constant 0 : index
    %31 = vector.load %arg2[%c0_20, %30, %c0_21, %c0_22] : memref<1x18x18x4xf32, #tpu.memory_space<vmem>>, vector<1x16x16x4xf32>
    %32 = vector.shape_cast %31 : vector<1x16x16x4xf32> to vector<16x16x4xf32>
    %33 = vector.shape_cast %32 : vector<16x16x4xf32> to vector<256x4xf32>
    %c3 = arith.constant 3 : index
    %c0_23 = arith.constant 0 : index
    %c0_24 = arith.constant 0 : index
    %34 = vector.load %arg3[%c3, %c0_23, %c0_24] : memref<9x4x8xf32, #tpu.memory_space<vmem>>, vector<1x4x8xf32>
    %35 = vector.shape_cast %34 : vector<1x4x8xf32> to vector<4x8xf32>
    %cst_25 = arith.constant dense<0.000000e+00> : vector<256x8xf32>
    %36 = tpu.matmul %33, %35, %cst_25 {dimension_numbers = #tpu.dot_dimension_numbers<[1], [0], [0], [1], [0, 0, 1, 1], [], []>} : vector<256x4xf32>, vector<4x8xf32>, vector<256x8xf32> -> vector<256x8xf32>
    %37 = arith.addf %28, %36 : vector<256x8xf32>
    %c1_i32_26 = arith.constant 1 : i32
    %38 = arith.addi %0, %c1_i32_26 : i32
    %c0_27 = arith.constant 0 : index
    %39 = arith.index_cast %38 : i32 to index
    %c1_28 = arith.constant 1 : index
    %c0_29 = arith.constant 0 : index
    %40 = vector.load %arg2[%c0_27, %39, %c1_28, %c0_29] : memref<1x18x18x4xf32, #tpu.memory_space<vmem>>, vector<1x16x16x4xf32>
    %41 = vector.shape_cast %40 : vector<1x16x16x4xf32> to vector<16x16x4xf32>
    %42 = vector.shape_cast %41 : vector<16x16x4xf32> to vector<256x4xf32>
    %c4 = arith.constant 4 : index
    %c0_30 = arith.constant 0 : index
    %c0_31 = arith.constant 0 : index
    %43 = vector.load %arg3[%c4, %c0_30, %c0_31] : memref<9x4x8xf32, #tpu.memory_space<vmem>>, vector<1x4x8xf32>
    %44 = vector.shape_cast %43 : vector<1x4x8xf32> to vector<4x8xf32>
    %cst_32 = arith.constant dense<0.000000e+00> : vector<256x8xf32>
    %45 = tpu.matmul %42, %44, %cst_32 {dimension_numbers = #tpu.dot_dimension_numbers<[1], [0], [0], [1], [0, 0, 1, 1], [], []>} : vector<256x4xf32>, vector<4x8xf32>, vector<256x8xf32> -> vector<256x8xf32>
    %46 = arith.addf %37, %45 : vector<256x8xf32>
    %c1_i32_33 = arith.constant 1 : i32
    %47 = arith.addi %0, %c1_i32_33 : i32
    %c0_34 = arith.constant 0 : index
    %48 = arith.index_cast %47 : i32 to index
    %c2_35 = arith.constant 2 : index
    %c0_36 = arith.constant 0 : index
    %49 = vector.load %arg2[%c0_34, %48, %c2_35, %c0_36] : memref<1x18x18x4xf32, #tpu.memory_space<vmem>>, vector<1x16x16x4xf32>
    %50 = vector.shape_cast %49 : vector<1x16x16x4xf32> to vector<16x16x4xf32>
    %51 = vector.shape_cast %50 : vector<16x16x4xf32> to vector<256x4xf32>
    %c5 = arith.constant 5 : index
    %c0_37 = arith.constant 0 : index
    %c0_38 = arith.constant 0 : index
    %52 = vector.load %arg3[%c5, %c0_37, %c0_38] : memref<9x4x8xf32, #tpu.memory_space<vmem>>, vector<1x4x8xf32>
    %53 = vector.shape_cast %52 : vector<1x4x8xf32> to vector<4x8xf32>
    %cst_39 = arith.constant dense<0.000000e+00> : vector<256x8xf32>
    %54 = tpu.matmul %51, %53, %cst_39 {dimension_numbers = #tpu.dot_dimension_numbers<[1], [0], [0], [1], [0, 0, 1, 1], [], []>} : vector<256x4xf32>, vector<4x8xf32>, vector<256x8xf32> -> vector<256x8xf32>
    %55 = arith.addf %46, %54 : vector<256x8xf32>
    %c2_i32 = arith.constant 2 : i32
    %56 = arith.addi %0, %c2_i32 : i32
    %c0_40 = arith.constant 0 : index
    %57 = arith.index_cast %56 : i32 to index
    %c0_41 = arith.constant 0 : index
    %c0_42 = arith.constant 0 : index
    %58 = vector.load %arg2[%c0_40, %57, %c0_41, %c0_42] : memref<1x18x18x4xf32, #tpu.memory_space<vmem>>, vector<1x16x16x4xf32>
    %59 = vector.shape_cast %58 : vector<1x16x16x4xf32> to vector<16x16x4xf32>
    %60 = vector.shape_cast %59 : vector<16x16x4xf32> to vector<256x4xf32>
    %c6 = arith.constant 6 : index
    %c0_43 = arith.constant 0 : index
    %c0_44 = arith.constant 0 : index
    %61 = vector.load %arg3[%c6, %c0_43, %c0_44] : memref<9x4x8xf32, #tpu.memory_space<vmem>>, vector<1x4x8xf32>
    %62 = vector.shape_cast %61 : vector<1x4x8xf32> to vector<4x8xf32>
    %cst_45 = arith.constant dense<0.000000e+00> : vector<256x8xf32>
    %63 = tpu.matmul %60, %62, %cst_45 {dimension_numbers = #tpu.dot_dimension_numbers<[1], [0], [0], [1], [0, 0, 1, 1], [], []>} : vector<256x4xf32>, vector<4x8xf32>, vector<256x8xf32> -> vector<256x8xf32>
    %64 = arith.addf %55, %63 : vector<256x8xf32>
    %c2_i32_46 = arith.constant 2 : i32
    %65 = arith.addi %0, %c2_i32_46 : i32
    %c0_47 = arith.constant 0 : index
    %66 = arith.index_cast %65 : i32 to index
    %c1_48 = arith.constant 1 : index
    %c0_49 = arith.constant 0 : index
    %67 = vector.load %arg2[%c0_47, %66, %c1_48, %c0_49] : memref<1x18x18x4xf32, #tpu.memory_space<vmem>>, vector<1x16x16x4xf32>
    %68 = vector.shape_cast %67 : vector<1x16x16x4xf32> to vector<16x16x4xf32>
    %69 = vector.shape_cast %68 : vector<16x16x4xf32> to vector<256x4xf32>
    %c7 = arith.constant 7 : index
    %c0_50 = arith.constant 0 : index
    %c0_51 = arith.constant 0 : index
    %70 = vector.load %arg3[%c7, %c0_50, %c0_51] : memref<9x4x8xf32, #tpu.memory_space<vmem>>, vector<1x4x8xf32>
    %71 = vector.shape_cast %70 : vector<1x4x8xf32> to vector<4x8xf32>
    %cst_52 = arith.constant dense<0.000000e+00> : vector<256x8xf32>
    %72 = tpu.matmul %69, %71, %cst_52 {dimension_numbers = #tpu.dot_dimension_numbers<[1], [0], [0], [1], [0, 0, 1, 1], [], []>} : vector<256x4xf32>, vector<4x8xf32>, vector<256x8xf32> -> vector<256x8xf32>
    %73 = arith.addf %64, %72 : vector<256x8xf32>
    %c2_i32_53 = arith.constant 2 : i32
    %74 = arith.addi %0, %c2_i32_53 : i32
    %c0_54 = arith.constant 0 : index
    %75 = arith.index_cast %74 : i32 to index
    %c2_55 = arith.constant 2 : index
    %c0_56 = arith.constant 0 : index
    %76 = vector.load %arg2[%c0_54, %75, %c2_55, %c0_56] : memref<1x18x18x4xf32, #tpu.memory_space<vmem>>, vector<1x16x16x4xf32>
    %77 = vector.shape_cast %76 : vector<1x16x16x4xf32> to vector<16x16x4xf32>
    %78 = vector.shape_cast %77 : vector<16x16x4xf32> to vector<256x4xf32>
    %c8 = arith.constant 8 : index
    %c0_57 = arith.constant 0 : index
    %c0_58 = arith.constant 0 : index
    %79 = vector.load %arg3[%c8, %c0_57, %c0_58] : memref<9x4x8xf32, #tpu.memory_space<vmem>>, vector<1x4x8xf32>
    %80 = vector.shape_cast %79 : vector<1x4x8xf32> to vector<4x8xf32>
    %cst_59 = arith.constant dense<0.000000e+00> : vector<256x8xf32>
    %81 = tpu.matmul %78, %80, %cst_59 {dimension_numbers = #tpu.dot_dimension_numbers<[1], [0], [0], [1], [0, 0, 1, 1], [], []>} : vector<256x4xf32>, vector<4x8xf32>, vector<256x8xf32> -> vector<256x8xf32>
    %82 = arith.addf %73, %81 : vector<256x8xf32>
    %c0_60 = arith.constant 0 : index
    %c0_61 = arith.constant 0 : index
    %83 = vector.load %arg4[%c0_60, %c0_61] : memref<1x8xf32, #tpu.memory_space<vmem>>, vector<1x8xf32>
    %84 = vector.broadcast %83 : vector<1x8xf32> to vector<256x8xf32>
    %85 = arith.addf %82, %84 : vector<256x8xf32>
    %cst_62 = arith.constant 0.000000e+00 : f32
    %86 = vector.broadcast %cst_62 : f32 to vector<256x8xf32>
    %87 = arith.maximumf %85, %86 : vector<256x8xf32>
    %c0_63 = arith.constant 0 : index
    %c0_64 = arith.constant 0 : index
    %c0_65 = arith.constant 0 : index
    %88 = vector.load %arg5[%c0_63, %c0_64, %c0_65] : memref<1x256x8xf32, #tpu.memory_space<vmem>>, vector<1x256x8xf32>
    %89 = vector.shape_cast %88 : vector<1x256x8xf32> to vector<256x8xf32>
    %90 = vector.shape_cast %87 : vector<256x8xf32> to vector<1x256x8xf32>
    tpu.vector_store %arg5[%c0_63, %c0_64, %c0_65], %90 {strides = array<i32>} : memref<1x256x8xf32, #tpu.memory_space<vmem>>, vector<1x256x8xf32>,
    return
  }
  func.func @transform_0(%arg0: i32, %arg1: i32) -> (i32, i32, i32, i32) {
    %c0_i32 = arith.constant 0 : i32
    %c0_i32_0 = arith.constant 0 : i32
    %c0_i32_1 = arith.constant 0 : i32
    %c0_i32_2 = arith.constant 0 : i32
    return %arg0, %c0_i32, %c0_i32_0, %c0_i32_1 : i32, i32, i32, i32
  }
  func.func @transform_1(%arg0: i32, %arg1: i32) -> (i32, i32, i32) {
    %c0_i32 = arith.constant 0 : i32
    %c0_i32_0 = arith.constant 0 : i32
    %c0_i32_1 = arith.constant 0 : i32
    %c0_i32_2 = arith.constant 0 : i32
    return %c0_i32, %c0_i32_0, %c0_i32_1 : i32, i32, i32
  }
  func.func @transform_2(%arg0: i32, %arg1: i32) -> (i32, i32) {
    %c0_i32 = arith.constant 0 : i32
    %c0_i32_0 = arith.constant 0 : i32
    %c0_i32_1 = arith.constant 0 : i32
    return %c0_i32, %c0_i32_0 : i32, i32
  }
  func.func @transform_3(%arg0: i32, %arg1: i32) -> (i32, i32, i32) {
    %c0_i32 = arith.constant 0 : i32
    %c0_i32_0 = arith.constant 0 : i32
    return %arg0, %arg1, %c0_i32 : i32, i32, i32
  }
}

</mosaic_0001>

<llo_original>
// kernel: tpu_custom_call.1
$region0: #{tpu_custom_call.1}
  #allocation0 [shape = 'u32[]', space=smem, size = 0x4, offset = 0x4, fixed_abs, tag = 'smem constant byte address 0x4 - core index']
  #allocation1 [shape = 'u32[144,128]{1,0:T(1,128)}', space=vmem, size = 0x12000, scoped, tag = 'internal scratch']
  %s0 = inlined_call_operand.vmem [shape: f32[2,18,18,4], index: 0, kind: input, shape index: {}]
  %s1 = inlined_call_operand.vmem [shape: f32[9,4,8], index: 1, kind: input, shape index: {}]
  %s2 = inlined_call_operand.vmem [shape: f32[1,8], index: 2, kind: input, shape index: {}]
  %s3 = inlined_call_operand.vmem [shape: f32[2,256,8], index: 3, kind: output, shape index: {}]
  %s4 = sld [smem:[#allocation0]]
  $region45: #{tpu_custom_call.1} parent=0
    _
  %s6 = ssub.s32 1, %s4
  %s7 = scalar_select 0, %s6, %s4
  loop: start=0, step=1, limit=4
  $region2: #{tpu_custom_call.1} parent=0 // loop_pre_header
    _
  $region3: #{tpu_custom_call.1} parent=0 // loop_header
    %s9 = sphi 0, %s13
    %p10 = scmp.ge.s32.totalorder %s9, 4
    %s16 = sphi 0, %s28
    %s17 = sphi 0, %s24
    %s18 = sphi 0, %s16
    %s19 = sphi 0, %s17
    %s20 = sphi 0, %s18
    %s21 = sphi 0, %s19
    %s31 = sphi 0, %s33
    %s34 = sphi 0, %s31
    %s35 = sphi 0, %s34
    %s51 = sphi 0, %s35
    %s55 = sphi 0, %s55
    %s57 = sphi 0, %s55
    %s58 = sphi 0, %s57
    %s72 = sphi 0, %s58
    %s76 = sphi 0, %s76
    %s78 = sphi 0, %s76
    %s79 = sphi 0, %s78
    %s93 = sphi 0, %s79
    %s101 = sphi 0, %s103
    %s104 = sphi 0, %s101
    %s105 = sphi 0, %s104
    %s121 = sphi 0, %s105
  $region4: #{tpu_custom_call.1} parent=0 // loop_header_branch
    %12 = sbr.rel (%p10) target = $region8
  $region5: #{tpu_custom_call.1} parent=0 // loop_body
    %s14 = ssub.s32 %s9, 1
    %s15 = ssub.s32 %s9, 2
    %s22 = sadd.s32 1, %s17
    %p23 = scmp.ge.s32.totalorder %s22, 1
    %s24 = scalar_select %p23, 0, %s22
    %s25 = sadd.s32 1, %s16
    %s26 = scalar_select %p23, %s25, %s16
    %p27 = scmp.ge.s32.totalorder %s26, 2
    %s28 = scalar_select %p27, 0, %s26
    %s29 = ssub.s32 %s16, %s28
    %p30 = scmp.eq.s32.totalorder %s29, 0
    %s32 = sadd.s32 %s31, 1
    %s33 = scalar_select %p30, %s31, %s32
    %p36 = pneg %p30
    %p37 = scmp.eq.s32.totalorder %s9, 1
    %p38 = por %p36, %p37
    %p39 = scmp.ne.s32.totalorder %s31, %s34
    %p40 = scmp.eq.s32.totalorder %s9, 0
    %p41 = por %p39, %p40
    %p42 = scmp.ne.s32.totalorder %s31, %s34
    %p43 = scmp.eq.s32.totalorder %s14, 1
    %p44 = por %p42, %p43
    %p45 = scmp.ne.s32.totalorder %s34, %s35
    %p46 = scmp.eq.s32.totalorder %s14, 0
    %p47 = por %p45, %p46
    %p48 = scmp.ne.s32.totalorder %s34, %s35
    %p49 = scmp.eq.s32.totalorder %s15, 1
    %p50 = por %p48, %p49
    %p52 = scmp.ne.s32.totalorder %s35, %s51
    %p53 = scmp.eq.s32.totalorder %s15, 0
    %p54 = por %p52, %p53
    %s56 = sadd.s32 %s55, 1
    %p59 = scmp.eq.s32.totalorder %s9, 1
    %p60 = scmp.ne.s32.totalorder %s55, %s57
    %p61 = scmp.eq.s32.totalorder %s9, 0
    %p62 = por %p60, %p61
    %p63 = scmp.ne.s32.totalorder %s55, %s57
    %p64 = scmp.eq.s32.totalorder %s14, 1
    %p65 = por %p63, %p64
    %p66 = scmp.ne.s32.totalorder %s57, %s58
    %p67 = scmp.eq.s32.totalorder %s14, 0
    %p68 = por %p66, %p67
    %p69 = scmp.ne.s32.totalorder %s57, %s58
    %p70 = scmp.eq.s32.totalorder %s15, 1
    %p71 = por %p69, %p70
    %p73 = scmp.ne.s32.totalorder %s58, %s72
    %p74 = scmp.eq.s32.totalorder %s15, 0
    %p75 = por %p73, %p74
    %s77 = sadd.s32 %s76, 1
    %p80 = scmp.eq.s32.totalorder %s9, 1
    %p81 = scmp.ne.s32.totalorder %s76, %s78
    %p82 = scmp.eq.s32.totalorder %s9, 0
    %p83 = por %p81, %p82
    %p84 = scmp.ne.s32.totalorder %s76, %s78
    %p85 = scmp.eq.s32.totalorder %s14, 1
    %p86 = por %p84, %p85
    %p87 = scmp.ne.s32.totalorder %s78, %s79
    %p88 = scmp.eq.s32.totalorder %s14, 0
    %p89 = por %p87, %p88
    %p90 = scmp.ne.s32.totalorder %s78, %s79
    %p91 = scmp.eq.s32.totalorder %s15, 1
    %p92 = por %p90, %p91
    %p94 = scmp.ne.s32.totalorder %s79, %s93
    %p95 = scmp.eq.s32.totalorder %s15, 0
    %p96 = por %p94, %p95
    %s97 = ssub.s32 %s16, %s28
    %s98 = ssub.s32 %s17, %s24
    %s99 = sor.u32 %s97, %s98
    %p100 = scmp.eq.s32.totalorder %s99, 0
    %s102 = sadd.s32 %s101, 1
    %s103 = scalar_select %p100, %s101, %s102
    %p106 = pneg %p100
    %p107 = scmp.eq.s32.totalorder %s9, 1
    %p108 = por %p106, %p107
    %p109 = scmp.ne.s32.totalorder %s101, %s104
    %p110 = scmp.eq.s32.totalorder %s9, 0
    %p111 = por %p109, %p110
    %p112 = scmp.ne.s32.totalorder %s101, %s104
    %p113 = scmp.eq.s32.totalorder %s14, 1
    %p114 = por %p112, %p113
    %p115 = scmp.ne.s32.totalorder %s104, %s105
    %p116 = scmp.eq.s32.totalorder %s14, 0
    %p117 = por %p115, %p116
    %p118 = scmp.ne.s32.totalorder %s104, %s105
    %p119 = scmp.eq.s32.totalorder %s15, 1
    %p120 = por %p118, %p119
    %p122 = scmp.ne.s32.totalorder %s105, %s121
    %p123 = scmp.eq.s32.totalorder %s15, 0
    %p124 = por %p122, %p123
    %p125 = scmp.le.s32.totalorder 1, %s9
    %p126 = scmp.lt.s32.totalorder %s9, 3
    %p127 = pnand %p125, %p126
    %p128 = pneg %p127
    // Predicated region
    $region9: #{tpu_custom_call.1} parent=5 // pred_check
      _
    $region10: #{tpu_custom_call.1} parent=5 // pred_check_branch
      %130 = sbr.rel (%p127) target = $region12
    $region11: #{tpu_custom_call.1} parent=5 // pred_region
      %s131 = ssub.s32 %s9, 1
      // Predicated region
      $region13: #{tpu_custom_call.1} parent=11 // pred_check
        %p132 = pneg %p68
      $region14: #{tpu_custom_call.1} parent=11 // pred_check_branch
        %134 = sbr.rel (%p132) target = $region16
      $region15: #{tpu_custom_call.1} parent=11 // pred_region
        _
      $region16: #{tpu_custom_call.1} parent=11 // pred_fallthru
        _
      // Predicated region
      $region17: #{tpu_custom_call.1} parent=11 // pred_check
        %p135 = pneg %p89
      $region18: #{tpu_custom_call.1} parent=11 // pred_check_branch
        %137 = sbr.rel (%p135) target = $region20
      $region19: #{tpu_custom_call.1} parent=11 // pred_region
        _
      $region20: #{tpu_custom_call.1} parent=11 // pred_fallthru
        _
    $region12: #{tpu_custom_call.1} parent=5 // pred_fallthru
      _
    %p138 = scmp.lt.s32.totalorder %s9, 2
    // Predicated region
    $region21: #{tpu_custom_call.1} parent=5 // pred_check
      %p139 = pneg %p138
    $region22: #{tpu_custom_call.1} parent=5 // pred_check_branch
      %141 = sbr.rel (%p139) target = $region24
    $region23: #{tpu_custom_call.1} parent=5 // pred_region
      // Predicated region
      $region25: #{tpu_custom_call.1} parent=23 // pred_check
        %p142 = pneg %p41
      $region26: #{tpu_custom_call.1} parent=23 // pred_check_branch
        %144 = sbr.rel (%p142) target = $region28
      $region27: #{tpu_custom_call.1} parent=23 // pred_region
        %p145 = scmp.lt.s32.totalorder %s16, 1
        %s146 = scalar_select %p145, %s16, 1
        %s147 = smul.addr %s146, 54
        %s148 = smul.addr %s147, 8
        %s149 = scalar_lea.vmem %s0, %s148
      $region28: #{tpu_custom_call.1} parent=23 // pred_fallthru
        _
    $region24: #{tpu_custom_call.1} parent=5 // pred_fallthru
      _
    %p150 = scmp.le.s32.totalorder 1, %s9
    %p151 = scmp.lt.s32.totalorder %s9, 3
    %p152 = pnand %p150, %p151
    %p153 = pneg %p152
    // Predicated region
    $region29: #{tpu_custom_call.1} parent=5 // pred_check
      _
    $region30: #{tpu_custom_call.1} parent=5 // pred_check_branch
      %155 = sbr.rel (%p152) target = $region32
    $region31: #{tpu_custom_call.1} parent=5 // pred_region
      %s156 = ssub.s32 %s9, 1
      %p157 = scmp.lt.s32.totalorder %s18, 1
      %s158 = scalar_select %p157, %s18, 1
      %s159 = smul.addr %s158, 54
      %s160 = smul.addr %s159, 8
      %s161 = scalar_lea.vmem %s0, %s160
      %p162 = pneg %p47
      %p163 = pneg %p44
      %p164 = pneg %p68
      %p165 = pneg %p65
      %p166 = pneg %p89
      %p167 = pneg %p86
      %p168 = pneg %p117
      %p169 = pneg %p114
      %s170 = smul.u32 32, %s19
      %p171 = scmp.lt.s32.totalorder %s18, 1
      %s172 = scalar_select %p171, %s18, 1
      %p173 = scmp.lt.s32.totalorder %s170, 31
      %s174 = scalar_select %p173, %s170, 31
      %s175 = smul.addr %s172, 32
      %s176 = sadd.s32 %s174, %s175
      %s177 = smul.addr %s176, 8
      %s178 = scalar_lea.vmem %s3, %s177
      %p179 = scmp.lt.s32.totalorder %s18, 1
      %s180 = scalar_select %p179, %s18, 1
      %s181 = smul.addr %s180, 54
      %s182 = smul.addr %s181, 8
      %s183 = scalar_lea.vmem %s0, %s182
      %s184 = smul.u32 32, %s19
      %p185 = scmp.lt.s32.totalorder %s18, 1
      %s186 = scalar_select %p185, %s18, 1
      %p187 = scmp.lt.s32.totalorder %s184, 31
      %s188 = scalar_select %p187, %s184, 31
      %s189 = smul.addr %s186, 32
      %s190 = sadd.s32 %s188, %s189
      %s191 = smul.addr %s190, 8
      %s192 = scalar_lea.vmem %s3, %s191
      %s193 = smul.u32 32, %s19
      %s194 = smul.u32 %s19, 16
      %s195 = smul.u32 %s194, 24
      %s196 = scalar_lea.vmem %s183, %s195
      %v197 = vld [vmem:[%s196] sm:$0xff]
      %v198 = vld [vmem:[%s196 + $0x8] sm:$0xff]
      %v199 = vld [vmem:[%s196 + $0x18] sm:$0xff]
      %v200 = vld [vmem:[%s196 + $0x20] sm:$0xff]
      %v201 = vld [vmem:[%s196 + $0x30] sm:$0xff]
      %v202 = vld [vmem:[%s196 + $0x38] sm:$0xff]
      %v203 = vld [vmem:[%s196 + $0x48] sm:$0xff]
      %v204 = vld [vmem:[%s196 + $0x50] sm:$0xff]
      %v205 = vld [vmem:[%s196 + $0x60] sm:$0xff]
      %v206 = vld [vmem:[%s196 + $0x68] sm:$0xff]
      %v207 = vld [vmem:[%s196 + $0x78] sm:$0xff]
      %v208 = vld [vmem:[%s196 + $0x80] sm:$0xff]
      %v209 = vld [vmem:[%s196 + $0x90] sm:$0xff]
      %v210 = vld [vmem:[%s196 + $0x98] sm:$0xff]
      %v211 = vld [vmem:[%s196 + $0xa8] sm:$0xff]
      %v212 = vld [vmem:[%s196 + $0xb0] sm:$0xff]
      %v213 = vld [vmem:[%s196 + $0xc0] sm:$0xff]
      %v214 = vld [vmem:[%s196 + $0xc8] sm:$0xff]
      %v215 = vld [vmem:[%s196 + $0xd8] sm:$0xff]
      %v216 = vld [vmem:[%s196 + $0xe0] sm:$0xff]
      %v217 = vld [vmem:[%s196 + $0xf0] sm:$0xff]
      %v218 = vld [vmem:[%s196 + $0xf8] sm:$0xff]
      %v219 = vld [vmem:[%s196 + $0x108] sm:$0xff]
      %v220 = vld [vmem:[%s196 + $0x110] sm:$0xff]
      %v221 = vld [vmem:[%s196 + $0x120] sm:$0xff]
      %v222 = vld [vmem:[%s196 + $0x128] sm:$0xff]
      %v223 = vld [vmem:[%s196 + $0x138] sm:$0xff]
      %v224 = vld [vmem:[%s196 + $0x140] sm:$0xff]
      %v225 = vld [vmem:[%s196 + $0x150] sm:$0xff]
      %v226 = vld [vmem:[%s196 + $0x158] sm:$0xff]
      %v227 = vld [vmem:[%s196 + $0x168] sm:$0xff]
      %v228 = vld [vmem:[%s196 + $0x170] sm:$0xff]
      %v229 = vld [vmem:[%s1] sm:$0xf]
      %v230 = vld [vmem:[%s196 + $0x1] sm:$0xff]
      %v231 = vld [vmem:[%s196 + $0x9] sm:$0xff]
      %v232 = vld [vmem:[%s196 + $0x19] sm:$0xff]
      %v233 = vld [vmem:[%s196 + $0x21] sm:$0xff]
      %v234 = vld [vmem:[%s196 + $0x31] sm:$0xff]
      %v235 = vld [vmem:[%s196 + $0x39] sm:$0xff]
      %v236 = vld [vmem:[%s196 + $0x49] sm:$0xff]
      %v237 = vld [vmem:[%s196 + $0x51] sm:$0xff]
      %v238 = vld [vmem:[%s196 + $0x61] sm:$0xff]
      %v239 = vld [vmem:[%s196 + $0x69] sm:$0xff]
      %v240 = vld [vmem:[%s196 + $0x79] sm:$0xff]
      %v241 = vld [vmem:[%s196 + $0x81] sm:$0xff]
      %v242 = vld [vmem:[%s196 + $0x91] sm:$0xff]
      %v243 = vld [vmem:[%s196 + $0x99] sm:$0xff]
      %v244 = vld [vmem:[%s196 + $0xa9] sm:$0xff]
      %v245 = vld [vmem:[%s196 + $0xb1] sm:$0xff]
      %v246 = vld [vmem:[%s196 + $0xc1] sm:$0xff]
      %v247 = vld [vmem:[%s196 + $0xc9] sm:$0xff]
      %v248 = vld [vmem:[%s196 + $0xd9] sm:$0xff]
      %v249 = vld [vmem:[%s196 + $0xe1] sm:$0xff]
      %v250 = vld [vmem:[%s196 + $0xf1] sm:$0xff]
      %v251 = vld [vmem:[%s196 + $0xf9] sm:$0xff]
      %v252 = vld [vmem:[%s196 + $0x109] sm:$0xff]
      %v253 = vld [vmem:[%s196 + $0x111] sm:$0xff]
      %v254 = vld [vmem:[%s196 + $0x121] sm:$0xff]
      %v255 = vld [vmem:[%s196 + $0x129] sm:$0xff]
      %v256 = vld [vmem:[%s196 + $0x139] sm:$0xff]
      %v257 = vld [vmem:[%s196 + $0x141] sm:$0xff]
      %v258 = vld [vmem:[%s196 + $0x151] sm:$0xff]
      %v259 = vld [vmem:[%s196 + $0x159] sm:$0xff]
      %v260 = vld [vmem:[%s196 + $0x169] sm:$0xff]
      %v261 = vld [vmem:[%s196 + $0x171] sm:$0xff]
      %s262 = scalar_lea.vmem %s1, 4
      %v263 = vld [vmem:[%s262] sm:$0xf]
      %vm264 = vcmask 31744
      %v266 = vsel %vm264, %v230, 0
      %v269 = vsel %vm264, %v231, 0
      %v272 = vsel %vm264, %v232, 0
      %v275 = vsel %vm264, %v233, 0
      %v278 = vsel %vm264, %v234, 0
      %v281 = vsel %vm264, %v235, 0
      %v284 = vsel %vm264, %v236, 0
      %v287 = vsel %vm264, %v237, 0
      %v290 = vsel %vm264, %v238, 0
      %v293 = vsel %vm264, %v239, 0
      %v296 = vsel %vm264, %v240, 0
      %v299 = vsel %vm264, %v241, 0
      %v302 = vsel %vm264, %v242, 0
      %v305 = vsel %vm264, %v243, 0
      %v308 = vsel %vm264, %v244, 0
      %v311 = vsel %vm264, %v245, 0
      %v314 = vsel %vm264, %v246, 0
      %v317 = vsel %vm264, %v247, 0
      %v320 = vsel %vm264, %v248, 0
      %v323 = vsel %vm264, %v249, 0
      %v326 = vsel %vm264, %v250, 0
      %v329 = vsel %vm264, %v251, 0
      %v332 = vsel %vm264, %v252, 0
      %v335 = vsel %vm264, %v253, 0
      %v338 = vsel %vm264, %v254, 0
      %v341 = vsel %vm264, %v255, 0
      %v344 = vsel %vm264, %v256, 0
      %v347 = vsel %vm264, %v257, 0
      %v350 = vsel %vm264, %v258, 0
      %v353 = vsel %vm264, %v259, 0
      %v356 = vsel %vm264, %v260, 0
      %v359 = vsel %vm264, %v261, 0
      %vm361 = vcmask 1043456
      %v363 = vsel %vm361, %v263, 0
      %365 = vmatprep.subr.mxu0 0.0
      %366 = vmatpush1.msra.mxu0 %v363
      %367 = vmatprep.subr.mxu0 0.0
      %368 = vmatpush1.msra.mxu0 0.0
      %369 = vmatprep.subr.mxu0 0.0
      %370 = vmatpush1.msra.mxu0 0.0
      %371 = vmatprep.subr.mxu0 0.0
      %372 = vmatpush1.msra.mxu0 0.0
      %373 = vmatprep.subr.mxu0 0.0
      %374 = vmatpush1.msra.mxu0 0.0
      %375 = vmatprep.subr.mxu0 0.0
      %376 = vmatpush1.msra.mxu0 0.0
      %377 = vmatprep.subr.mxu0 0.0
      %378 = vmatpush1.msra.mxu0 0.0
      %379 = vmatprep.subr.mxu0 0.0
      %380 = vmatpush1.msra.mxu0 0.0
      %381 = vmatprep.subr.mxu0 0.0
      %382 = vmatpush1.msra.mxu0 0.0
      %383 = vmatprep.subr.mxu0 0.0
      %384 = vmatpush1.msra.mxu0 0.0
      %385 = vmatprep.subr.mxu0 0.0
      %386 = vmatpush1.msra.mxu0 0.0
      %387 = vmatprep.subr.mxu0 0.0
      %388 = vmatpush1.msra.mxu0 0.0
      %389 = vmatprep.subr.mxu0 0.0
      %390 = vmatpush1.msra.mxu0 0.0
      %391 = vmatprep.subr.mxu0 0.0
      %392 = vmatpush1.msra.mxu0 0.0
      %393 = vmatprep.subr.mxu0 0.0
      %394 = vmatpush1.msra.mxu0 0.0
      %395 = vmatprep.subr.mxu0 0.0
      %396 = vmatpush1.msra.mxu0 0.0
      %397 = vmatprep.subr.mxu0 0.0
      %398 = vmatpush1.msra.mxu0 0.0
      %399 = vmatprep.subr.mxu0 0.0
      %400 = vmatpush1.msra.mxu0 0.0
      %401 = vmatprep.subr.mxu0 0.0
      %402 = vmatpush1.msra.mxu0 0.0
      %403 = vmatprep.subr.mxu0 0.0
      %404 = vmatpush1.msra.mxu0 0.0
      %405 = vmatprep.subr.mxu0 0.0
      %406 = vmatpush1.msra.mxu0 0.0
      %407 = vmatprep.subr.mxu0 0.0
      %408 = vmatpush1.msra.mxu0 0.0
      %409 = vmatprep.subr.mxu0 0.0
      %410 = vmatpush1.msra.mxu0 0.0
      %411 = vmatprep.subr.mxu0 0.0
      %412 = vmatpush1.msra.mxu0 0.0
      %413 = vmatprep.subr.mxu0 0.0
      %414 = vmatpush1.msra.mxu0 0.0
      %415 = vmatprep.subr.mxu0 0.0
      %416 = vmatpush1.msra.mxu0 0.0
      %417 = vmatprep.subr.mxu0 0.0
      %418 = vmatpush1.msra.mxu0 0.0
      %419 = vmatprep.subr.mxu0 0.0
      %420 = vmatpush1.msra.mxu0 0.0
      %421 = vmatprep.subr.mxu0 0.0
      %422 = vmatpush1.msra.mxu0 0.0
      %423 = vmatprep.subr.mxu0 0.0
      %424 = vmatpush1.msra.mxu0 0.0
      %425 = vmatprep.subr.mxu0 0.0
      %426 = vmatpush1.msra.mxu0 0.0
      %427 = vmatprep.subr.mxu0 0.0
      %428 = vmatpush1.msra.mxu0 0.0
      %429 = vmatprep.mubr.f32.mxu0 0.0
      %430 = vmatmul.mubr.f32.gmra.mrb[0].mxu0 %v266
      %v431 = vpop.f32.mrb[0].mxu0
      %v432 = vadd.f32 0.0, %v431
      %v433 = vpop.f32.mrb[0].mxu0
      %434 = vmatprep.mubr.f32.mxu0 0.0
      %435 = vmatmul.mubr.f32.gmra.mrb[0].mxu0 %v269
      %v436 = vpop.f32.mrb[0].mxu0
      %v437 = vadd.f32 0.0, %v436
      %v438 = vpop.f32.mrb[0].mxu0
      %439 = vmatprep.mubr.f32.mxu0 0.0
      %440 = vmatmul.mubr.f32.gmra.mrb[0].mxu0 %v272
      %v441 = vpop.f32.mrb[0].mxu0
      %v442 = vadd.f32 0.0, %v441
      %v443 = vpop.f32.mrb[0].mxu0
      %444 = vmatprep.mubr.f32.mxu0 0.0
      %445 = vmatmul.mubr.f32.gmra.mrb[0].mxu0 %v275
      %v446 = vpop.f32.mrb[0].mxu0
      %v447 = vadd.f32 0.0, %v446
      %v448 = vpop.f32.mrb[0].mxu0
      %449 = vmatprep.mubr.f32.mxu0 0.0
      %450 = vmatmul.mubr.f32.gmra.mrb[0].mxu0 %v278
      %v451 = vpop.f32.mrb[0].mxu0
      %v452 = vadd.f32 0.0, %v451
      %v453 = vpop.f32.mrb[0].mxu0
      %454 = vmatprep.mubr.f32.mxu0 0.0
      %455 = vmatmul.mubr.f32.gmra.mrb[0].mxu0 %v281
      %v456 = vpop.f32.mrb[0].mxu0
      %v457 = vadd.f32 0.0, %v456
      %v458 = vpop.f32.mrb[0].mxu0
      %459 = vmatprep.mubr.f32.mxu0 0.0
      %460 = vmatmul.mubr.f32.gmra.mrb[0].mxu0 %v284
      %v461 = vpop.f32.mrb[0].mxu0
      %v462 = vadd.f32 0.0, %v461
      %v463 = vpop.f32.mrb[0].mxu0
      %464 = vmatprep.mubr.f32.mxu0 0.0
      %465 = vmatmul.mubr.f32.gmra.mrb[0].mxu0 %v287
      %v466 = vpop.f32.mrb[0].mxu0
      %v467 = vadd.f32 0.0, %v466
      %v468 = vpop.f32.mrb[0].mxu0
      %469 = vmatprep.mubr.f32.mxu0 0.0
      %470 = vmatmul.mubr.f32.gmra.mrb[0].mxu0 %v290
      %v471 = vpop.f32.mrb[0].mxu0
      %v472 = vadd.f32 0.0, %v471
      %v473 = vpop.f32.mrb[0].mxu0
      %474 = vmatprep.mubr.f32.mxu0 0.0
      %475 = vmatmul.mubr.f32.gmra.mrb[0].mxu0 %v293
      %v476 = vpop.f32.mrb[0].mxu0
      %v477 = vadd.f32 0.0, %v476
      %v478 = vpop.f32.mrb[0].mxu0
      %479 = vmatprep.mubr.f32.mxu0 0.0
      %480 = vmatmul.mubr.f32.gmra.mrb[0].mxu0 %v296
      %v481 = vpop.f32.mrb[0].mxu0
      %v482 = vadd.f32 0.0, %v481
      %v483 = vpop.f32.mrb[0].mxu0
      %484 = vmatprep.mubr.f32.mxu0 0.0
      %485 = vmatmul.mubr.f32.gmra.mrb[0].mxu0 %v299
      %v486 = vpop.f32.mrb[0].mxu0
      %v487 = vadd.f32 0.0, %v486
      %v488 = vpop.f32.mrb[0].mxu0
      %489 = vmatprep.mubr.f32.mxu0 0.0
      %490 = vmatmul.mubr.f32.gmra.mrb[0].mxu0 %v302
      %v491 = vpop.f32.mrb[0].mxu0
      %v492 = vadd.f32 0.0, %v491
      %v493 = vpop.f32.mrb[0].mxu0
      %494 = vmatprep.mubr.f32.mxu0 0.0
      %495 = vmatmul.mubr.f32.gmra.mrb[0].mxu0 %v305
      %v496 = vpop.f32.mrb[0].mxu0
      %v497 = vadd.f32 0.0, %v496
      %v498 = vpop.f32.mrb[0].mxu0
      %499 = vmatprep.mubr.f32.mxu0 0.0
      %500 = vmatmul.mubr.f32.gmra.mrb[0].mxu0 %v308
      %v501 = vpop.f32.mrb[0].mxu0
      %v502 = vadd.f32 0.0, %v501
      %v503 = vpop.f32.mrb[0].mxu0
      %504 = vmatprep.mubr.f32.mxu0 0.0
      %505 = vmatmul.mubr.f32.gmra.mrb[0].mxu0 %v311
      %v506 = vpop.f32.mrb[0].mxu0
      %v507 = vadd.f32 0.0, %v506
      %v508 = vpop.f32.mrb[0].mxu0
      %509 = vmatprep.mubr.f32.mxu0 0.0
      %510 = vmatmul.mubr.f32.gmra.mrb[0].mxu0 %v314
      %v511 = vpop.f32.mrb[0].mxu0
      %v512 = vadd.f32 0.0, %v511
      %v513 = vpop.f32.mrb[0].mxu0
      %514 = vmatprep.mubr.f32.mxu0 0.0
      %515 = vmatmul.mubr.f32.gmra.mrb[0].mxu0 %v317
      %v516 = vpop.f32.mrb[0].mxu0
      %v517 = vadd.f32 0.0, %v516
      %v518 = vpop.f32.mrb[0].mxu0
      %519 = vmatprep.mubr.f32.mxu0 0.0
      %520 = vmatmul.mubr.f32.gmra.mrb[0].mxu0 %v320
      %v521 = vpop.f32.mrb[0].mxu0
      %v522 = vadd.f32 0.0, %v521
      %v523 = vpop.f32.mrb[0].mxu0
      %524 = vmatprep.mubr.f32.mxu0 0.0
      %525 = vmatmul.mubr.f32.gmra.mrb[0].mxu0 %v323
      %v526 = vpop.f32.mrb[0].mxu0
      %v527 = vadd.f32 0.0, %v526
      %v528 = vpop.f32.mrb[0].mxu0
      %529 = vmatprep.mubr.f32.mxu0 0.0
      %530 = vmatmul.mubr.f32.gmra.mrb[0].mxu0 %v326
      %v531 = vpop.f32.mrb[0].mxu0
      %v532 = vadd.f32 0.0, %v531
      %v533 = vpop.f32.mrb[0].mxu0
      %534 = vmatprep.mubr.f32.mxu0 0.0
      %535 = vmatmul.mubr.f32.gmra.mrb[0].mxu0 %v329
      %v536 = vpop.f32.mrb[0].mxu0
      %v537 = vadd.f32 0.0, %v536
      %v538 = vpop.f32.mrb[0].mxu0
      %539 = vmatprep.mubr.f32.mxu0 0.0
      %540 = vmatmul.mubr.f32.gmra.mrb[0].mxu0 %v332
      %v541 = vpop.f32.mrb[0].mxu0
      %v542 = vadd.f32 0.0, %v541
      %v543 = vpop.f32.mrb[0].mxu0
      %544 = vmatprep.mubr.f32.mxu0 0.0
      %545 = vmatmul.mubr.f32.gmra.mrb[0].mxu0 %v335
      %v546 = vpop.f32.mrb[0].mxu0
      %v547 = vadd.f32 0.0, %v546
      %v548 = vpop.f32.mrb[0].mxu0
      %549 = vmatprep.mubr.f32.mxu0 0.0
      %550 = vmatmul.mubr.f32.gmra.mrb[0].mxu0 %v338
      %v551 = vpop.f32.mrb[0].mxu0
      %v552 = vadd.f32 0.0, %v551
      %v553 = vpop.f32.mrb[0].mxu0
      %554 = vmatprep.mubr.f32.mxu0 0.0
      %555 = vmatmul.mubr.f32.gmra.mrb[0].mxu0 %v341
      %v556 = vpop.f32.mrb[0].mxu0
      %v557 = vadd.f32 0.0, %v556
      %v558 = vpop.f32.mrb[0].mxu0
      %559 = vmatprep.mubr.f32.mxu0 0.0
      %560 = vmatmul.mubr.f32.gmra.mrb[0].mxu0 %v344
      %v561 = vpop.f32.mrb[0].mxu0
      %v562 = vadd.f32 0.0, %v561
      %v563 = vpop.f32.mrb[0].mxu0
      %564 = vmatprep.mubr.f32.mxu0 0.0
      %565 = vmatmul.mubr.f32.gmra.mrb[0].mxu0 %v347
      %v566 = vpop.f32.mrb[0].mxu0
      %v567 = vadd.f32 0.0, %v566
      %v568 = vpop.f32.mrb[0].mxu0
      %569 = vmatprep.mubr.f32.mxu0 0.0
      %570 = vmatmul.mubr.f32.gmra.mrb[0].mxu0 %v350
      %v571 = vpop.f32.mrb[0].mxu0
      %v572 = vadd.f32 0.0, %v571
      %v573 = vpop.f32.mrb[0].mxu0
      %574 = vmatprep.mubr.f32.mxu0 0.0
      %575 = vmatmul.mubr.f32.gmra.mrb[0].mxu0 %v353
      %v576 = vpop.f32.mrb[0].mxu0
      %v577 = vadd.f32 0.0, %v576
      %v578 = vpop.f32.mrb[0].mxu0
      %579 = vmatprep.mubr.f32.mxu0 0.0
      %580 = vmatmul.mubr.f32.gmra.mrb[0].mxu0 %v356
      %v581 = vpop.f32.mrb[0].mxu0
      %v582 = vadd.f32 0.0, %v581
      %v583 = vpop.f32.mrb[0].mxu0
      %584 = vmatprep.mubr.f32.mxu0 0.0
      %585 = vmatmul.mubr.f32.gmra.mrb[0].mxu0 %v359
      %v586 = vpop.f32.mrb[0].mxu0
      %v587 = vadd.f32 0.0, %v586
      %v588 = vpop.f32.mrb[0].mxu0
      %589 = vdwg.mxu0
      %v591 = vsel %vm264, %v197, 0
      %v594 = vsel %vm264, %v198, 0
      %v597 = vsel %vm264, %v199, 0
      %v600 = vsel %vm264, %v200, 0
      %v603 = vsel %vm264, %v201, 0
      %v606 = vsel %vm264, %v202, 0
      %v609 = vsel %vm264, %v203, 0
      %v612 = vsel %vm264, %v204, 0
      %v615 = vsel %vm264, %v205, 0
      %v618 = vsel %vm264, %v206, 0
      %v621 = vsel %vm264, %v207, 0
      %v624 = vsel %vm264, %v208, 0
      %v627 = vsel %vm264, %v209, 0
      %v630 = vsel %vm264, %v210, 0
      %v633 = vsel %vm264, %v211, 0
      %v636 = vsel %vm264, %v212, 0
      %v639 = vsel %vm264, %v213, 0
      %v642 = vsel %vm264, %v214, 0
      %v645 = vsel %vm264, %v215, 0
      %v648 = vsel %vm264, %v216, 0
      %v651 = vsel %vm264, %v217, 0
      %v654 = vsel %vm264, %v218, 0
      %v657 = vsel %vm264, %v219, 0
      %v660 = vsel %vm264, %v220, 0
      %v663 = vsel %vm264, %v221, 0
      %v666 = vsel %vm264, %v222, 0
      %v669 = vsel %vm264, %v223, 0
      %v672 = vsel %vm264, %v224, 0
      %v675 = vsel %vm264, %v225, 0
      %v678 = vsel %vm264, %v226, 0
      %v681 = vsel %vm264, %v227, 0
      %v684 = vsel %vm264, %v228, 0
      %v687 = vsel %vm361, %v229, 0
      %689 = vmatprep.subr.mxu0 0.0
      %690 = vmatpush1.msra.mxu0 %v687
      %691 = vmatprep.subr.mxu0 0.0
      %692 = vmatpush1.msra.mxu0 0.0
      %693 = vmatprep.subr.mxu0 0.0
      %694 = vmatpush1.msra.mxu0 0.0
      %695 = vmatprep.subr.mxu0 0.0
      %696 = vmatpush1.msra.mxu0 0.0
      %697 = vmatprep.subr.mxu0 0.0
      %698 = vmatpush1.msra.mxu0 0.0
      %699 = vmatprep.subr.mxu0 0.0
      %700 = vmatpush1.msra.mxu0 0.0
      %701 = vmatprep.subr.mxu0 0.0
      %702 = vmatpush1.msra.mxu0 0.0
      %703 = vmatprep.subr.mxu0 0.0
      %704 = vmatpush1.msra.mxu0 0.0
      %705 = vmatprep.subr.mxu0 0.0
      %706 = vmatpush1.msra.mxu0 0.0
      %707 = vmatprep.subr.mxu0 0.0
      %708 = vmatpush1.msra.mxu0 0.0
      %709 = vmatprep.subr.mxu0 0.0
      %710 = vmatpush1.msra.mxu0 0.0
      %711 = vmatprep.subr.mxu0 0.0
      %712 = vmatpush1.msra.mxu0 0.0
      %713 = vmatprep.subr.mxu0 0.0
      %714 = vmatpush1.msra.mxu0 0.0
      %715 = vmatprep.subr.mxu0 0.0
      %716 = vmatpush1.msra.mxu0 0.0
      %717 = vmatprep.subr.mxu0 0.0
      %718 = vmatpush1.msra.mxu0 0.0
      %719 = vmatprep.subr.mxu0 0.0
      %720 = vmatpush1.msra.mxu0 0.0
      %721 = vmatprep.subr.mxu0 0.0
      %722 = vmatpush1.msra.mxu0 0.0
      %723 = vmatprep.subr.mxu0 0.0
      %724 = vmatpush1.msra.mxu0 0.0
      %725 = vmatprep.subr.mxu0 0.0
      %726 = vmatpush1.msra.mxu0 0.0
      %727 = vmatprep.subr.mxu0 0.0
      %728 = vmatpush1.msra.mxu0 0.0
      %729 = vmatprep.subr.mxu0 0.0
      %730 = vmatpush1.msra.mxu0 0.0
      %731 = vmatprep.subr.mxu0 0.0
      %732 = vmatpush1.msra.mxu0 0.0
      %733 = vmatprep.subr.mxu0 0.0
      %734 = vmatpush1.msra.mxu0 0.0
      %735 = vmatprep.subr.mxu0 0.0
      %736 = vmatpush1.msra.mxu0 0.0
      %737 = vmatprep.subr.mxu0 0.0
      %738 = vmatpush1.msra.mxu0 0.0
      %739 = vmatprep.subr.mxu0 0.0
      %740 = vmatpush1.msra.mxu0 0.0
      %741 = vmatprep.subr.mxu0 0.0
      %742 = vmatpush1.msra.mxu0 0.0
      %743 = vmatprep.subr.mxu0 0.0
      %744 = vmatpush1.msra.mxu0 0.0
      %745 = vmatprep.subr.mxu0 0.0
      %746 = vmatpush1.msra.mxu0 0.0
      %747 = vmatprep.subr.mxu0 0.0
      %748 = vmatpush1.msra.mxu0 0.0
      %749 = vmatprep.subr.mxu0 0.0
      %750 = vmatpush1.msra.mxu0 0.0
      %751 = vmatprep.subr.mxu0 0.0
      %752 = vmatpush1.msra.mxu0 0.0
      %753 = vmatprep.mubr.f32.mxu0 0.0
      %754 = vmatmul.mubr.f32.gmra.mrb[0].mxu0 %v591
      %v755 = vpop.f32.mrb[0].mxu0
      %v756 = vadd.f32 %v432, %v755
      %v757 = vpop.f32.mrb[0].mxu0
      %758 = vmatprep.mubr.f32.mxu0 0.0
      %759 = vmatmul.mubr.f32.gmra.mrb[0].mxu0 %v594
      %v760 = vpop.f32.mrb[0].mxu0
      %v761 = vadd.f32 %v437, %v760
      %v762 = vpop.f32.mrb[0].mxu0
      %763 = vmatprep.mubr.f32.mxu0 0.0
      %764 = vmatmul.mubr.f32.gmra.mrb[0].mxu0 %v597
      %v765 = vpop.f32.mrb[0].mxu0
      %v766 = vadd.f32 %v442, %v765
      %v767 = vpop.f32.mrb[0].mxu0
      %768 = vmatprep.mubr.f32.mxu0 0.0
      %769 = vmatmul.mubr.f32.gmra.mrb[0].mxu0 %v600
      %v770 = vpop.f32.mrb[0].mxu0
      %v771 = vadd.f32 %v447, %v770
      %v772 = vpop.f32.mrb[0].mxu0
      %773 = vmatprep.mubr.f32.mxu0 0.0
      %774 = vmatmul.mubr.f32.gmra.mrb[0].mxu0 %v603
      %v775 = vpop.f32.mrb[0].mxu0
      %v776 = vadd.f32 %v452, %v775
      %v777 = vpop.f32.mrb[0].mxu0
      %778 = vmatprep.mubr.f32.mxu0 0.0
      %779 = vmatmul.mubr.f32.gmra.mrb[0].mxu0 %v606
      %v780 = vpop.f32.mrb[0].mxu0
      %v781 = vadd.f32 %v457, %v780
      %v782 = vpop.f32.mrb[0].mxu0
      %783 = vmatprep.mubr.f32.mxu0 0.0
      %784 = vmatmul.mubr.f32.gmra.mrb[0].mxu0 %v609
      %v785 = vpop.f32.mrb[0].mxu0
      %v786 = vadd.f32 %v462, %v785
      %v787 = vpop.f32.mrb[0].mxu0
      %788 = vmatprep.mubr.f32.mxu0 0.0
      %789 = vmatmul.mubr.f32.gmra.mrb[0].mxu0 %v612
      %v790 = vpop.f32.mrb[0].mxu0
      %v791 = vadd.f32 %v467, %v790
      %v792 = vpop.f32.mrb[0].mxu0
      %793 = vmatprep.mubr.f32.mxu0 0.0
      %794 = vmatmul.mubr.f32.gmra.mrb[0].mxu0 %v615
      %v795 = vpop.f32.mrb[0].mxu0
      %v796 = vadd.f32 %v472, %v795
      %v797 = vpop.f32.mrb[0].mxu0
      %798 = vmatprep.mubr.f32.mxu0 0.0
      %799 = vmatmul.mubr.f32.gmra.mrb[0].mxu0 %v618
      %v800 = vpop.f32.mrb[0].mxu0
      %v801 = vadd.f32 %v477, %v800
      %v802 = vpop.f32.mrb[0].mxu0
      %803 = vmatprep.mubr.f32.mxu0 0.0
      %804 = vmatmul.mubr.f32.gmra.mrb[0].mxu0 %v621
      %v805 = vpop.f32.mrb[0].mxu0
      %v806 = vadd.f32 %v482, %v805
      %v807 = vpop.f32.mrb[0].mxu0
      %808 = vmatprep.mubr.f32.mxu0 0.0
      %809 = vmatmul.mubr.f32.gmra.mrb[0].mxu0 %v624
      %v810 = vpop.f32.mrb[0].mxu0
      %v811 = vadd.f32 %v487, %v810
      %v812 = vpop.f32.mrb[0].mxu0
      %813 = vmatprep.mubr.f32.mxu0 0.0
      %814 = vmatmul.mubr.f32.gmra.mrb[0].mxu0 %v627
      %v815 = vpop.f32.mrb[0].mxu0
      %v816 = vadd.f32 %v492, %v815
      %v817 = vpop.f32.mrb[0].mxu0
      %818 = vmatprep.mubr.f32.mxu0 0.0
      %819 = vmatmul.mubr.f32.gmra.mrb[0].mxu0 %v630
      %v820 = vpop.f32.mrb[0].mxu0
      %v821 = vadd.f32 %v497, %v820
      %v822 = vpop.f32.mrb[0].mxu0
      %823 = vmatprep.mubr.f32.mxu0 0.0
      %824 = vmatmul.mubr.f32.gmra.mrb[0].mxu0 %v633
      %v825 = vpop.f32.mrb[0].mxu0
      %v826 = vadd.f32 %v502, %v825
      %v827 = vpop.f32.mrb[0].mxu0
      %828 = vmatprep.mubr.f32.mxu0 0.0
      %829 = vmatmul.mubr.f32.gmra.mrb[0].mxu0 %v636
      %v830 = vpop.f32.mrb[0].mxu0
      %v831 = vadd.f32 %v507, %v830
      %v832 = vpop.f32.mrb[0].mxu0
      %833 = vmatprep.mubr.f32.mxu0 0.0
      %834 = vmatmul.mubr.f32.gmra.mrb[0].mxu0 %v639
      %v835 = vpop.f32.mrb[0].mxu0
      %v836 = vadd.f32 %v512, %v835
      %v837 = vpop.f32.mrb[0].mxu0
      %838 = vmatprep.mubr.f32.mxu0 0.0
      %839 = vmatmul.mubr.f32.gmra.mrb[0].mxu0 %v642
      %v840 = vpop.f32.mrb[0].mxu0
      %v841 = vadd.f32 %v517, %v840
      %v842 = vpop.f32.mrb[0].mxu0
      %843 = vmatprep.mubr.f32.mxu0 0.0
      %844 = vmatmul.mubr.f32.gmra.mrb[0].mxu0 %v645
      %v845 = vpop.f32.mrb[0].mxu0
      %v846 = vadd.f32 %v522, %v845
      %v847 = vpop.f32.mrb[0].mxu0
      %848 = vmatprep.mubr.f32.mxu0 0.0
      %849 = vmatmul.mubr.f32.gmra.mrb[0].mxu0 %v648
      %v850 = vpop.f32.mrb[0].mxu0
      %v851 = vadd.f32 %v527, %v850
      %v852 = vpop.f32.mrb[0].mxu0
      %853 = vmatprep.mubr.f32.mxu0 0.0
      %854 = vmatmul.mubr.f32.gmra.mrb[0].mxu0 %v651
      %v855 = vpop.f32.mrb[0].mxu0
      %v856 = vadd.f32 %v532, %v855
      %v857 = vpop.f32.mrb[0].mxu0
      %858 = vmatprep.mubr.f32.mxu0 0.0
      %859 = vmatmul.mubr.f32.gmra.mrb[0].mxu0 %v654
      %v860 = vpop.f32.mrb[0].mxu0
      %v861 = vadd.f32 %v537, %v860
      %v862 = vpop.f32.mrb[0].mxu0
      %863 = vmatprep.mubr.f32.mxu0 0.0
      %864 = vmatmul.mubr.f32.gmra.mrb[0].mxu0 %v657
      %v865 = vpop.f32.mrb[0].mxu0
      %v866 = vadd.f32 %v542, %v865
      %v867 = vpop.f32.mrb[0].mxu0
      %868 = vmatprep.mubr.f32.mxu0 0.0
      %869 = vmatmul.mubr.f32.gmra.mrb[0].mxu0 %v660
      %v870 = vpop.f32.mrb[0].mxu0
      %v871 = vadd.f32 %v547, %v870
      %v872 = vpop.f32.mrb[0].mxu0
      %873 = vmatprep.mubr.f32.mxu0 0.0
      %874 = vmatmul.mubr.f32.gmra.mrb[0].mxu0 %v663
      %v875 = vpop.f32.mrb[0].mxu0
      %v876 = vadd.f32 %v552, %v875
      %v877 = vpop.f32.mrb[0].mxu0
      %878 = vmatprep.mubr.f32.mxu0 0.0
      %879 = vmatmul.mubr.f32.gmra.mrb[0].mxu0 %v666
      %v880 = vpop.f32.mrb[0].mxu0
      %v881 = vadd.f32 %v557, %v880
      %v882 = vpop.f32.mrb[0].mxu0
      %883 = vmatprep.mubr.f32.mxu0 0.0
      %884 = vmatmul.mubr.f32.gmra.mrb[0].mxu0 %v669
      %v885 = vpop.f32.mrb[0].mxu0
      %v886 = vadd.f32 %v562, %v885
      %v887 = vpop.f32.mrb[0].mxu0
      %888 = vmatprep.mubr.f32.mxu0 0.0
      %889 = vmatmul.mubr.f32.gmra.mrb[0].mxu0 %v672
      %v890 = vpop.f32.mrb[0].mxu0
      %v891 = vadd.f32 %v567, %v890
      %v892 = vpop.f32.mrb[0].mxu0
      %893 = vmatprep.mubr.f32.mxu0 0.0
      %894 = vmatmul.mubr.f32.gmra.mrb[0].mxu0 %v675
      %v895 = vpop.f32.mrb[0].mxu0
      %v896 = vadd.f32 %v572, %v895
      %v897 = vpop.f32.mrb[0].mxu0
      %898 = vmatprep.mubr.f32.mxu0 0.0
      %899 = vmatmul.mubr.f32.gmra.mrb[0].mxu0 %v678
      %v900 = vpop.f32.mrb[0].mxu0
      %v901 = vadd.f32 %v577, %v900
      %v902 = vpop.f32.mrb[0].mxu0
      %903 = vmatprep.mubr.f32.mxu0 0.0
      %904 = vmatmul.mubr.f32.gmra.mrb[0].mxu0 %v681
      %v905 = vpop.f32.mrb[0].mxu0
      %v906 = vadd.f32 %v582, %v905
      %v907 = vpop.f32.mrb[0].mxu0
      %908 = vmatprep.mubr.f32.mxu0 0.0
      %909 = vmatmul.mubr.f32.gmra.mrb[0].mxu0 %v684
      %v910 = vpop.f32.mrb[0].mxu0
      %v911 = vadd.f32 %v587, %v910
      %v912 = vpop.f32.mrb[0].mxu0
      %913 = vdwg.mxu0
      %v914 = vld [vmem:[%s196 + $0x2] sm:$0xff]
      %v915 = vld [vmem:[%s196 + $0xa] sm:$0xff]
      %v916 = vld [vmem:[%s196 + $0x1a] sm:$0xff]
      %v917 = vld [vmem:[%s196 + $0x22] sm:$0xff]
      %v918 = vld [vmem:[%s196 + $0x32] sm:$0xff]
      %v919 = vld [vmem:[%s196 + $0x3a] sm:$0xff]
      %v920 = vld [vmem:[%s196 + $0x4a] sm:$0xff]
      %v921 = vld [vmem:[%s196 + $0x52] sm:$0xff]
      %v922 = vld [vmem:[%s196 + $0x62] sm:$0xff]
      %v923 = vld [vmem:[%s196 + $0x6a] sm:$0xff]
      %v924 = vld [vmem:[%s196 + $0x7a] sm:$0xff]
      %v925 = vld [vmem:[%s196 + $0x82] sm:$0xff]
      %v926 = vld [vmem:[%s196 + $0x92] sm:$0xff]
      %v927 = vld [vmem:[%s196 + $0x9a] sm:$0xff]
      %v928 = vld [vmem:[%s196 + $0xaa] sm:$0xff]
      %v929 = vld [vmem:[%s196 + $0xb2] sm:$0xff]
      %v930 = vld [vmem:[%s196 + $0xc2] sm:$0xff]
      %v931 = vld [vmem:[%s196 + $0xca] sm:$0xff]
      %v932 = vld [vmem:[%s196 + $0xda] sm:$0xff]
      %v933 = vld [vmem:[%s196 + $0xe2] sm:$0xff]
      %v934 = vld [vmem:[%s196 + $0xf2] sm:$0xff]
      %v935 = vld [vmem:[%s196 + $0xfa] sm:$0xff]
      %v936 = vld [vmem:[%s196 + $0x10a] sm:$0xff]
      %v937 = vld [vmem:[%s196 + $0x112] sm:$0xff]
      %v938 = vld [vmem:[%s196 + $0x122] sm:$0xff]
      %v939 = vld [vmem:[%s196 + $0x12a] sm:$0xff]
      %v940 = vld [vmem:[%s196 + $0x13a] sm:$0xff]
      %v941 = vld [vmem:[%s196 + $0x142] sm:$0xff]
      %v942 = vld [vmem:[%s196 + $0x152] sm:$0xff]
      %v943 = vld [vmem:[%s196 + $0x15a] sm:$0xff]
      %v944 = vld [vmem:[%s196 + $0x16a] sm:$0xff]
      %v945 = vld [vmem:[%s196 + $0x172] sm:$0xff]
      %s946 = scalar_lea.vmem %s1, 8
      %v947 = vld [vmem:[%s946] sm:$0xf]
      %v949 = vsel %vm264, %v914, 0
      %v952 = vsel %vm264, %v915, 0
      %v955 = vsel %vm264, %v916, 0
      %v958 = vsel %vm264, %v917, 0
      %v961 = vsel %vm264, %v918, 0
      %v964 = vsel %vm264, %v919, 0
      %v967 = vsel %vm264, %v920, 0
      %v970 = vsel %vm264, %v921, 0
      %v973 = vsel %vm264, %v922, 0
      %v976 = vsel %vm264, %v923, 0
      %v979 = vsel %vm264, %v924, 0
      %v982 = vsel %vm264, %v925, 0
      %v985 = vsel %vm264, %v926, 0
      %v988 = vsel %vm264, %v927, 0
      %v991 = vsel %vm264, %v928, 0
      %v994 = vsel %vm264, %v929, 0
      %v997 = vsel %vm264, %v930, 0
      %v1000 = vsel %vm264, %v931, 0
      %v1003 = vsel %vm264, %v932, 0
      %v1006 = vsel %vm264, %v933, 0
      %v1009 = vsel %vm264, %v934, 0
      %v1012 = vsel %vm264, %v935, 0
      %v1015 = vsel %vm264, %v936, 0
      %v1018 = vsel %vm264, %v937, 0
      %v1021 = vsel %vm264, %v938, 0
      %v1024 = vsel %vm264, %v939, 0
      %v1027 = vsel %vm264, %v940, 0
      %v1030 = vsel %vm264, %v941, 0
      %v1033 = vsel %vm264, %v942, 0
      %v1036 = vsel %vm264, %v943, 0
      %v1039 = vsel %vm264, %v944, 0
      %v1042 = vsel %vm264, %v945, 0
      %v1045 = vsel %vm361, %v947, 0
      %1047 = vmatprep.subr.mxu0 0.0
      %1048 = vmatpush1.msra.mxu0 %v1045
      %1049 = vmatprep.subr.mxu0 0.0
      %1050 = vmatpush1.msra.mxu0 0.0
      %1051 = vmatprep.subr.mxu0 0.0
      %1052 = vmatpush1.msra.mxu0 0.0
      %1053 = vmatprep.subr.mxu0 0.0
      %1054 = vmatpush1.msra.mxu0 0.0
      %1055 = vmatprep.subr.mxu0 0.0
      %1056 = vmatpush1.msra.mxu0 0.0
      %1057 = vmatprep.subr.mxu0 0.0
      %1058 = vmatpush1.msra.mxu0 0.0
      %1059 = vmatprep.subr.mxu0 0.0
      %1060 = vmatpush1.msra.mxu0 0.0
      %1061 = vmatprep.subr.mxu0 0.0
      %1062 = vmatpush1.msra.mxu0 0.0
      %1063 = vmatprep.subr.mxu0 0.0
      %1064 = vmatpush1.msra.mxu0 0.0
      %1065 = vmatprep.subr.mxu0 0.0
      %1066 = vmatpush1.msra.mxu0 0.0
      %1067 = vmatprep.subr.mxu0 0.0
      %1068 = vmatpush1.msra.mxu0 0.0
      %1069 = vmatprep.subr.mxu0 0.0
      %1070 = vmatpush1.msra.mxu0 0.0
      %1071 = vmatprep.subr.mxu0 0.0
      %1072 = vmatpush1.msra.mxu0 0.0
      %1073 = vmatprep.subr.mxu0 0.0
      %1074 = vmatpush1.msra.mxu0 0.0
      %1075 = vmatprep.subr.mxu0 0.0
      %1076 = vmatpush1.msra.mxu0 0.0
      %1077 = vmatprep.subr.mxu0 0.0
      %1078 = vmatpush1.msra.mxu0 0.0
      %1079 = vmatprep.subr.mxu0 0.0
      %1080 = vmatpush1.msra.mxu0 0.0
      %1081 = vmatprep.subr.mxu0 0.0
      %1082 = vmatpush1.msra.mxu0 0.0
      %1083 = vmatprep.subr.mxu0 0.0
      %1084 = vmatpush1.msra.mxu0 0.0
      %1085 = vmatprep.subr.mxu0 0.0
      %1086 = vmatpush1.msra.mxu0 0.0
      %1087 = vmatprep.subr.mxu0 0.0
      %1088 = vmatpush1.msra.mxu0 0.0
      %1089 = vmatprep.subr.mxu0 0.0
      %1090 = vmatpush1.msra.mxu0 0.0
      %1091 = vmatprep.subr.mxu0 0.0
      %1092 = vmatpush1.msra.mxu0 0.0
      %1093 = vmatprep.subr.mxu0 0.0
      %1094 = vmatpush1.msra.mxu0 0.0
      %1095 = vmatprep.subr.mxu0 0.0
      %1096 = vmatpush1.msra.mxu0 0.0
      %1097 = vmatprep.subr.mxu0 0.0
      %1098 = vmatpush1.msra.mxu0 0.0
      %1099 = vmatprep.subr.mxu0 0.0
      %1100 = vmatpush1.msra.mxu0 0.0
      %1101 = vmatprep.subr.mxu0 0.0
      %1102 = vmatpush1.msra.mxu0 0.0
      %1103 = vmatprep.subr.mxu0 0.0
      %1104 = vmatpush1.msra.mxu0 0.0
      %1105 = vmatprep.subr.mxu0 0.0
      %1106 = vmatpush1.msra.mxu0 0.0
      %1107 = vmatprep.subr.mxu0 0.0
      %1108 = vmatpush1.msra.mxu0 0.0
      %1109 = vmatprep.subr.mxu0 0.0
      %1110 = vmatpush1.msra.mxu0 0.0
      %1111 = vmatprep.mubr.f32.mxu0 0.0
      %1112 = vmatmul.mubr.f32.gmra.mrb[0].mxu0 %v949
      %v1113 = vpop.f32.mrb[0].mxu0
      %v1114 = vadd.f32 0.0, %v1113
      %v1115 = vpop.f32.mrb[0].mxu0
      %1116 = vmatprep.mubr.f32.mxu0 0.0
      %1117 = vmatmul.mubr.f32.gmra.mrb[0].mxu0 %v952
      %v1118 = vpop.f32.mrb[0].mxu0
      %v1119 = vadd.f32 0.0, %v1118
      %v1120 = vpop.f32.mrb[0].mxu0
      %1121 = vmatprep.mubr.f32.mxu0 0.0
      %1122 = vmatmul.mubr.f32.gmra.mrb[0].mxu0 %v955
      %v1123 = vpop.f32.mrb[0].mxu0
      %v1124 = vadd.f32 0.0, %v1123
      %v1125 = vpop.f32.mrb[0].mxu0
      %1126 = vmatprep.mubr.f32.mxu0 0.0
      %1127 = vmatmul.mubr.f32.gmra.mrb[0].mxu0 %v958
      %v1128 = vpop.f32.mrb[0].mxu0
      %v1129 = vadd.f32 0.0, %v1128
      %v1130 = vpop.f32.mrb[0].mxu0
      %1131 = vmatprep.mubr.f32.mxu0 0.0
      %1132 = vmatmul.mubr.f32.gmra.mrb[0].mxu0 %v961
      %v1133 = vpop.f32.mrb[0].mxu0
      %v1134 = vadd.f32 0.0, %v1133
      %v1135 = vpop.f32.mrb[0].mxu0
      %1136 = vmatprep.mubr.f32.mxu0 0.0
      %1137 = vmatmul.mubr.f32.gmra.mrb[0].mxu0 %v964
      %v1138 = vpop.f32.mrb[0].mxu0
      %v1139 = vadd.f32 0.0, %v1138
      %v1140 = vpop.f32.mrb[0].mxu0
      %1141 = vmatprep.mubr.f32.mxu0 0.0
      %1142 = vmatmul.mubr.f32.gmra.mrb[0].mxu0 %v967
      %v1143 = vpop.f32.mrb[0].mxu0
      %v1144 = vadd.f32 0.0, %v1143
      %v1145 = vpop.f32.mrb[0].mxu0
      %1146 = vmatprep.mubr.f32.mxu0 0.0
      %1147 = vmatmul.mubr.f32.gmra.mrb[0].mxu0 %v970
      %v1148 = vpop.f32.mrb[0].mxu0
      %v1149 = vadd.f32 0.0, %v1148
      %v1150 = vpop.f32.mrb[0].mxu0
      %1151 = vmatprep.mubr.f32.mxu0 0.0
      %1152 = vmatmul.mubr.f32.gmra.mrb[0].mxu0 %v973
      %v1153 = vpop.f32.mrb[0].mxu0
      %v1154 = vadd.f32 0.0, %v1153
      %v1155 = vpop.f32.mrb[0].mxu0
      %1156 = vmatprep.mubr.f32.mxu0 0.0
      %1157 = vmatmul.mubr.f32.gmra.mrb[0].mxu0 %v976
      %v1158 = vpop.f32.mrb[0].mxu0
      %v1159 = vadd.f32 0.0, %v1158
      %v1160 = vpop.f32.mrb[0].mxu0
      %1161 = vmatprep.mubr.f32.mxu0 0.0
      %1162 = vmatmul.mubr.f32.gmra.mrb[0].mxu0 %v979
      %v1163 = vpop.f32.mrb[0].mxu0
      %v1164 = vadd.f32 0.0, %v1163
      %v1165 = vpop.f32.mrb[0].mxu0
      %1166 = vmatprep.mubr.f32.mxu0 0.0
      %1167 = vmatmul.mubr.f32.gmra.mrb[0].mxu0 %v982
      %v1168 = vpop.f32.mrb[0].mxu0
      %v1169 = vadd.f32 0.0, %v1168
      %v1170 = vpop.f32.mrb[0].mxu0
      %1171 = vmatprep.mubr.f32.mxu0 0.0
      %1172 = vmatmul.mubr.f32.gmra.mrb[0].mxu0 %v985
      %v1173 = vpop.f32.mrb[0].mxu0
      %v1174 = vadd.f32 0.0, %v1173
      %v1175 = vpop.f32.mrb[0].mxu0
      %1176 = vmatprep.mubr.f32.mxu0 0.0
      %1177 = vmatmul.mubr.f32.gmra.mrb[0].mxu0 %v988
      %v1178 = vpop.f32.mrb[0].mxu0
      %v1179 = vadd.f32 0.0, %v1178
      %v1180 = vpop.f32.mrb[0].mxu0
      %1181 = vmatprep.mubr.f32.mxu0 0.0
      %1182 = vmatmul.mubr.f32.gmra.mrb[0].mxu0 %v991
      %v1183 = vpop.f32.mrb[0].mxu0
      %v1184 = vadd.f32 0.0, %v1183
      %v1185 = vpop.f32.mrb[0].mxu0
      %1186 = vmatprep.mubr.f32.mxu0 0.0
      %1187 = vmatmul.mubr.f32.gmra.mrb[0].mxu0 %v994
      %v1188 = vpop.f32.mrb[0].mxu0
      %v1189 = vadd.f32 0.0, %v1188
      %v1190 = vpop.f32.mrb[0].mxu0
      %1191 = vmatprep.mubr.f32.mxu0 0.0
      %1192 = vmatmul.mubr.f32.gmra.mrb[0].mxu0 %v997
      %v1193 = vpop.f32.mrb[0].mxu0
      %v1194 = vadd.f32 0.0, %v1193
      %v1195 = vpop.f32.mrb[0].mxu0
      %1196 = vmatprep.mubr.f32.mxu0 0.0
      %1197 = vmatmul.mubr.f32.gmra.mrb[0].mxu0 %v1000
      %v1198 = vpop.f32.mrb[0].mxu0
      %v1199 = vadd.f32 0.0, %v1198
      %v1200 = vpop.f32.mrb[0].mxu0
      %1201 = vmatprep.mubr.f32.mxu0 0.0
      %1202 = vmatmul.mubr.f32.gmra.mrb[0].mxu0 %v1003
      %v1203 = vpop.f32.mrb[0].mxu0
      %v1204 = vadd.f32 0.0, %v1203
      %v1205 = vpop.f32.mrb[0].mxu0
      %1206 = vmatprep.mubr.f32.mxu0 0.0
      %1207 = vmatmul.mubr.f32.gmra.mrb[0].mxu0 %v1006
      %v1208 = vpop.f32.mrb[0].mxu0
      %v1209 = vadd.f32 0.0, %v1208
      %v1210 = vpop.f32.mrb[0].mxu0
      %1211 = vmatprep.mubr.f32.mxu0 0.0
      %1212 = vmatmul.mubr.f32.gmra.mrb[0].mxu0 %v1009
      %v1213 = vpop.f32.mrb[0].mxu0
      %v1214 = vadd.f32 0.0, %v1213
      %v1215 = vpop.f32.mrb[0].mxu0
      %1216 = vmatprep.mubr.f32.mxu0 0.0
      %1217 = vmatmul.mubr.f32.gmra.mrb[0].mxu0 %v1012
      %v1218 = vpop.f32.mrb[0].mxu0
      %v1219 = vadd.f32 0.0, %v1218
      %v1220 = vpop.f32.mrb[0].mxu0
      %1221 = vmatprep.mubr.f32.mxu0 0.0
      %1222 = vmatmul.mubr.f32.gmra.mrb[0].mxu0 %v1015
      %v1223 = vpop.f32.mrb[0].mxu0
      %v1224 = vadd.f32 0.0, %v1223
      %v1225 = vpop.f32.mrb[0].mxu0
      %1226 = vmatprep.mubr.f32.mxu0 0.0
      %1227 = vmatmul.mubr.f32.gmra.mrb[0].mxu0 %v1018
      %v1228 = vpop.f32.mrb[0].mxu0
      %v1229 = vadd.f32 0.0, %v1228
      %v1230 = vpop.f32.mrb[0].mxu0
      %1231 = vmatprep.mubr.f32.mxu0 0.0
      %1232 = vmatmul.mubr.f32.gmra.mrb[0].mxu0 %v1021
      %v1233 = vpop.f32.mrb[0].mxu0
      %v1234 = vadd.f32 0.0, %v1233
      %v1235 = vpop.f32.mrb[0].mxu0
      %1236 = vmatprep.mubr.f32.mxu0 0.0
      %1237 = vmatmul.mubr.f32.gmra.mrb[0].mxu0 %v1024
      %v1238 = vpop.f32.mrb[0].mxu0
      %v1239 = vadd.f32 0.0, %v1238
      %v1240 = vpop.f32.mrb[0].mxu0
      %1241 = vmatprep.mubr.f32.mxu0 0.0
      %1242 = vmatmul.mubr.f32.gmra.mrb[0].mxu0 %v1027
      %v1243 = vpop.f32.mrb[0].mxu0
      %v1244 = vadd.f32 0.0, %v1243
      %v1245 = vpop.f32.mrb[0].mxu0
      %1246 = vmatprep.mubr.f32.mxu0 0.0
      %1247 = vmatmul.mubr.f32.gmra.mrb[0].mxu0 %v1030
      %v1248 = vpop.f32.mrb[0].mxu0
      %v1249 = vadd.f32 0.0, %v1248
      %v1250 = vpop.f32.mrb[0].mxu0
      %1251 = vmatprep.mubr.f32.mxu0 0.0
      %1252 = vmatmul.mubr.f32.gmra.mrb[0].mxu0 %v1033
      %v1253 = vpop.f32.mrb[0].mxu0
      %v1254 = vadd.f32 0.0, %v1253
      %v1255 = vpop.f32.mrb[0].mxu0
      %1256 = vmatprep.mubr.f32.mxu0 0.0
      %1257 = vmatmul.mubr.f32.gmra.mrb[0].mxu0 %v1036
      %v1258 = vpop.f32.mrb[0].mxu0
      %v1259 = vadd.f32 0.0, %v1258
      %v1260 = vpop.f32.mrb[0].mxu0
      %1261 = vmatprep.mubr.f32.mxu0 0.0
      %1262 = vmatmul.mubr.f32.gmra.mrb[0].mxu0 %v1039
      %v1263 = vpop.f32.mrb[0].mxu0
      %v1264 = vadd.f32 0.0, %v1263
      %v1265 = vpop.f32.mrb[0].mxu0
      %1266 = vmatprep.mubr.f32.mxu0 0.0
      %1267 = vmatmul.mubr.f32.gmra.mrb[0].mxu0 %v1042
      %v1268 = vpop.f32.mrb[0].mxu0
      %v1269 = vadd.f32 0.0, %v1268
      %v1270 = vpop.f32.mrb[0].mxu0
      %1271 = vdwg.mxu0
      %v1272 = vadd.f32 %v756, %v1114
      %v1273 = vadd.f32 %v761, %v1119
      %v1274 = vadd.f32 %v766, %v1124
      %v1275 = vadd.f32 %v771, %v1129
      %v1276 = vadd.f32 %v776, %v1134
      %v1277 = vadd.f32 %v781, %v1139
      %v1278 = vadd.f32 %v786, %v1144
      %v1279 = vadd.f32 %v791, %v1149
      %v1280 = vadd.f32 %v796, %v1154
      %v1281 = vadd.f32 %v801, %v1159
      %v1282 = vadd.f32 %v806, %v1164
      %v1283 = vadd.f32 %v811, %v1169
      %v1284 = vadd.f32 %v816, %v1174
      %v1285 = vadd.f32 %v821, %v1179
      %v1286 = vadd.f32 %v826, %v1184
      %v1287 = vadd.f32 %v831, %v1189
      %v1288 = vadd.f32 %v836, %v1194
      %v1289 = vadd.f32 %v841, %v1199
      %v1290 = vadd.f32 %v846, %v1204
      %v1291 = vadd.f32 %v851, %v1209
      %v1292 = vadd.f32 %v856, %v1214
      %v1293 = vadd.f32 %v861, %v1219
      %v1294 = vadd.f32 %v866, %v1224
      %v1295 = vadd.f32 %v871, %v1229
      %v1296 = vadd.f32 %v876, %v1234
      %v1297 = vadd.f32 %v881, %v1239
      %v1298 = vadd.f32 %v886, %v1244
      %v1299 = vadd.f32 %v891, %v1249
      %v1300 = vadd.f32 %v896, %v1254
      %v1301 = vadd.f32 %v901, %v1259
      %v1302 = vadd.f32 %v906, %v1264
      %v1303 = vadd.f32 %v911, %v1269
      %s1304 = sadd.s32 %s194, 1
      %s1305 = smul.u32 %s1304, 24
      %s1306 = scalar_lea.vmem %s183, %s1305
      %v1307 = vld [vmem:[%s1306] sm:$0xff]
      %v1308 = vld [vmem:[%s1306 + $0x8] sm:$0xff]
      %v1309 = vld [vmem:[%s1306 + $0x18] sm:$0xff]
      %v1310 = vld [vmem:[%s1306 + $0x20] sm:$0xff]
      %v1311 = vld [vmem:[%s1306 + $0x30] sm:$0xff]
      %v1312 = vld [vmem:[%s1306 + $0x38] sm:$0xff]
      %v1313 = vld [vmem:[%s1306 + $0x48] sm:$0xff]
      %v1314 = vld [vmem:[%s1306 + $0x50] sm:$0xff]
      %v1315 = vld [vmem:[%s1306 + $0x60] sm:$0xff]
      %v1316 = vld [vmem:[%s1306 + $0x68] sm:$0xff]
      %v1317 = vld [vmem:[%s1306 + $0x78] sm:$0xff]
      %v1318 = vld [vmem:[%s1306 + $0x80] sm:$0xff]
      %v1319 = vld [vmem:[%s1306 + $0x90] sm:$0xff]
      %v1320 = vld [vmem:[%s1306 + $0x98] sm:$0xff]
      %v1321 = vld [vmem:[%s1306 + $0xa8] sm:$0xff]
      %v1322 = vld [vmem:[%s1306 + $0xb0] sm:$0xff]
      %v1323 = vld [vmem:[%s1306 + $0xc0] sm:$0xff]
      %v1324 = vld [vmem:[%s1306 + $0xc8] sm:$0xff]
      %v1325 = vld [vmem:[%s1306 + $0xd8] sm:$0xff]
      %v1326 = vld [vmem:[%s1306 + $0xe0] sm:$0xff]
      %v1327 = vld [vmem:[%s1306 + $0xf0] sm:$0xff]
      %v1328 = vld [vmem:[%s1306 + $0xf8] sm:$0xff]
      %v1329 = vld [vmem:[%s1306 + $0x108] sm:$0xff]
      %v1330 = vld [vmem:[%s1306 + $0x110] sm:$0xff]
      %v1331 = vld [vmem:[%s1306 + $0x120] sm:$0xff]
      %v1332 = vld [vmem:[%s1306 + $0x128] sm:$0xff]
      %v1333 = vld [vmem:[%s1306 + $0x138] sm:$0xff]
      %v1334 = vld [vmem:[%s1306 + $0x140] sm:$0xff]
      %v1335 = vld [vmem:[%s1306 + $0x150] sm:$0xff]
      %v1336 = vld [vmem:[%s1306 + $0x158] sm:$0xff]
      %v1337 = vld [vmem:[%s1306 + $0x168] sm:$0xff]
      %v1338 = vld [vmem:[%s1306 + $0x170] sm:$0xff]
      %s1339 = scalar_lea.vmem %s1, 12
      %v1340 = vld [vmem:[%s1339] sm:$0xf]
      %v1342 = vsel %vm264, %v1307, 0
      %v1345 = vsel %vm264, %v1308, 0
      %v1348 = vsel %vm264, %v1309, 0
      %v1351 = vsel %vm264, %v1310, 0
      %v1354 = vsel %vm264, %v1311, 0
      %v1357 = vsel %vm264, %v1312, 0
      %v1360 = vsel %vm264, %v1313, 0
      %v1363 = vsel %vm264, %v1314, 0
      %v1366 = vsel %vm264, %v1315, 0
      %v1369 = vsel %vm264, %v1316, 0
      %v1372 = vsel %vm264, %v1317, 0
      %v1375 = vsel %vm264, %v1318, 0
      %v1378 = vsel %vm264, %v1319, 0
      %v1381 = vsel %vm264, %v1320, 0
      %v1384 = vsel %vm264, %v1321, 0
      %v1387 = vsel %vm264, %v1322, 0
      %v1390 = vsel %vm264, %v1323, 0
      %v1393 = vsel %vm264, %v1324, 0
      %v1396 = vsel %vm264, %v1325, 0
      %v1399 = vsel %vm264, %v1326, 0
      %v1402 = vsel %vm264, %v1327, 0
      %v1405 = vsel %vm264, %v1328, 0
      %v1408 = vsel %vm264, %v1329, 0
      %v1411 = vsel %vm264, %v1330, 0
      %v1414 = vsel %vm264, %v1331, 0
      %v1417 = vsel %vm264, %v1332, 0
      %v1420 = vsel %vm264, %v1333, 0
      %v1423 = vsel %vm264, %v1334, 0
      %v1426 = vsel %vm264, %v1335, 0
      %v1429 = vsel %vm264, %v1336, 0
      %v1432 = vsel %vm264, %v1337, 0
      %v1435 = vsel %vm264, %v1338, 0
      %v1438 = vsel %vm361, %v1340, 0
      %1440 = vmatprep.subr.mxu0 0.0
      %1441 = vmatpush1.msra.mxu0 %v1438
      %1442 = vmatprep.subr.mxu0 0.0
      %1443 = vmatpush1.msra.mxu0 0.0
      %1444 = vmatprep.subr.mxu0 0.0
      %1445 = vmatpush1.msra.mxu0 0.0
      %1446 = vmatprep.subr.mxu0 0.0
      %1447 = vmatpush1.msra.mxu0 0.0
      %1448 = vmatprep.subr.mxu0 0.0
      %1449 = vmatpush1.msra.mxu0 0.0
      %1450 = vmatprep.subr.mxu0 0.0
      %1451 = vmatpush1.msra.mxu0 0.0
      %1452 = vmatprep.subr.mxu0 0.0
      %1453 = vmatpush1.msra.mxu0 0.0
      %1454 = vmatprep.subr.mxu0 0.0
      %1455 = vmatpush1.msra.mxu0 0.0
      %1456 = vmatprep.subr.mxu0 0.0
      %1457 = vmatpush1.msra.mxu0 0.0
      %1458 = vmatprep.subr.mxu0 0.0
      %1459 = vmatpush1.msra.mxu0 0.0
      %1460 = vmatprep.subr.mxu0 0.0
      %1461 = vmatpush1.msra.mxu0 0.0
      %1462 = vmatprep.subr.mxu0 0.0
      %1463 = vmatpush1.msra.mxu0 0.0
      %1464 = vmatprep.subr.mxu0 0.0
      %1465 = vmatpush1.msra.mxu0 0.0
      %1466 = vmatprep.subr.mxu0 0.0
      %1467 = vmatpush1.msra.mxu0 0.0
      %1468 = vmatprep.subr.mxu0 0.0
      %1469 = vmatpush1.msra.mxu0 0.0
      %1470 = vmatprep.subr.mxu0 0.0
      %1471 = vmatpush1.msra.mxu0 0.0
      %1472 = vmatprep.subr.mxu0 0.0
      %1473 = vmatpush1.msra.mxu0 0.0
      %1474 = vmatprep.subr.mxu0 0.0
      %1475 = vmatpush1.msra.mxu0 0.0
      %1476 = vmatprep.subr.mxu0 0.0
      %1477 = vmatpush1.msra.mxu0 0.0
      %1478 = vmatprep.subr.mxu0 0.0
      %1479 = vmatpush1.msra.mxu0 0.0
      %1480 = vmatprep.subr.mxu0 0.0
      %1481 = vmatpush1.msra.mxu0 0.0
      %1482 = vmatprep.subr.mxu0 0.0
      %1483 = vmatpush1.msra.mxu0 0.0
      %1484 = vmatprep.subr.mxu0 0.0
      %1485 = vmatpush1.msra.mxu0 0.0
      %1486 = vmatprep.subr.mxu0 0.0
      %1487 = vmatpush1.msra.mxu0 0.0
      %1488 = vmatprep.subr.mxu0 0.0
      %1489 = vmatpush1.msra.mxu0 0.0
      %1490 = vmatprep.subr.mxu0 0.0
      %1491 = vmatpush1.msra.mxu0 0.0
      %1492 = vmatprep.subr.mxu0 0.0
      %1493 = vmatpush1.msra.mxu0 0.0
      %1494 = vmatprep.subr.mxu0 0.0
      %1495 = vmatpush1.msra.mxu0 0.0
      %1496 = vmatprep.subr.mxu0 0.0
      %1497 = vmatpush1.msra.mxu0 0.0
      %1498 = vmatprep.subr.mxu0 0.0
      %1499 = vmatpush1.msra.mxu0 0.0
      %1500 = vmatprep.subr.mxu0 0.0
      %1501 = vmatpush1.msra.mxu0 0.0
      %1502 = vmatprep.subr.mxu0 0.0
      %1503 = vmatpush1.msra.mxu0 0.0
      %1504 = vmatprep.mubr.f32.mxu0 0.0
      %1505 = vmatmul.mubr.f32.gmra.mrb[0].mxu0 %v1342
      %v1506 = vpop.f32.mrb[0].mxu0
      %v1507 = vadd.f32 0.0, %v1506
      %v1508 = vpop.f32.mrb[0].mxu0
      %1509 = vmatprep.mubr.f32.mxu0 0.0
      %1510 = vmatmul.mubr.f32.gmra.mrb[0].mxu0 %v1345
      %v1511 = vpop.f32.mrb[0].mxu0
      %v1512 = vadd.f32 0.0, %v1511
      %v1513 = vpop.f32.mrb[0].mxu0
      %1514 = vmatprep.mubr.f32.mxu0 0.0
      %1515 = vmatmul.mubr.f32.gmra.mrb[0].mxu0 %v1348
      %v1516 = vpop.f32.mrb[0].mxu0
      %v1517 = vadd.f32 0.0, %v1516
      %v1518 = vpop.f32.mrb[0].mxu0
      %1519 = vmatprep.mubr.f32.mxu0 0.0
      %1520 = vmatmul.mubr.f32.gmra.mrb[0].mxu0 %v1351
      %v1521 = vpop.f32.mrb[0].mxu0
      %v1522 = vadd.f32 0.0, %v1521
      %v1523 = vpop.f32.mrb[0].mxu0
      %1524 = vmatprep.mubr.f32.mxu0 0.0
      %1525 = vmatmul.mubr.f32.gmra.mrb[0].mxu0 %v1354
      %v1526 = vpop.f32.mrb[0].mxu0
      %v1527 = vadd.f32 0.0, %v1526
      %v1528 = vpop.f32.mrb[0].mxu0
      %1529 = vmatprep.mubr.f32.mxu0 0.0
      %1530 = vmatmul.mubr.f32.gmra.mrb[0].mxu0 %v1357
      %v1531 = vpop.f32.mrb[0].mxu0
      %v1532 = vadd.f32 0.0, %v1531
      %v1533 = vpop.f32.mrb[0].mxu0
      %1534 = vmatprep.mubr.f32.mxu0 0.0
      %1535 = vmatmul.mubr.f32.gmra.mrb[0].mxu0 %v1360
      %v1536 = vpop.f32.mrb[0].mxu0
      %v1537 = vadd.f32 0.0, %v1536
      %v1538 = vpop.f32.mrb[0].mxu0
      %1539 = vmatprep.mubr.f32.mxu0 0.0
      %1540 = vmatmul.mubr.f32.gmra.mrb[0].mxu0 %v1363
      %v1541 = vpop.f32.mrb[0].mxu0
      %v1542 = vadd.f32 0.0, %v1541
      %v1543 = vpop.f32.mrb[0].mxu0
      %1544 = vmatprep.mubr.f32.mxu0 0.0
      %1545 = vmatmul.mubr.f32.gmra.mrb[0].mxu0 %v1366
      %v1546 = vpop.f32.mrb[0].mxu0
      %v1547 = vadd.f32 0.0, %v1546
      %v1548 = vpop.f32.mrb[0].mxu0
      %1549 = vmatprep.mubr.f32.mxu0 0.0
      %1550 = vmatmul.mubr.f32.gmra.mrb[0].mxu0 %v1369
      %v1551 = vpop.f32.mrb[0].mxu0
      %v1552 = vadd.f32 0.0, %v1551
      %v1553 = vpop.f32.mrb[0].mxu0
      %1554 = vmatprep.mubr.f32.mxu0 0.0
      %1555 = vmatmul.mubr.f32.gmra.mrb[0].mxu0 %v1372
      %v1556 = vpop.f32.mrb[0].mxu0
      %v1557 = vadd.f32 0.0, %v1556
      %v1558 = vpop.f32.mrb[0].mxu0
      %1559 = vmatprep.mubr.f32.mxu0 0.0
      %1560 = vmatmul.mubr.f32.gmra.mrb[0].mxu0 %v1375
      %v1561 = vpop.f32.mrb[0].mxu0
      %v1562 = vadd.f32 0.0, %v1561
      %v1563 = vpop.f32.mrb[0].mxu0
      %1564 = vmatprep.mubr.f32.mxu0 0.0
      %1565 = vmatmul.mubr.f32.gmra.mrb[0].mxu0 %v1378
      %v1566 = vpop.f32.mrb[0].mxu0
      %v1567 = vadd.f32 0.0, %v1566
      %v1568 = vpop.f32.mrb[0].mxu0
      %1569 = vmatprep.mubr.f32.mxu0 0.0
      %1570 = vmatmul.mubr.f32.gmra.mrb[0].mxu0 %v1381
      %v1571 = vpop.f32.mrb[0].mxu0
      %v1572 = vadd.f32 0.0, %v1571
      %v1573 = vpop.f32.mrb[0].mxu0
      %1574 = vmatprep.mubr.f32.mxu0 0.0
      %1575 = vmatmul.mubr.f32.gmra.mrb[0].mxu0 %v1384
      %v1576 = vpop.f32.mrb[0].mxu0
      %v1577 = vadd.f32 0.0, %v1576
      %v1578 = vpop.f32.mrb[0].mxu0
      %1579 = vmatprep.mubr.f32.mxu0 0.0
      %1580 = vmatmul.mubr.f32.gmra.mrb[0].mxu0 %v1387
      %v1581 = vpop.f32.mrb[0].mxu0
      %v1582 = vadd.f32 0.0, %v1581
      %v1583 = vpop.f32.mrb[0].mxu0
      %1584 = vmatprep.mubr.f32.mxu0 0.0
      %1585 = vmatmul.mubr.f32.gmra.mrb[0].mxu0 %v1390
      %v1586 = vpop.f32.mrb[0].mxu0
      %v1587 = vadd.f32 0.0, %v1586
      %v1588 = vpop.f32.mrb[0].mxu0
      %1589 = vmatprep.mubr.f32.mxu0 0.0
      %1590 = vmatmul.mubr.f32.gmra.mrb[0].mxu0 %v1393
      %v1591 = vpop.f32.mrb[0].mxu0
      %v1592 = vadd.f32 0.0, %v1591
      %v1593 = vpop.f32.mrb[0].mxu0
      %1594 = vmatprep.mubr.f32.mxu0 0.0
      %1595 = vmatmul.mubr.f32.gmra.mrb[0].mxu0 %v1396
      %v1596 = vpop.f32.mrb[0].mxu0
      %v1597 = vadd.f32 0.0, %v1596
      %v1598 = vpop.f32.mrb[0].mxu0
      %1599 = vmatprep.mubr.f32.mxu0 0.0
      %1600 = vmatmul.mubr.f32.gmra.mrb[0].mxu0 %v1399
      %v1601 = vpop.f32.mrb[0].mxu0
      %v1602 = vadd.f32 0.0, %v1601
      %v1603 = vpop.f32.mrb[0].mxu0
      %1604 = vmatprep.mubr.f32.mxu0 0.0
      %1605 = vmatmul.mubr.f32.gmra.mrb[0].mxu0 %v1402
      %v1606 = vpop.f32.mrb[0].mxu0
      %v1607 = vadd.f32 0.0, %v1606
      %v1608 = vpop.f32.mrb[0].mxu0
      %1609 = vmatprep.mubr.f32.mxu0 0.0
      %1610 = vmatmul.mubr.f32.gmra.mrb[0].mxu0 %v1405
      %v1611 = vpop.f32.mrb[0].mxu0
      %v1612 = vadd.f32 0.0, %v1611
      %v1613 = vpop.f32.mrb[0].mxu0
      %1614 = vmatprep.mubr.f32.mxu0 0.0
      %1615 = vmatmul.mubr.f32.gmra.mrb[0].mxu0 %v1408
      %v1616 = vpop.f32.mrb[0].mxu0
      %v1617 = vadd.f32 0.0, %v1616
      %v1618 = vpop.f32.mrb[0].mxu0
      %1619 = vmatprep.mubr.f32.mxu0 0.0
      %1620 = vmatmul.mubr.f32.gmra.mrb[0].mxu0 %v1411
      %v1621 = vpop.f32.mrb[0].mxu0
      %v1622 = vadd.f32 0.0, %v1621
      %v1623 = vpop.f32.mrb[0].mxu0
      %1624 = vmatprep.mubr.f32.mxu0 0.0
      %1625 = vmatmul.mubr.f32.gmra.mrb[0].mxu0 %v1414
      %v1626 = vpop.f32.mrb[0].mxu0
      %v1627 = vadd.f32 0.0, %v1626
      %v1628 = vpop.f32.mrb[0].mxu0
      %1629 = vmatprep.mubr.f32.mxu0 0.0
      %1630 = vmatmul.mubr.f32.gmra.mrb[0].mxu0 %v1417
      %v1631 = vpop.f32.mrb[0].mxu0
      %v1632 = vadd.f32 0.0, %v1631
      %v1633 = vpop.f32.mrb[0].mxu0
      %1634 = vmatprep.mubr.f32.mxu0 0.0
      %1635 = vmatmul.mubr.f32.gmra.mrb[0].mxu0 %v1420
      %v1636 = vpop.f32.mrb[0].mxu0
      %v1637 = vadd.f32 0.0, %v1636
      %v1638 = vpop.f32.mrb[0].mxu0
      %1639 = vmatprep.mubr.f32.mxu0 0.0
      %1640 = vmatmul.mubr.f32.gmra.mrb[0].mxu0 %v1423
      %v1641 = vpop.f32.mrb[0].mxu0
      %v1642 = vadd.f32 0.0, %v1641
      %v1643 = vpop.f32.mrb[0].mxu0
      %1644 = vmatprep.mubr.f32.mxu0 0.0
      %1645 = vmatmul.mubr.f32.gmra.mrb[0].mxu0 %v1426
      %v1646 = vpop.f32.mrb[0].mxu0
      %v1647 = vadd.f32 0.0, %v1646
      %v1648 = vpop.f32.mrb[0].mxu0
      %1649 = vmatprep.mubr.f32.mxu0 0.0
      %1650 = vmatmul.mubr.f32.gmra.mrb[0].mxu0 %v1429
      %v1651 = vpop.f32.mrb[0].mxu0
      %v1652 = vadd.f32 0.0, %v1651
      %v1653 = vpop.f32.mrb[0].mxu0
      %1654 = vmatprep.mubr.f32.mxu0 0.0
      %1655 = vmatmul.mubr.f32.gmra.mrb[0].mxu0 %v1432
      %v1656 = vpop.f32.mrb[0].mxu0
      %v1657 = vadd.f32 0.0, %v1656
      %v1658 = vpop.f32.mrb[0].mxu0
      %1659 = vmatprep.mubr.f32.mxu0 0.0
      %1660 = vmatmul.mubr.f32.gmra.mrb[0].mxu0 %v1435
      %v1661 = vpop.f32.mrb[0].mxu0
      %v1662 = vadd.f32 0.0, %v1661
      %v1663 = vpop.f32.mrb[0].mxu0
      %1664 = vdwg.mxu0
      %v1665 = vadd.f32 %v1272, %v1507
      %v1666 = vadd.f32 %v1273, %v1512
      %v1667 = vadd.f32 %v1274, %v1517
      %v1668 = vadd.f32 %v1275, %v1522
      %v1669 = vadd.f32 %v1276, %v1527
      %v1670 = vadd.f32 %v1277, %v1532
      %v1671 = vadd.f32 %v1278, %v1537
      %v1672 = vadd.f32 %v1279, %v1542
      %v1673 = vadd.f32 %v1280, %v1547
      %v1674 = vadd.f32 %v1281, %v1552
      %v1675 = vadd.f32 %v1282, %v1557
      %v1676 = vadd.f32 %v1283, %v1562
      %v1677 = vadd.f32 %v1284, %v1567
      %v1678 = vadd.f32 %v1285, %v1572
      %v1679 = vadd.f32 %v1286, %v1577
      %v1680 = vadd.f32 %v1287, %v1582
      %v1681 = vadd.f32 %v1288, %v1587
      %v1682 = vadd.f32 %v1289, %v1592
      %v1683 = vadd.f32 %v1290, %v1597
      %v1684 = vadd.f32 %v1291, %v1602
      %v1685 = vadd.f32 %v1292, %v1607
      %v1686 = vadd.f32 %v1293, %v1612
      %v1687 = vadd.f32 %v1294, %v1617
      %v1688 = vadd.f32 %v1295, %v1622
      %v1689 = vadd.f32 %v1296, %v1627
      %v1690 = vadd.f32 %v1297, %v1632
      %v1691 = vadd.f32 %v1298, %v1637
      %v1692 = vadd.f32 %v1299, %v1642
      %v1693 = vadd.f32 %v1300, %v1647
      %v1694 = vadd.f32 %v1301, %v1652
      %v1695 = vadd.f32 %v1302, %v1657
      %v1696 = vadd.f32 %v1303, %v1662
      %v1697 = vld [vmem:[%s1306 + $0x1] sm:$0xff]
      %v1698 = vld [vmem:[%s1306 + $0x9] sm:$0xff]
      %v1699 = vld [vmem:[%s1306 + $0x19] sm:$0xff]
      %v1700 = vld [vmem:[%s1306 + $0x21] sm:$0xff]
      %v1701 = vld [vmem:[%s1306 + $0x31] sm:$0xff]
      %v1702 = vld [vmem:[%s1306 + $0x39] sm:$0xff]
      %v1703 = vld [vmem:[%s1306 + $0x49] sm:$0xff]
      %v1704 = vld [vmem:[%s1306 + $0x51] sm:$0xff]
      %v1705 = vld [vmem:[%s1306 + $0x61] sm:$0xff]
      %v1706 = vld [vmem:[%s1306 + $0x69] sm:$0xff]
      %v1707 = vld [vmem:[%s1306 + $0x79] sm:$0xff]
      %v1708 = vld [vmem:[%s1306 + $0x81] sm:$0xff]
      %v1709 = vld [vmem:[%s1306 + $0x91] sm:$0xff]
      %v1710 = vld [vmem:[%s1306 + $0x99] sm:$0xff]
      %v1711 = vld [vmem:[%s1306 + $0xa9] sm:$0xff]
      %v1712 = vld [vmem:[%s1306 + $0xb1] sm:$0xff]
      %v1713 = vld [vmem:[%s1306 + $0xc1] sm:$0xff]
      %v1714 = vld [vmem:[%s1306 + $0xc9] sm:$0xff]
      %v1715 = vld [vmem:[%s1306 + $0xd9] sm:$0xff]
      %v1716 = vld [vmem:[%s1306 + $0xe1] sm:$0xff]
      %v1717 = vld [vmem:[%s1306 + $0xf1] sm:$0xff]
      %v1718 = vld [vmem:[%s1306 + $0xf9] sm:$0xff]
      %v1719 = vld [vmem:[%s1306 + $0x109] sm:$0xff]
      %v1720 = vld [vmem:[%s1306 + $0x111] sm:$0xff]
      %v1721 = vld [vmem:[%s1306 + $0x121] sm:$0xff]
      %v1722 = vld [vmem:[%s1306 + $0x129] sm:$0xff]
      %v1723 = vld [vmem:[%s1306 + $0x139] sm:$0xff]
      %v1724 = vld [vmem:[%s1306 + $0x141] sm:$0xff]
      %v1725 = vld [vmem:[%s1306 + $0x151] sm:$0xff]
      %v1726 = vld [vmem:[%s1306 + $0x159] sm:$0xff]
      %v1727 = vld [vmem:[%s1306 + $0x169] sm:$0xff]
      %v1728 = vld [vmem:[%s1306 + $0x171] sm:$0xff]
      %s1729 = scalar_lea.vmem %s1, 16
      %v1730 = vld [vmem:[%s1729] sm:$0xf]
      %v1732 = vsel %vm264, %v1697, 0
      %v1735 = vsel %vm264, %v1698, 0
      %v1738 = vsel %vm264, %v1699, 0
      %v1741 = vsel %vm264, %v1700, 0
      %v1744 = vsel %vm264, %v1701, 0
      %v1747 = vsel %vm264, %v1702, 0
      %v1750 = vsel %vm264, %v1703, 0
      %v1753 = vsel %vm264, %v1704, 0
      %v1756 = vsel %vm264, %v1705, 0
      %v1759 = vsel %vm264, %v1706, 0
      %v1762 = vsel %vm264, %v1707, 0
      %v1765 = vsel %vm264, %v1708, 0
      %v1768 = vsel %vm264, %v1709, 0
      %v1771 = vsel %vm264, %v1710, 0
      %v1774 = vsel %vm264, %v1711, 0
      %v1777 = vsel %vm264, %v1712, 0
      %v1780 = vsel %vm264, %v1713, 0
      %v1783 = vsel %vm264, %v1714, 0
      %v1786 = vsel %vm264, %v1715, 0
      %v1789 = vsel %vm264, %v1716, 0
      %v1792 = vsel %vm264, %v1717, 0
      %v1795 = vsel %vm264, %v1718, 0
      %v1798 = vsel %vm264, %v1719, 0
      %v1801 = vsel %vm264, %v1720, 0
      %v1804 = vsel %vm264, %v1721, 0
      %v1807 = vsel %vm264, %v1722, 0
      %v1810 = vsel %vm264, %v1723, 0
      %v1813 = vsel %vm264, %v1724, 0
      %v1816 = vsel %vm264, %v1725, 0
      %v1819 = vsel %vm264, %v1726, 0
      %v1822 = vsel %vm264, %v1727, 0
      %v1825 = vsel %vm264, %v1728, 0
      %v1828 = vsel %vm361, %v1730, 0
      %1830 = vmatprep.subr.mxu0 0.0
      %1831 = vmatpush1.msra.mxu0 %v1828
      %1832 = vmatprep.subr.mxu0 0.0
      %1833 = vmatpush1.msra.mxu0 0.0
      %1834 = vmatprep.subr.mxu0 0.0
      %1835 = vmatpush1.msra.mxu0 0.0
      %1836 = vmatprep.subr.mxu0 0.0
      %1837 = vmatpush1.msra.mxu0 0.0
      %1838 = vmatprep.subr.mxu0 0.0
      %1839 = vmatpush1.msra.mxu0 0.0
      %1840 = vmatprep.subr.mxu0 0.0
      %1841 = vmatpush1.msra.mxu0 0.0
      %1842 = vmatprep.subr.mxu0 0.0
      %1843 = vmatpush1.msra.mxu0 0.0
      %1844 = vmatprep.subr.mxu0 0.0
      %1845 = vmatpush1.msra.mxu0 0.0
      %1846 = vmatprep.subr.mxu0 0.0
      %1847 = vmatpush1.msra.mxu0 0.0
      %1848 = vmatprep.subr.mxu0 0.0
      %1849 = vmatpush1.msra.mxu0 0.0
      %1850 = vmatprep.subr.mxu0 0.0
      %1851 = vmatpush1.msra.mxu0 0.0
      %1852 = vmatprep.subr.mxu0 0.0
      %1853 = vmatpush1.msra.mxu0 0.0
      %1854 = vmatprep.subr.mxu0 0.0
      %1855 = vmatpush1.msra.mxu0 0.0
      %1856 = vmatprep.subr.mxu0 0.0
      %1857 = vmatpush1.msra.mxu0 0.0
      %1858 = vmatprep.subr.mxu0 0.0
      %1859 = vmatpush1.msra.mxu0 0.0
      %1860 = vmatprep.subr.mxu0 0.0
      %1861 = vmatpush1.msra.mxu0 0.0
      %1862 = vmatprep.subr.mxu0 0.0
      %1863 = vmatpush1.msra.mxu0 0.0
      %1864 = vmatprep.subr.mxu0 0.0
      %1865 = vmatpush1.msra.mxu0 0.0
      %1866 = vmatprep.subr.mxu0 0.0
      %1867 = vmatpush1.msra.mxu0 0.0
      %1868 = vmatprep.subr.mxu0 0.0
      %1869 = vmatpush1.msra.mxu0 0.0
      %1870 = vmatprep.subr.mxu0 0.0
      %1871 = vmatpush1.msra.mxu0 0.0
      %1872 = vmatprep.subr.mxu0 0.0
      %1873 = vmatpush1.msra.mxu0 0.0
      %1874 = vmatprep.subr.mxu0 0.0
      %1875 = vmatpush1.msra.mxu0 0.0
      %1876 = vmatprep.subr.mxu0 0.0
      %1877 = vmatpush1.msra.mxu0 0.0
      %1878 = vmatprep.subr.mxu0 0.0
      %1879 = vmatpush1.msra.mxu0 0.0
      %1880 = vmatprep.subr.mxu0 0.0
      %1881 = vmatpush1.msra.mxu0 0.0
      %1882 = vmatprep.subr.mxu0 0.0
      %1883 = vmatpush1.msra.mxu0 0.0
      %1884 = vmatprep.subr.mxu0 0.0
      %1885 = vmatpush1.msra.mxu0 0.0
      %1886 = vmatprep.subr.mxu0 0.0
      %1887 = vmatpush1.msra.mxu0 0.0
      %1888 = vmatprep.subr.mxu0 0.0
      %1889 = vmatpush1.msra.mxu0 0.0
      %1890 = vmatprep.subr.mxu0 0.0
      %1891 = vmatpush1.msra.mxu0 0.0
      %1892 = vmatprep.subr.mxu0 0.0
      %1893 = vmatpush1.msra.mxu0 0.0
      %1894 = vmatprep.mubr.f32.mxu0 0.0
      %1895 = vmatmul.mubr.f32.gmra.mrb[0].mxu0 %v1732
      %v1896 = vpop.f32.mrb[0].mxu0
      %v1897 = vadd.f32 0.0, %v1896
      %v1898 = vpop.f32.mrb[0].mxu0
      %1899 = vmatprep.mubr.f32.mxu0 0.0
      %1900 = vmatmul.mubr.f32.gmra.mrb[0].mxu0 %v1735
      %v1901 = vpop.f32.mrb[0].mxu0
      %v1902 = vadd.f32 0.0, %v1901
      %v1903 = vpop.f32.mrb[0].mxu0
      %1904 = vmatprep.mubr.f32.mxu0 0.0
      %1905 = vmatmul.mubr.f32.gmra.mrb[0].mxu0 %v1738
      %v1906 = vpop.f32.mrb[0].mxu0
      %v1907 = vadd.f32 0.0, %v1906
      %v1908 = vpop.f32.mrb[0].mxu0
      %1909 = vmatprep.mubr.f32.mxu0 0.0
      %1910 = vmatmul.mubr.f32.gmra.mrb[0].mxu0 %v1741
      %v1911 = vpop.f32.mrb[0].mxu0
      %v1912 = vadd.f32 0.0, %v1911
      %v1913 = vpop.f32.mrb[0].mxu0
      %1914 = vmatprep.mubr.f32.mxu0 0.0
      %1915 = vmatmul.mubr.f32.gmra.mrb[0].mxu0 %v1744
      %v1916 = vpop.f32.mrb[0].mxu0
      %v1917 = vadd.f32 0.0, %v1916
      %v1918 = vpop.f32.mrb[0].mxu0
      %1919 = vmatprep.mubr.f32.mxu0 0.0
      %1920 = vmatmul.mubr.f32.gmra.mrb[0].mxu0 %v1747
      %v1921 = vpop.f32.mrb[0].mxu0
      %v1922 = vadd.f32 0.0, %v1921
      %v1923 = vpop.f32.mrb[0].mxu0
      %1924 = vmatprep.mubr.f32.mxu0 0.0
      %1925 = vmatmul.mubr.f32.gmra.mrb[0].mxu0 %v1750
      %v1926 = vpop.f32.mrb[0].mxu0
      %v1927 = vadd.f32 0.0, %v1926
      %v1928 = vpop.f32.mrb[0].mxu0
      %1929 = vmatprep.mubr.f32.mxu0 0.0
      %1930 = vmatmul.mubr.f32.gmra.mrb[0].mxu0 %v1753
      %v1931 = vpop.f32.mrb[0].mxu0
      %v1932 = vadd.f32 0.0, %v1931
      %v1933 = vpop.f32.mrb[0].mxu0
      %1934 = vmatprep.mubr.f32.mxu0 0.0
      %1935 = vmatmul.mubr.f32.gmra.mrb[0].mxu0 %v1756
      %v1936 = vpop.f32.mrb[0].mxu0
      %v1937 = vadd.f32 0.0, %v1936
      %v1938 = vpop.f32.mrb[0].mxu0
      %1939 = vmatprep.mubr.f32.mxu0 0.0
      %1940 = vmatmul.mubr.f32.gmra.mrb[0].mxu0 %v1759
      %v1941 = vpop.f32.mrb[0].mxu0
      %v1942 = vadd.f32 0.0, %v1941
      %v1943 = vpop.f32.mrb[0].mxu0
      %1944 = vmatprep.mubr.f32.mxu0 0.0
      %1945 = vmatmul.mubr.f32.gmra.mrb[0].mxu0 %v1762
      %v1946 = vpop.f32.mrb[0].mxu0
      %v1947 = vadd.f32 0.0, %v1946
      %v1948 = vpop.f32.mrb[0].mxu0
      %1949 = vmatprep.mubr.f32.mxu0 0.0
      %1950 = vmatmul.mubr.f32.gmra.mrb[0].mxu0 %v1765
      %v1951 = vpop.f32.mrb[0].mxu0
      %v1952 = vadd.f32 0.0, %v1951
      %v1953 = vpop.f32.mrb[0].mxu0
      %1954 = vmatprep.mubr.f32.mxu0 0.0
      %1955 = vmatmul.mubr.f32.gmra.mrb[0].mxu0 %v1768
      %v1956 = vpop.f32.mrb[0].mxu0
      %v1957 = vadd.f32 0.0, %v1956
      %v1958 = vpop.f32.mrb[0].mxu0
      %1959 = vmatprep.mubr.f32.mxu0 0.0
      %1960 = vmatmul.mubr.f32.gmra.mrb[0].mxu0 %v1771
      %v1961 = vpop.f32.mrb[0].mxu0
      %v1962 = vadd.f32 0.0, %v1961
      %v1963 = vpop.f32.mrb[0].mxu0
      %1964 = vmatprep.mubr.f32.mxu0 0.0
      %1965 = vmatmul.mubr.f32.gmra.mrb[0].mxu0 %v1774
      %v1966 = vpop.f32.mrb[0].mxu0
      %v1967 = vadd.f32 0.0, %v1966
      %v1968 = vpop.f32.mrb[0].mxu0
      %1969 = vmatprep.mubr.f32.mxu0 0.0
      %1970 = vmatmul.mubr.f32.gmra.mrb[0].mxu0 %v1777
      %v1971 = vpop.f32.mrb[0].mxu0
      %v1972 = vadd.f32 0.0, %v1971
      %v1973 = vpop.f32.mrb[0].mxu0
      %1974 = vmatprep.mubr.f32.mxu0 0.0
      %1975 = vmatmul.mubr.f32.gmra.mrb[0].mxu0 %v1780
      %v1976 = vpop.f32.mrb[0].mxu0
      %v1977 = vadd.f32 0.0, %v1976
      %v1978 = vpop.f32.mrb[0].mxu0
      %1979 = vmatprep.mubr.f32.mxu0 0.0
      %1980 = vmatmul.mubr.f32.gmra.mrb[0].mxu0 %v1783
      %v1981 = vpop.f32.mrb[0].mxu0
      %v1982 = vadd.f32 0.0, %v1981
      %v1983 = vpop.f32.mrb[0].mxu0
      %1984 = vmatprep.mubr.f32.mxu0 0.0
      %1985 = vmatmul.mubr.f32.gmra.mrb[0].mxu0 %v1786
      %v1986 = vpop.f32.mrb[0].mxu0
      %v1987 = vadd.f32 0.0, %v1986
      %v1988 = vpop.f32.mrb[0].mxu0
      %1989 = vmatprep.mubr.f32.mxu0 0.0
      %1990 = vmatmul.mubr.f32.gmra.mrb[0].mxu0 %v1789
      %v1991 = vpop.f32.mrb[0].mxu0
      %v1992 = vadd.f32 0.0, %v1991
      %v1993 = vpop.f32.mrb[0].mxu0
      %1994 = vmatprep.mubr.f32.mxu0 0.0
      %1995 = vmatmul.mubr.f32.gmra.mrb[0].mxu0 %v1792
      %v1996 = vpop.f32.mrb[0].mxu0
      %v1997 = vadd.f32 0.0, %v1996
      %v1998 = vpop.f32.mrb[0].mxu0
      %1999 = vmatprep.mubr.f32.mxu0 0.0
      %2000 = vmatmul.mubr.f32.gmra.mrb[0].mxu0 %v1795
      %v2001 = vpop.f32.mrb[0].mxu0
      %v2002 = vadd.f32 0.0, %v2001
      %v2003 = vpop.f32.mrb[0].mxu0
      %2004 = vmatprep.mubr.f32.mxu0 0.0
      %2005 = vmatmul.mubr.f32.gmra.mrb[0].mxu0 %v1798
      %v2006 = vpop.f32.mrb[0].mxu0
      %v2007 = vadd.f32 0.0, %v2006
      %v2008 = vpop.f32.mrb[0].mxu0
      %2009 = vmatprep.mubr.f32.mxu0 0.0
      %2010 = vmatmul.mubr.f32.gmra.mrb[0].mxu0 %v1801
      %v2011 = vpop.f32.mrb[0].mxu0
      %v2012 = vadd.f32 0.0, %v2011
      %v2013 = vpop.f32.mrb[0].mxu0
      %2014 = vmatprep.mubr.f32.mxu0 0.0
      %2015 = vmatmul.mubr.f32.gmra.mrb[0].mxu0 %v1804
      %v2016 = vpop.f32.mrb[0].mxu0
      %v2017 = vadd.f32 0.0, %v2016
      %v2018 = vpop.f32.mrb[0].mxu0
      %2019 = vmatprep.mubr.f32.mxu0 0.0
      %2020 = vmatmul.mubr.f32.gmra.mrb[0].mxu0 %v1807
      %v2021 = vpop.f32.mrb[0].mxu0
      %v2022 = vadd.f32 0.0, %v2021
      %v2023 = vpop.f32.mrb[0].mxu0
      %2024 = vmatprep.mubr.f32.mxu0 0.0
      %2025 = vmatmul.mubr.f32.gmra.mrb[0].mxu0 %v1810
      %v2026 = vpop.f32.mrb[0].mxu0
      %v2027 = vadd.f32 0.0, %v2026
      %v2028 = vpop.f32.mrb[0].mxu0
      %2029 = vmatprep.mubr.f32.mxu0 0.0
      %2030 = vmatmul.mubr.f32.gmra.mrb[0].mxu0 %v1813
      %v2031 = vpop.f32.mrb[0].mxu0
      %v2032 = vadd.f32 0.0, %v2031
      %v2033 = vpop.f32.mrb[0].mxu0
      %2034 = vmatprep.mubr.f32.mxu0 0.0
      %2035 = vmatmul.mubr.f32.gmra.mrb[0].mxu0 %v1816
      %v2036 = vpop.f32.mrb[0].mxu0
      %v2037 = vadd.f32 0.0, %v2036
      %v2038 = vpop.f32.mrb[0].mxu0
      %2039 = vmatprep.mubr.f32.mxu0 0.0
      %2040 = vmatmul.mubr.f32.gmra.mrb[0].mxu0 %v1819
      %v2041 = vpop.f32.mrb[0].mxu0
      %v2042 = vadd.f32 0.0, %v2041
      %v2043 = vpop.f32.mrb[0].mxu0
      %2044 = vmatprep.mubr.f32.mxu0 0.0
      %2045 = vmatmul.mubr.f32.gmra.mrb[0].mxu0 %v1822
      %v2046 = vpop.f32.mrb[0].mxu0
      %v2047 = vadd.f32 0.0, %v2046
      %v2048 = vpop.f32.mrb[0].mxu0
      %2049 = vmatprep.mubr.f32.mxu0 0.0
      %2050 = vmatmul.mubr.f32.gmra.mrb[0].mxu0 %v1825
      %v2051 = vpop.f32.mrb[0].mxu0
      %v2052 = vadd.f32 0.0, %v2051
      %v2053 = vpop.f32.mrb[0].mxu0
      %2054 = vdwg.mxu0
      %v2055 = vadd.f32 %v1665, %v1897
      %v2056 = vadd.f32 %v1666, %v1902
      %v2057 = vadd.f32 %v1667, %v1907
      %v2058 = vadd.f32 %v1668, %v1912
      %v2059 = vadd.f32 %v1669, %v1917
      %v2060 = vadd.f32 %v1670, %v1922
      %v2061 = vadd.f32 %v1671, %v1927
      %v2062 = vadd.f32 %v1672, %v1932
      %v2063 = vadd.f32 %v1673, %v1937
      %v2064 = vadd.f32 %v1674, %v1942
      %v2065 = vadd.f32 %v1675, %v1947
      %v2066 = vadd.f32 %v1676, %v1952
      %v2067 = vadd.f32 %v1677, %v1957
      %v2068 = vadd.f32 %v1678, %v1962
      %v2069 = vadd.f32 %v1679, %v1967
      %v2070 = vadd.f32 %v1680, %v1972
      %v2071 = vadd.f32 %v1681, %v1977
      %v2072 = vadd.f32 %v1682, %v1982
      %v2073 = vadd.f32 %v1683, %v1987
      %v2074 = vadd.f32 %v1684, %v1992
      %v2075 = vadd.f32 %v1685, %v1997
      %v2076 = vadd.f32 %v1686, %v2002
      %v2077 = vadd.f32 %v1687, %v2007
      %v2078 = vadd.f32 %v1688, %v2012
      %v2079 = vadd.f32 %v1689, %v2017
      %v2080 = vadd.f32 %v1690, %v2022
      %v2081 = vadd.f32 %v1691, %v2027
      %v2082 = vadd.f32 %v1692, %v2032
      %v2083 = vadd.f32 %v1693, %v2037
      %v2084 = vadd.f32 %v1694, %v2042
      %v2085 = vadd.f32 %v1695, %v2047
      %v2086 = vadd.f32 %v1696, %v2052
      %v2087 = vld [vmem:[%s1306 + $0x2] sm:$0xff]
      %v2088 = vld [vmem:[%s1306 + $0xa] sm:$0xff]
      %v2089 = vld [vmem:[%s1306 + $0x1a] sm:$0xff]
      %v2090 = vld [vmem:[%s1306 + $0x22] sm:$0xff]
      %v2091 = vld [vmem:[%s1306 + $0x32] sm:$0xff]
      %v2092 = vld [vmem:[%s1306 + $0x3a] sm:$0xff]
      %v2093 = vld [vmem:[%s1306 + $0x4a] sm:$0xff]
      %v2094 = vld [vmem:[%s1306 + $0x52] sm:$0xff]
      %v2095 = vld [vmem:[%s1306 + $0x62] sm:$0xff]
      %v2096 = vld [vmem:[%s1306 + $0x6a] sm:$0xff]
      %v2097 = vld [vmem:[%s1306 + $0x7a] sm:$0xff]
      %v2098 = vld [vmem:[%s1306 + $0x82] sm:$0xff]
      %v2099 = vld [vmem:[%s1306 + $0x92] sm:$0xff]
      %v2100 = vld [vmem:[%s1306 + $0x9a] sm:$0xff]
      %v2101 = vld [vmem:[%s1306 + $0xaa] sm:$0xff]
      %v2102 = vld [vmem:[%s1306 + $0xb2] sm:$0xff]
      %v2103 = vld [vmem:[%s1306 + $0xc2] sm:$0xff]
      %v2104 = vld [vmem:[%s1306 + $0xca] sm:$0xff]
      %v2105 = vld [vmem:[%s1306 + $0xda] sm:$0xff]
      %v2106 = vld [vmem:[%s1306 + $0xe2] sm:$0xff]
      %v2107 = vld [vmem:[%s1306 + $0xf2] sm:$0xff]
      %v2108 = vld [vmem:[%s1306 + $0xfa] sm:$0xff]
      %v2109 = vld [vmem:[%s1306 + $0x10a] sm:$0xff]
      %v2110 = vld [vmem:[%s1306 + $0x112] sm:$0xff]
      %v2111 = vld [vmem:[%s1306 + $0x122] sm:$0xff]
      %v2112 = vld [vmem:[%s1306 + $0x12a] sm:$0xff]
      %v2113 = vld [vmem:[%s1306 + $0x13a] sm:$0xff]
      %v2114 = vld [vmem:[%s1306 + $0x142] sm:$0xff]
      %v2115 = vld [vmem:[%s1306 + $0x152] sm:$0xff]
      %v2116 = vld [vmem:[%s1306 + $0x15a] sm:$0xff]
      %v2117 = vld [vmem:[%s1306 + $0x16a] sm:$0xff]
      %v2118 = vld [vmem:[%s1306 + $0x172] sm:$0xff]
      %s2119 = scalar_lea.vmem %s1, 20
      %v2120 = vld [vmem:[%s2119] sm:$0xf]
      %v2122 = vsel %vm264, %v2087, 0
      %v2125 = vsel %vm264, %v2088, 0
      %v2128 = vsel %vm264, %v2089, 0
      %v2131 = vsel %vm264, %v2090, 0
      %v2134 = vsel %vm264, %v2091, 0
      %v2137 = vsel %vm264, %v2092, 0
      %v2140 = vsel %vm264, %v2093, 0
      %v2143 = vsel %vm264, %v2094, 0
      %v2146 = vsel %vm264, %v2095, 0
      %v2149 = vsel %vm264, %v2096, 0
      %v2152 = vsel %vm264, %v2097, 0
      %v2155 = vsel %vm264, %v2098, 0
      %v2158 = vsel %vm264, %v2099, 0
      %v2161 = vsel %vm264, %v2100, 0
      %v2164 = vsel %vm264, %v2101, 0
      %v2167 = vsel %vm264, %v2102, 0
      %v2170 = vsel %vm264, %v2103, 0
      %v2173 = vsel %vm264, %v2104, 0
      %v2176 = vsel %vm264, %v2105, 0
      %v2179 = vsel %vm264, %v2106, 0
      %v2182 = vsel %vm264, %v2107, 0
      %v2185 = vsel %vm264, %v2108, 0
      %v2188 = vsel %vm264, %v2109, 0
      %v2191 = vsel %vm264, %v2110, 0
      %v2194 = vsel %vm264, %v2111, 0
      %v2197 = vsel %vm264, %v2112, 0
      %v2200 = vsel %vm264, %v2113, 0
      %v2203 = vsel %vm264, %v2114, 0
      %v2206 = vsel %vm264, %v2115, 0
      %v2209 = vsel %vm264, %v2116, 0
      %v2212 = vsel %vm264, %v2117, 0
      %v2215 = vsel %vm264, %v2118, 0
      %v2218 = vsel %vm361, %v2120, 0
      %2220 = vmatprep.subr.mxu0 0.0
      %2221 = vmatpush1.msra.mxu0 %v2218
      %2222 = vmatprep.subr.mxu0 0.0
      %2223 = vmatpush1.msra.mxu0 0.0
      %2224 = vmatprep.subr.mxu0 0.0
      %2225 = vmatpush1.msra.mxu0 0.0
      %2226 = vmatprep.subr.mxu0 0.0
      %2227 = vmatpush1.msra.mxu0 0.0
      %2228 = vmatprep.subr.mxu0 0.0
      %2229 = vmatpush1.msra.mxu0 0.0
      %2230 = vmatprep.subr.mxu0 0.0
      %2231 = vmatpush1.msra.mxu0 0.0
      %2232 = vmatprep.subr.mxu0 0.0
      %2233 = vmatpush1.msra.mxu0 0.0
      %2234 = vmatprep.subr.mxu0 0.0
      %2235 = vmatpush1.msra.mxu0 0.0
      %2236 = vmatprep.subr.mxu0 0.0
      %2237 = vmatpush1.msra.mxu0 0.0
      %2238 = vmatprep.subr.mxu0 0.0
      %2239 = vmatpush1.msra.mxu0 0.0
      %2240 = vmatprep.subr.mxu0 0.0
      %2241 = vmatpush1.msra.mxu0 0.0
      %2242 = vmatprep.subr.mxu0 0.0
      %2243 = vmatpush1.msra.mxu0 0.0
      %2244 = vmatprep.subr.mxu0 0.0
      %2245 = vmatpush1.msra.mxu0 0.0
      %2246 = vmatprep.subr.mxu0 0.0
      %2247 = vmatpush1.msra.mxu0 0.0
      %2248 = vmatprep.subr.mxu0 0.0
      %2249 = vmatpush1.msra.mxu0 0.0
      %2250 = vmatprep.subr.mxu0 0.0
      %2251 = vmatpush1.msra.mxu0 0.0
      %2252 = vmatprep.subr.mxu0 0.0
      %2253 = vmatpush1.msra.mxu0 0.0
      %2254 = vmatprep.subr.mxu0 0.0
      %2255 = vmatpush1.msra.mxu0 0.0
      %2256 = vmatprep.subr.mxu0 0.0
      %2257 = vmatpush1.msra.mxu0 0.0
      %2258 = vmatprep.subr.mxu0 0.0
      %2259 = vmatpush1.msra.mxu0 0.0
      %2260 = vmatprep.subr.mxu0 0.0
      %2261 = vmatpush1.msra.mxu0 0.0
      %2262 = vmatprep.subr.mxu0 0.0
      %2263 = vmatpush1.msra.mxu0 0.0
      %2264 = vmatprep.subr.mxu0 0.0
      %2265 = vmatpush1.msra.mxu0 0.0
      %2266 = vmatprep.subr.mxu0 0.0
      %2267 = vmatpush1.msra.mxu0 0.0
      %2268 = vmatprep.subr.mxu0 0.0
      %2269 = vmatpush1.msra.mxu0 0.0
      %2270 = vmatprep.subr.mxu0 0.0
      %2271 = vmatpush1.msra.mxu0 0.0
      %2272 = vmatprep.subr.mxu0 0.0
      %2273 = vmatpush1.msra.mxu0 0.0
      %2274 = vmatprep.subr.mxu0 0.0
      %2275 = vmatpush1.msra.mxu0 0.0
      %2276 = vmatprep.subr.mxu0 0.0
      %2277 = vmatpush1.msra.mxu0 0.0
      %2278 = vmatprep.subr.mxu0 0.0
      %2279 = vmatpush1.msra.mxu0 0.0
      %2280 = vmatprep.subr.mxu0 0.0
      %2281 = vmatpush1.msra.mxu0 0.0
      %2282 = vmatprep.subr.mxu0 0.0
      %2283 = vmatpush1.msra.mxu0 0.0
      %2284 = vmatprep.mubr.f32.mxu0 0.0
      %2285 = vmatmul.mubr.f32.gmra.mrb[0].mxu0 %v2122
      %v2286 = vpop.f32.mrb[0].mxu0
      %v2287 = vadd.f32 0.0, %v2286
      %v2288 = vpop.f32.mrb[0].mxu0
      %2289 = vmatprep.mubr.f32.mxu0 0.0
      %2290 = vmatmul.mubr.f32.gmra.mrb[0].mxu0 %v2125
      %v2291 = vpop.f32.mrb[0].mxu0
      %v2292 = vadd.f32 0.0, %v2291
      %v2293 = vpop.f32.mrb[0].mxu0
      %2294 = vmatprep.mubr.f32.mxu0 0.0
      %2295 = vmatmul.mubr.f32.gmra.mrb[0].mxu0 %v2128
      %v2296 = vpop.f32.mrb[0].mxu0
      %v2297 = vadd.f32 0.0, %v2296
      %v2298 = vpop.f32.mrb[0].mxu0
      %2299 = vmatprep.mubr.f32.mxu0 0.0
      %2300 = vmatmul.mubr.f32.gmra.mrb[0].mxu0 %v2131
      %v2301 = vpop.f32.mrb[0].mxu0
      %v2302 = vadd.f32 0.0, %v2301
      %v2303 = vpop.f32.mrb[0].mxu0
      %2304 = vmatprep.mubr.f32.mxu0 0.0
      %2305 = vmatmul.mubr.f32.gmra.mrb[0].mxu0 %v2134
      %v2306 = vpop.f32.mrb[0].mxu0
      %v2307 = vadd.f32 0.0, %v2306
      %v2308 = vpop.f32.mrb[0].mxu0
      %2309 = vmatprep.mubr.f32.mxu0 0.0
      %2310 = vmatmul.mubr.f32.gmra.mrb[0].mxu0 %v2137
      %v2311 = vpop.f32.mrb[0].mxu0
      %v2312 = vadd.f32 0.0, %v2311
      %v2313 = vpop.f32.mrb[0].mxu0
      %2314 = vmatprep.mubr.f32.mxu0 0.0
      %2315 = vmatmul.mubr.f32.gmra.mrb[0].mxu0 %v2140
      %v2316 = vpop.f32.mrb[0].mxu0
      %v2317 = vadd.f32 0.0, %v2316
      %v2318 = vpop.f32.mrb[0].mxu0
      %2319 = vmatprep.mubr.f32.mxu0 0.0
      %2320 = vmatmul.mubr.f32.gmra.mrb[0].mxu0 %v2143
      %v2321 = vpop.f32.mrb[0].mxu0
      %v2322 = vadd.f32 0.0, %v2321
      %v2323 = vpop.f32.mrb[0].mxu0
      %2324 = vmatprep.mubr.f32.mxu0 0.0
      %2325 = vmatmul.mubr.f32.gmra.mrb[0].mxu0 %v2146
      %v2326 = vpop.f32.mrb[0].mxu0
      %v2327 = vadd.f32 0.0, %v2326
      %v2328 = vpop.f32.mrb[0].mxu0
      %2329 = vmatprep.mubr.f32.mxu0 0.0
      %2330 = vmatmul.mubr.f32.gmra.mrb[0].mxu0 %v2149
      %v2331 = vpop.f32.mrb[0].mxu0
      %v2332 = vadd.f32 0.0, %v2331
      %v2333 = vpop.f32.mrb[0].mxu0
      %2334 = vmatprep.mubr.f32.mxu0 0.0
      %2335 = vmatmul.mubr.f32.gmra.mrb[0].mxu0 %v2152
      %v2336 = vpop.f32.mrb[0].mxu0
      %v2337 = vadd.f32 0.0, %v2336
      %v2338 = vpop.f32.mrb[0].mxu0
      %2339 = vmatprep.mubr.f32.mxu0 0.0
      %2340 = vmatmul.mubr.f32.gmra.mrb[0].mxu0 %v2155
      %v2341 = vpop.f32.mrb[0].mxu0
      %v2342 = vadd.f32 0.0, %v2341
      %v2343 = vpop.f32.mrb[0].mxu0
      %2344 = vmatprep.mubr.f32.mxu0 0.0
      %2345 = vmatmul.mubr.f32.gmra.mrb[0].mxu0 %v2158
      %v2346 = vpop.f32.mrb[0].mxu0
      %v2347 = vadd.f32 0.0, %v2346
      %v2348 = vpop.f32.mrb[0].mxu0
      %2349 = vmatprep.mubr.f32.mxu0 0.0
      %2350 = vmatmul.mubr.f32.gmra.mrb[0].mxu0 %v2161
      %v2351 = vpop.f32.mrb[0].mxu0
      %v2352 = vadd.f32 0.0, %v2351
      %v2353 = vpop.f32.mrb[0].mxu0
      %2354 = vmatprep.mubr.f32.mxu0 0.0
      %2355 = vmatmul.mubr.f32.gmra.mrb[0].mxu0 %v2164
      %v2356 = vpop.f32.mrb[0].mxu0
      %v2357 = vadd.f32 0.0, %v2356
      %v2358 = vpop.f32.mrb[0].mxu0
      %2359 = vmatprep.mubr.f32.mxu0 0.0
      %2360 = vmatmul.mubr.f32.gmra.mrb[0].mxu0 %v2167
      %v2361 = vpop.f32.mrb[0].mxu0
      %v2362 = vadd.f32 0.0, %v2361
      %v2363 = vpop.f32.mrb[0].mxu0
      %2364 = vmatprep.mubr.f32.mxu0 0.0
      %2365 = vmatmul.mubr.f32.gmra.mrb[0].mxu0 %v2170
      %v2366 = vpop.f32.mrb[0].mxu0
      %v2367 = vadd.f32 0.0, %v2366
      %v2368 = vpop.f32.mrb[0].mxu0
      %2369 = vmatprep.mubr.f32.mxu0 0.0
      %2370 = vmatmul.mubr.f32.gmra.mrb[0].mxu0 %v2173
      %v2371 = vpop.f32.mrb[0].mxu0
      %v2372 = vadd.f32 0.0, %v2371
      %v2373 = vpop.f32.mrb[0].mxu0
      %2374 = vmatprep.mubr.f32.mxu0 0.0
      %2375 = vmatmul.mubr.f32.gmra.mrb[0].mxu0 %v2176
      %v2376 = vpop.f32.mrb[0].mxu0
      %v2377 = vadd.f32 0.0, %v2376
      %v2378 = vpop.f32.mrb[0].mxu0
      %2379 = vmatprep.mubr.f32.mxu0 0.0
      %2380 = vmatmul.mubr.f32.gmra.mrb[0].mxu0 %v2179
      %v2381 = vpop.f32.mrb[0].mxu0
      %v2382 = vadd.f32 0.0, %v2381
      %v2383 = vpop.f32.mrb[0].mxu0
      %2384 = vmatprep.mubr.f32.mxu0 0.0
      %2385 = vmatmul.mubr.f32.gmra.mrb[0].mxu0 %v2182
      %v2386 = vpop.f32.mrb[0].mxu0
      %v2387 = vadd.f32 0.0, %v2386
      %v2388 = vpop.f32.mrb[0].mxu0
      %2389 = vmatprep.mubr.f32.mxu0 0.0
      %2390 = vmatmul.mubr.f32.gmra.mrb[0].mxu0 %v2185
      %v2391 = vpop.f32.mrb[0].mxu0
      %v2392 = vadd.f32 0.0, %v2391
      %v2393 = vpop.f32.mrb[0].mxu0
      %2394 = vmatprep.mubr.f32.mxu0 0.0
      %2395 = vmatmul.mubr.f32.gmra.mrb[0].mxu0 %v2188
      %v2396 = vpop.f32.mrb[0].mxu0
      %v2397 = vadd.f32 0.0, %v2396
      %v2398 = vpop.f32.mrb[0].mxu0
      %2399 = vmatprep.mubr.f32.mxu0 0.0
      %2400 = vmatmul.mubr.f32.gmra.mrb[0].mxu0 %v2191
      %v2401 = vpop.f32.mrb[0].mxu0
      %v2402 = vadd.f32 0.0, %v2401
      %v2403 = vpop.f32.mrb[0].mxu0
      %2404 = vmatprep.mubr.f32.mxu0 0.0
      %2405 = vmatmul.mubr.f32.gmra.mrb[0].mxu0 %v2194
      %v2406 = vpop.f32.mrb[0].mxu0
      %v2407 = vadd.f32 0.0, %v2406
      %v2408 = vpop.f32.mrb[0].mxu0
      %2409 = vmatprep.mubr.f32.mxu0 0.0
      %2410 = vmatmul.mubr.f32.gmra.mrb[0].mxu0 %v2197
      %v2411 = vpop.f32.mrb[0].mxu0
      %v2412 = vadd.f32 0.0, %v2411
      %v2413 = vpop.f32.mrb[0].mxu0
      %2414 = vmatprep.mubr.f32.mxu0 0.0
      %2415 = vmatmul.mubr.f32.gmra.mrb[0].mxu0 %v2200
      %v2416 = vpop.f32.mrb[0].mxu0
      %v2417 = vadd.f32 0.0, %v2416
      %v2418 = vpop.f32.mrb[0].mxu0
      %2419 = vmatprep.mubr.f32.mxu0 0.0
      %2420 = vmatmul.mubr.f32.gmra.mrb[0].mxu0 %v2203
      %v2421 = vpop.f32.mrb[0].mxu0
      %v2422 = vadd.f32 0.0, %v2421
      %v2423 = vpop.f32.mrb[0].mxu0
      %2424 = vmatprep.mubr.f32.mxu0 0.0
      %2425 = vmatmul.mubr.f32.gmra.mrb[0].mxu0 %v2206
      %v2426 = vpop.f32.mrb[0].mxu0
      %v2427 = vadd.f32 0.0, %v2426
      %v2428 = vpop.f32.mrb[0].mxu0
      %2429 = vmatprep.mubr.f32.mxu0 0.0
      %2430 = vmatmul.mubr.f32.gmra.mrb[0].mxu0 %v2209
      %v2431 = vpop.f32.mrb[0].mxu0
      %v2432 = vadd.f32 0.0, %v2431
      %v2433 = vpop.f32.mrb[0].mxu0
      %2434 = vmatprep.mubr.f32.mxu0 0.0
      %2435 = vmatmul.mubr.f32.gmra.mrb[0].mxu0 %v2212
      %v2436 = vpop.f32.mrb[0].mxu0
      %v2437 = vadd.f32 0.0, %v2436
      %v2438 = vpop.f32.mrb[0].mxu0
      %2439 = vmatprep.mubr.f32.mxu0 0.0
      %2440 = vmatmul.mubr.f32.gmra.mrb[0].mxu0 %v2215
      %v2441 = vpop.f32.mrb[0].mxu0
      %v2442 = vadd.f32 0.0, %v2441
      %v2443 = vpop.f32.mrb[0].mxu0
      %2444 = vdwg.mxu0
      %v2445 = vadd.f32 %v2055, %v2287
      %v2446 = vadd.f32 %v2056, %v2292
      %v2447 = vadd.f32 %v2057, %v2297
      %v2448 = vadd.f32 %v2058, %v2302
      %v2449 = vadd.f32 %v2059, %v2307
      %v2450 = vadd.f32 %v2060, %v2312
      %v2451 = vadd.f32 %v2061, %v2317
      %v2452 = vadd.f32 %v2062, %v2322
      %v2453 = vadd.f32 %v2063, %v2327
      %v2454 = vadd.f32 %v2064, %v2332
      %v2455 = vadd.f32 %v2065, %v2337
      %v2456 = vadd.f32 %v2066, %v2342
      %v2457 = vadd.f32 %v2067, %v2347
      %v2458 = vadd.f32 %v2068, %v2352
      %v2459 = vadd.f32 %v2069, %v2357
      %v2460 = vadd.f32 %v2070, %v2362
      %v2461 = vadd.f32 %v2071, %v2367
      %v2462 = vadd.f32 %v2072, %v2372
      %v2463 = vadd.f32 %v2073, %v2377
      %v2464 = vadd.f32 %v2074, %v2382
      %v2465 = vadd.f32 %v2075, %v2387
      %v2466 = vadd.f32 %v2076, %v2392
      %v2467 = vadd.f32 %v2077, %v2397
      %v2468 = vadd.f32 %v2078, %v2402
      %v2469 = vadd.f32 %v2079, %v2407
      %v2470 = vadd.f32 %v2080, %v2412
      %v2471 = vadd.f32 %v2081, %v2417
      %v2472 = vadd.f32 %v2082, %v2422
      %v2473 = vadd.f32 %v2083, %v2427
      %v2474 = vadd.f32 %v2084, %v2432
      %v2475 = vadd.f32 %v2085, %v2437
      %v2476 = vadd.f32 %v2086, %v2442
      %s2477 = sadd.s32 %s194, 2
      %s2478 = smul.u32 %s2477, 24
      %s2479 = scalar_lea.vmem %s183, %s2478
      %v2480 = vld [vmem:[%s2479] sm:$0xff]
      %v2481 = vld [vmem:[%s2479 + $0x8] sm:$0xff]
      %v2482 = vld [vmem:[%s2479 + $0x18] sm:$0xff]
      %v2483 = vld [vmem:[%s2479 + $0x20] sm:$0xff]
      %v2484 = vld [vmem:[%s2479 + $0x30] sm:$0xff]
      %v2485 = vld [vmem:[%s2479 + $0x38] sm:$0xff]
      %v2486 = vld [vmem:[%s2479 + $0x48] sm:$0xff]
      %v2487 = vld [vmem:[%s2479 + $0x50] sm:$0xff]
      %v2488 = vld [vmem:[%s2479 + $0x60] sm:$0xff]
      %v2489 = vld [vmem:[%s2479 + $0x68] sm:$0xff]
      %v2490 = vld [vmem:[%s2479 + $0x78] sm:$0xff]
      %v2491 = vld [vmem:[%s2479 + $0x80] sm:$0xff]
      %v2492 = vld [vmem:[%s2479 + $0x90] sm:$0xff]
      %v2493 = vld [vmem:[%s2479 + $0x98] sm:$0xff]
      %v2494 = vld [vmem:[%s2479 + $0xa8] sm:$0xff]
      %v2495 = vld [vmem:[%s2479 + $0xb0] sm:$0xff]
      %v2496 = vld [vmem:[%s2479 + $0xc0] sm:$0xff]
      %v2497 = vld [vmem:[%s2479 + $0xc8] sm:$0xff]
      %v2498 = vld [vmem:[%s2479 + $0xd8] sm:$0xff]
      %v2499 = vld [vmem:[%s2479 + $0xe0] sm:$0xff]
      %v2500 = vld [vmem:[%s2479 + $0xf0] sm:$0xff]
      %v2501 = vld [vmem:[%s2479 + $0xf8] sm:$0xff]
      %v2502 = vld [vmem:[%s2479 + $0x108] sm:$0xff]
      %v2503 = vld [vmem:[%s2479 + $0x110] sm:$0xff]
      %v2504 = vld [vmem:[%s2479 + $0x120] sm:$0xff]
      %v2505 = vld [vmem:[%s2479 + $0x128] sm:$0xff]
      %v2506 = vld [vmem:[%s2479 + $0x138] sm:$0xff]
      %v2507 = vld [vmem:[%s2479 + $0x140] sm:$0xff]
      %v2508 = vld [vmem:[%s2479 + $0x150] sm:$0xff]
      %v2509 = vld [vmem:[%s2479 + $0x158] sm:$0xff]
      %v2510 = vld [vmem:[%s2479 + $0x168] sm:$0xff]
      %v2511 = vld [vmem:[%s2479 + $0x170] sm:$0xff]
      %s2512 = scalar_lea.vmem %s1, 24
      %v2513 = vld [vmem:[%s2512] sm:$0xf]
      %v2515 = vsel %vm264, %v2480, 0
      %v2518 = vsel %vm264, %v2481, 0
      %v2521 = vsel %vm264, %v2482, 0
      %v2524 = vsel %vm264, %v2483, 0
      %v2527 = vsel %vm264, %v2484, 0
      %v2530 = vsel %vm264, %v2485, 0
      %v2533 = vsel %vm264, %v2486, 0
      %v2536 = vsel %vm264, %v2487, 0
      %v2539 = vsel %vm264, %v2488, 0
      %v2542 = vsel %vm264, %v2489, 0
      %v2545 = vsel %vm264, %v2490, 0
      %v2548 = vsel %vm264, %v2491, 0
      %v2551 = vsel %vm264, %v2492, 0
      %v2554 = vsel %vm264, %v2493, 0
      %v2557 = vsel %vm264, %v2494, 0
      %v2560 = vsel %vm264, %v2495, 0
      %v2563 = vsel %vm264, %v2496, 0
      %v2566 = vsel %vm264, %v2497, 0
      %v2569 = vsel %vm264, %v2498, 0
      %v2572 = vsel %vm264, %v2499, 0
      %v2575 = vsel %vm264, %v2500, 0
      %v2578 = vsel %vm264, %v2501, 0
      %v2581 = vsel %vm264, %v2502, 0
      %v2584 = vsel %vm264, %v2503, 0
      %v2587 = vsel %vm264, %v2504, 0
      %v2590 = vsel %vm264, %v2505, 0
      %v2593 = vsel %vm264, %v2506, 0
      %v2596 = vsel %vm264, %v2507, 0
      %v2599 = vsel %vm264, %v2508, 0
      %v2602 = vsel %vm264, %v2509, 0
      %v2605 = vsel %vm264, %v2510, 0
      %v2608 = vsel %vm264, %v2511, 0
      %v2611 = vsel %vm361, %v2513, 0
      %2613 = vmatprep.subr.mxu0 0.0
      %2614 = vmatpush1.msra.mxu0 %v2611
      %2615 = vmatprep.subr.mxu0 0.0
      %2616 = vmatpush1.msra.mxu0 0.0
      %2617 = vmatprep.subr.mxu0 0.0
      %2618 = vmatpush1.msra.mxu0 0.0
      %2619 = vmatprep.subr.mxu0 0.0
      %2620 = vmatpush1.msra.mxu0 0.0
      %2621 = vmatprep.subr.mxu0 0.0
      %2622 = vmatpush1.msra.mxu0 0.0
      %2623 = vmatprep.subr.mxu0 0.0
      %2624 = vmatpush1.msra.mxu0 0.0
      %2625 = vmatprep.subr.mxu0 0.0
      %2626 = vmatpush1.msra.mxu0 0.0
      %2627 = vmatprep.subr.mxu0 0.0
      %2628 = vmatpush1.msra.mxu0 0.0
      %2629 = vmatprep.subr.mxu0 0.0
      %2630 = vmatpush1.msra.mxu0 0.0
      %2631 = vmatprep.subr.mxu0 0.0
      %2632 = vmatpush1.msra.mxu0 0.0
      %2633 = vmatprep.subr.mxu0 0.0
      %2634 = vmatpush1.msra.mxu0 0.0
      %2635 = vmatprep.subr.mxu0 0.0
      %2636 = vmatpush1.msra.mxu0 0.0
      %2637 = vmatprep.subr.mxu0 0.0
      %2638 = vmatpush1.msra.mxu0 0.0
      %2639 = vmatprep.subr.mxu0 0.0
      %2640 = vmatpush1.msra.mxu0 0.0
      %2641 = vmatprep.subr.mxu0 0.0
      %2642 = vmatpush1.msra.mxu0 0.0
      %2643 = vmatprep.subr.mxu0 0.0
      %2644 = vmatpush1.msra.mxu0 0.0
      %2645 = vmatprep.subr.mxu0 0.0
      %2646 = vmatpush1.msra.mxu0 0.0
      %2647 = vmatprep.subr.mxu0 0.0
      %2648 = vmatpush1.msra.mxu0 0.0
      %2649 = vmatprep.subr.mxu0 0.0
      %2650 = vmatpush1.msra.mxu0 0.0
      %2651 = vmatprep.subr.mxu0 0.0
      %2652 = vmatpush1.msra.mxu0 0.0
      %2653 = vmatprep.subr.mxu0 0.0
      %2654 = vmatpush1.msra.mxu0 0.0
      %2655 = vmatprep.subr.mxu0 0.0
      %2656 = vmatpush1.msra.mxu0 0.0
      %2657 = vmatprep.subr.mxu0 0.0
      %2658 = vmatpush1.msra.mxu0 0.0
      %2659 = vmatprep.subr.mxu0 0.0
      %2660 = vmatpush1.msra.mxu0 0.0
      %2661 = vmatprep.subr.mxu0 0.0
      %2662 = vmatpush1.msra.mxu0 0.0
      %2663 = vmatprep.subr.mxu0 0.0
      %2664 = vmatpush1.msra.mxu0 0.0
      %2665 = vmatprep.subr.mxu0 0.0
      %2666 = vmatpush1.msra.mxu0 0.0
      %2667 = vmatprep.subr.mxu0 0.0
      %2668 = vmatpush1.msra.mxu0 0.0
      %2669 = vmatprep.subr.mxu0 0.0
      %2670 = vmatpush1.msra.mxu0 0.0
      %2671 = vmatprep.subr.mxu0 0.0
      %2672 = vmatpush1.msra.mxu0 0.0
      %2673 = vmatprep.subr.mxu0 0.0
      %2674 = vmatpush1.msra.mxu0 0.0
      %2675 = vmatprep.subr.mxu0 0.0
      %2676 = vmatpush1.msra.mxu0 0.0
      %2677 = vmatprep.mubr.f32.mxu0 0.0
      %2678 = vmatmul.mubr.f32.gmra.mrb[0].mxu0 %v2515
      %v2679 = vpop.f32.mrb[0].mxu0
      %v2680 = vadd.f32 0.0, %v2679
      %v2681 = vpop.f32.mrb[0].mxu0
      %2682 = vmatprep.mubr.f32.mxu0 0.0
      %2683 = vmatmul.mubr.f32.gmra.mrb[0].mxu0 %v2518
      %v2684 = vpop.f32.mrb[0].mxu0
      %v2685 = vadd.f32 0.0, %v2684
      %v2686 = vpop.f32.mrb[0].mxu0
      %2687 = vmatprep.mubr.f32.mxu0 0.0
      %2688 = vmatmul.mubr.f32.gmra.mrb[0].mxu0 %v2521
      %v2689 = vpop.f32.mrb[0].mxu0
      %v2690 = vadd.f32 0.0, %v2689
      %v2691 = vpop.f32.mrb[0].mxu0
      %2692 = vmatprep.mubr.f32.mxu0 0.0
      %2693 = vmatmul.mubr.f32.gmra.mrb[0].mxu0 %v2524
      %v2694 = vpop.f32.mrb[0].mxu0
      %v2695 = vadd.f32 0.0, %v2694
      %v2696 = vpop.f32.mrb[0].mxu0
      %2697 = vmatprep.mubr.f32.mxu0 0.0
      %2698 = vmatmul.mubr.f32.gmra.mrb[0].mxu0 %v2527
      %v2699 = vpop.f32.mrb[0].mxu0
      %v2700 = vadd.f32 0.0, %v2699
      %v2701 = vpop.f32.mrb[0].mxu0
      %2702 = vmatprep.mubr.f32.mxu0 0.0
      %2703 = vmatmul.mubr.f32.gmra.mrb[0].mxu0 %v2530
      %v2704 = vpop.f32.mrb[0].mxu0
      %v2705 = vadd.f32 0.0, %v2704
      %v2706 = vpop.f32.mrb[0].mxu0
      %2707 = vmatprep.mubr.f32.mxu0 0.0
      %2708 = vmatmul.mubr.f32.gmra.mrb[0].mxu0 %v2533
      %v2709 = vpop.f32.mrb[0].mxu0
      %v2710 = vadd.f32 0.0, %v2709
      %v2711 = vpop.f32.mrb[0].mxu0
      %2712 = vmatprep.mubr.f32.mxu0 0.0
      %2713 = vmatmul.mubr.f32.gmra.mrb[0].mxu0 %v2536
      %v2714 = vpop.f32.mrb[0].mxu0
      %v2715 = vadd.f32 0.0, %v2714
      %v2716 = vpop.f32.mrb[0].mxu0
      %2717 = vmatprep.mubr.f32.mxu0 0.0
      %2718 = vmatmul.mubr.f32.gmra.mrb[0].mxu0 %v2539
      %v2719 = vpop.f32.mrb[0].mxu0
      %v2720 = vadd.f32 0.0, %v2719
      %v2721 = vpop.f32.mrb[0].mxu0
      %2722 = vmatprep.mubr.f32.mxu0 0.0
      %2723 = vmatmul.mubr.f32.gmra.mrb[0].mxu0 %v2542
      %v2724 = vpop.f32.mrb[0].mxu0
      %v2725 = vadd.f32 0.0, %v2724
      %v2726 = vpop.f32.mrb[0].mxu0
      %2727 = vmatprep.mubr.f32.mxu0 0.0
      %2728 = vmatmul.mubr.f32.gmra.mrb[0].mxu0 %v2545
      %v2729 = vpop.f32.mrb[0].mxu0
      %v2730 = vadd.f32 0.0, %v2729
      %v2731 = vpop.f32.mrb[0].mxu0
      %2732 = vmatprep.mubr.f32.mxu0 0.0
      %2733 = vmatmul.mubr.f32.gmra.mrb[0].mxu0 %v2548
      %v2734 = vpop.f32.mrb[0].mxu0
      %v2735 = vadd.f32 0.0, %v2734
      %v2736 = vpop.f32.mrb[0].mxu0
      %2737 = vmatprep.mubr.f32.mxu0 0.0
      %2738 = vmatmul.mubr.f32.gmra.mrb[0].mxu0 %v2551
      %v2739 = vpop.f32.mrb[0].mxu0
      %v2740 = vadd.f32 0.0, %v2739
      %v2741 = vpop.f32.mrb[0].mxu0
      %2742 = vmatprep.mubr.f32.mxu0 0.0
      %2743 = vmatmul.mubr.f32.gmra.mrb[0].mxu0 %v2554
      %v2744 = vpop.f32.mrb[0].mxu0
      %v2745 = vadd.f32 0.0, %v2744
      %v2746 = vpop.f32.mrb[0].mxu0
      %2747 = vmatprep.mubr.f32.mxu0 0.0
      %2748 = vmatmul.mubr.f32.gmra.mrb[0].mxu0 %v2557
      %v2749 = vpop.f32.mrb[0].mxu0
      %v2750 = vadd.f32 0.0, %v2749
      %v2751 = vpop.f32.mrb[0].mxu0
      %2752 = vmatprep.mubr.f32.mxu0 0.0
      %2753 = vmatmul.mubr.f32.gmra.mrb[0].mxu0 %v2560
      %v2754 = vpop.f32.mrb[0].mxu0
      %v2755 = vadd.f32 0.0, %v2754
      %v2756 = vpop.f32.mrb[0].mxu0
      %2757 = vmatprep.mubr.f32.mxu0 0.0
      %2758 = vmatmul.mubr.f32.gmra.mrb[0].mxu0 %v2563
      %v2759 = vpop.f32.mrb[0].mxu0
      %v2760 = vadd.f32 0.0, %v2759
      %v2761 = vpop.f32.mrb[0].mxu0
      %2762 = vmatprep.mubr.f32.mxu0 0.0
      %2763 = vmatmul.mubr.f32.gmra.mrb[0].mxu0 %v2566
      %v2764 = vpop.f32.mrb[0].mxu0
      %v2765 = vadd.f32 0.0, %v2764
      %v2766 = vpop.f32.mrb[0].mxu0
      %2767 = vmatprep.mubr.f32.mxu0 0.0
      %2768 = vmatmul.mubr.f32.gmra.mrb[0].mxu0 %v2569
      %v2769 = vpop.f32.mrb[0].mxu0
      %v2770 = vadd.f32 0.0, %v2769
      %v2771 = vpop.f32.mrb[0].mxu0
      %2772 = vmatprep.mubr.f32.mxu0 0.0
      %2773 = vmatmul.mubr.f32.gmra.mrb[0].mxu0 %v2572
      %v2774 = vpop.f32.mrb[0].mxu0
      %v2775 = vadd.f32 0.0, %v2774
      %v2776 = vpop.f32.mrb[0].mxu0
      %2777 = vmatprep.mubr.f32.mxu0 0.0
      %2778 = vmatmul.mubr.f32.gmra.mrb[0].mxu0 %v2575
      %v2779 = vpop.f32.mrb[0].mxu0
      %v2780 = vadd.f32 0.0, %v2779
      %v2781 = vpop.f32.mrb[0].mxu0
      %2782 = vmatprep.mubr.f32.mxu0 0.0
      %2783 = vmatmul.mubr.f32.gmra.mrb[0].mxu0 %v2578
      %v2784 = vpop.f32.mrb[0].mxu0
      %v2785 = vadd.f32 0.0, %v2784
      %v2786 = vpop.f32.mrb[0].mxu0
      %2787 = vmatprep.mubr.f32.mxu0 0.0
      %2788 = vmatmul.mubr.f32.gmra.mrb[0].mxu0 %v2581
      %v2789 = vpop.f32.mrb[0].mxu0
      %v2790 = vadd.f32 0.0, %v2789
      %v2791 = vpop.f32.mrb[0].mxu0
      %2792 = vmatprep.mubr.f32.mxu0 0.0
      %2793 = vmatmul.mubr.f32.gmra.mrb[0].mxu0 %v2584
      %v2794 = vpop.f32.mrb[0].mxu0
      %v2795 = vadd.f32 0.0, %v2794
      %v2796 = vpop.f32.mrb[0].mxu0
      %2797 = vmatprep.mubr.f32.mxu0 0.0
      %2798 = vmatmul.mubr.f32.gmra.mrb[0].mxu0 %v2587
      %v2799 = vpop.f32.mrb[0].mxu0
      %v2800 = vadd.f32 0.0, %v2799
      %v2801 = vpop.f32.mrb[0].mxu0
      %2802 = vmatprep.mubr.f32.mxu0 0.0
      %2803 = vmatmul.mubr.f32.gmra.mrb[0].mxu0 %v2590
      %v2804 = vpop.f32.mrb[0].mxu0
      %v2805 = vadd.f32 0.0, %v2804
      %v2806 = vpop.f32.mrb[0].mxu0
      %2807 = vmatprep.mubr.f32.mxu0 0.0
      %2808 = vmatmul.mubr.f32.gmra.mrb[0].mxu0 %v2593
      %v2809 = vpop.f32.mrb[0].mxu0
      %v2810 = vadd.f32 0.0, %v2809
      %v2811 = vpop.f32.mrb[0].mxu0
      %2812 = vmatprep.mubr.f32.mxu0 0.0
      %2813 = vmatmul.mubr.f32.gmra.mrb[0].mxu0 %v2596
      %v2814 = vpop.f32.mrb[0].mxu0
      %v2815 = vadd.f32 0.0, %v2814
      %v2816 = vpop.f32.mrb[0].mxu0
      %2817 = vmatprep.mubr.f32.mxu0 0.0
      %2818 = vmatmul.mubr.f32.gmra.mrb[0].mxu0 %v2599
      %v2819 = vpop.f32.mrb[0].mxu0
      %v2820 = vadd.f32 0.0, %v2819
      %v2821 = vpop.f32.mrb[0].mxu0
      %2822 = vmatprep.mubr.f32.mxu0 0.0
      %2823 = vmatmul.mubr.f32.gmra.mrb[0].mxu0 %v2602
      %v2824 = vpop.f32.mrb[0].mxu0
      %v2825 = vadd.f32 0.0, %v2824
      %v2826 = vpop.f32.mrb[0].mxu0
      %2827 = vmatprep.mubr.f32.mxu0 0.0
      %2828 = vmatmul.mubr.f32.gmra.mrb[0].mxu0 %v2605
      %v2829 = vpop.f32.mrb[0].mxu0
      %v2830 = vadd.f32 0.0, %v2829
      %v2831 = vpop.f32.mrb[0].mxu0
      %2832 = vmatprep.mubr.f32.mxu0 0.0
      %2833 = vmatmul.mubr.f32.gmra.mrb[0].mxu0 %v2608
      %v2834 = vpop.f32.mrb[0].mxu0
      %v2835 = vadd.f32 0.0, %v2834
      %v2836 = vpop.f32.mrb[0].mxu0
      %2837 = vdwg.mxu0
      %v2838 = vadd.f32 %v2445, %v2680
      %v2839 = vadd.f32 %v2446, %v2685
      %v2840 = vadd.f32 %v2447, %v2690
      %v2841 = vadd.f32 %v2448, %v2695
      %v2842 = vadd.f32 %v2449, %v2700
      %v2843 = vadd.f32 %v2450, %v2705
      %v2844 = vadd.f32 %v2451, %v2710
      %v2845 = vadd.f32 %v2452, %v2715
      %v2846 = vadd.f32 %v2453, %v2720
      %v2847 = vadd.f32 %v2454, %v2725
      %v2848 = vadd.f32 %v2455, %v2730
      %v2849 = vadd.f32 %v2456, %v2735
      %v2850 = vadd.f32 %v2457, %v2740
      %v2851 = vadd.f32 %v2458, %v2745
      %v2852 = vadd.f32 %v2459, %v2750
      %v2853 = vadd.f32 %v2460, %v2755
      %v2854 = vadd.f32 %v2461, %v2760
      %v2855 = vadd.f32 %v2462, %v2765
      %v2856 = vadd.f32 %v2463, %v2770
      %v2857 = vadd.f32 %v2464, %v2775
      %v2858 = vadd.f32 %v2465, %v2780
      %v2859 = vadd.f32 %v2466, %v2785
      %v2860 = vadd.f32 %v2467, %v2790
      %v2861 = vadd.f32 %v2468, %v2795
      %v2862 = vadd.f32 %v2469, %v2800
      %v2863 = vadd.f32 %v2470, %v2805
      %v2864 = vadd.f32 %v2471, %v2810
      %v2865 = vadd.f32 %v2472, %v2815
      %v2866 = vadd.f32 %v2473, %v2820
      %v2867 = vadd.f32 %v2474, %v2825
      %v2868 = vadd.f32 %v2475, %v2830
      %v2869 = vadd.f32 %v2476, %v2835
      %v2870 = vld [vmem:[%s2479 + $0x1] sm:$0xff]
      %v2871 = vld [vmem:[%s2479 + $0x9] sm:$0xff]
      %v2872 = vld [vmem:[%s2479 + $0x19] sm:$0xff]
      %v2873 = vld [vmem:[%s2479 + $0x21] sm:$0xff]
      %v2874 = vld [vmem:[%s2479 + $0x31] sm:$0xff]
      %v2875 = vld [vmem:[%s2479 + $0x39] sm:$0xff]
      %v2876 = vld [vmem:[%s2479 + $0x49] sm:$0xff]
      %v2877 = vld [vmem:[%s2479 + $0x51] sm:$0xff]
      %v2878 = vld [vmem:[%s2479 + $0x61] sm:$0xff]
      %v2879 = vld [vmem:[%s2479 + $0x69] sm:$0xff]
      %v2880 = vld [vmem:[%s2479 + $0x79] sm:$0xff]
      %v2881 = vld [vmem:[%s2479 + $0x81] sm:$0xff]
      %v2882 = vld [vmem:[%s2479 + $0x91] sm:$0xff]
      %v2883 = vld [vmem:[%s2479 + $0x99] sm:$0xff]
      %v2884 = vld [vmem:[%s2479 + $0xa9] sm:$0xff]
      %v2885 = vld [vmem:[%s2479 + $0xb1] sm:$0xff]
      %v2886 = vld [vmem:[%s2479 + $0xc1] sm:$0xff]
      %v2887 = vld [vmem:[%s2479 + $0xc9] sm:$0xff]
      %v2888 = vld [vmem:[%s2479 + $0xd9] sm:$0xff]
      %v2889 = vld [vmem:[%s2479 + $0xe1] sm:$0xff]
      %v2890 = vld [vmem:[%s2479 + $0xf1] sm:$0xff]
      %v2891 = vld [vmem:[%s2479 + $0xf9] sm:$0xff]
      %v2892 = vld [vmem:[%s2479 + $0x109] sm:$0xff]
      %v2893 = vld [vmem:[%s2479 + $0x111] sm:$0xff]
      %v2894 = vld [vmem:[%s2479 + $0x121] sm:$0xff]
      %v2895 = vld [vmem:[%s2479 + $0x129] sm:$0xff]
      %v2896 = vld [vmem:[%s2479 + $0x139] sm:$0xff]
      %v2897 = vld [vmem:[%s2479 + $0x141] sm:$0xff]
      %v2898 = vld [vmem:[%s2479 + $0x151] sm:$0xff]
      %v2899 = vld [vmem:[%s2479 + $0x159] sm:$0xff]
      %v2900 = vld [vmem:[%s2479 + $0x169] sm:$0xff]
      %v2901 = vld [vmem:[%s2479 + $0x171] sm:$0xff]
      %s2902 = scalar_lea.vmem %s1, 28
      %v2903 = vld [vmem:[%s2902] sm:$0xf]
      %v2905 = vsel %vm264, %v2870, 0
      %v2908 = vsel %vm264, %v2871, 0
      %v2911 = vsel %vm264, %v2872, 0
      %v2914 = vsel %vm264, %v2873, 0
      %v2917 = vsel %vm264, %v2874, 0
      %v2920 = vsel %vm264, %v2875, 0
      %v2923 = vsel %vm264, %v2876, 0
      %v2926 = vsel %vm264, %v2877, 0
      %v2929 = vsel %vm264, %v2878, 0
      %v2932 = vsel %vm264, %v2879, 0
      %v2935 = vsel %vm264, %v2880, 0
      %v2938 = vsel %vm264, %v2881, 0
      %v2941 = vsel %vm264, %v2882, 0
      %v2944 = vsel %vm264, %v2883, 0
      %v2947 = vsel %vm264, %v2884, 0
      %v2950 = vsel %vm264, %v2885, 0
      %v2953 = vsel %vm264, %v2886, 0
      %v2956 = vsel %vm264, %v2887, 0
      %v2959 = vsel %vm264, %v2888, 0
      %v2962 = vsel %vm264, %v2889, 0
      %v2965 = vsel %vm264, %v2890, 0
      %v2968 = vsel %vm264, %v2891, 0
      %v2971 = vsel %vm264, %v2892, 0
      %v2974 = vsel %vm264, %v2893, 0
      %v2977 = vsel %vm264, %v2894, 0
      %v2980 = vsel %vm264, %v2895, 0
      %v2983 = vsel %vm264, %v2896, 0
      %v2986 = vsel %vm264, %v2897, 0
      %v2989 = vsel %vm264, %v2898, 0
      %v2992 = vsel %vm264, %v2899, 0
      %v2995 = vsel %vm264, %v2900, 0
      %v2998 = vsel %vm264, %v2901, 0
      %v3001 = vsel %vm361, %v2903, 0
      %3003 = vmatprep.subr.mxu0 0.0
      %3004 = vmatpush1.msra.mxu0 %v3001
      %3005 = vmatprep.subr.mxu0 0.0
      %3006 = vmatpush1.msra.mxu0 0.0
      %3007 = vmatprep.subr.mxu0 0.0
      %3008 = vmatpush1.msra.mxu0 0.0
      %3009 = vmatprep.subr.mxu0 0.0
      %3010 = vmatpush1.msra.mxu0 0.0
      %3011 = vmatprep.subr.mxu0 0.0
      %3012 = vmatpush1.msra.mxu0 0.0
      %3013 = vmatprep.subr.mxu0 0.0
      %3014 = vmatpush1.msra.mxu0 0.0
      %3015 = vmatprep.subr.mxu0 0.0
      %3016 = vmatpush1.msra.mxu0 0.0
      %3017 = vmatprep.subr.mxu0 0.0
      %3018 = vmatpush1.msra.mxu0 0.0
      %3019 = vmatprep.subr.mxu0 0.0
      %3020 = vmatpush1.msra.mxu0 0.0
      %3021 = vmatprep.subr.mxu0 0.0
      %3022 = vmatpush1.msra.mxu0 0.0
      %3023 = vmatprep.subr.mxu0 0.0
      %3024 = vmatpush1.msra.mxu0 0.0
      %3025 = vmatprep.subr.mxu0 0.0
      %3026 = vmatpush1.msra.mxu0 0.0
      %3027 = vmatprep.subr.mxu0 0.0
      %3028 = vmatpush1.msra.mxu0 0.0
      %3029 = vmatprep.subr.mxu0 0.0
      %3030 = vmatpush1.msra.mxu0 0.0
      %3031 = vmatprep.subr.mxu0 0.0
      %3032 = vmatpush1.msra.mxu0 0.0
      %3033 = vmatprep.subr.mxu0 0.0
      %3034 = vmatpush1.msra.mxu0 0.0
      %3035 = vmatprep.subr.mxu0 0.0
      %3036 = vmatpush1.msra.mxu0 0.0
      %3037 = vmatprep.subr.mxu0 0.0
      %3038 = vmatpush1.msra.mxu0 0.0
      %3039 = vmatprep.subr.mxu0 0.0
      %3040 = vmatpush1.msra.mxu0 0.0
      %3041 = vmatprep.subr.mxu0 0.0
      %3042 = vmatpush1.msra.mxu0 0.0
      %3043 = vmatprep.subr.mxu0 0.0
      %3044 = vmatpush1.msra.mxu0 0.0
      %3045 = vmatprep.subr.mxu0 0.0
      %3046 = vmatpush1.msra.mxu0 0.0
      %3047 = vmatprep.subr.mxu0 0.0
      %3048 = vmatpush1.msra.mxu0 0.0
      %3049 = vmatprep.subr.mxu0 0.0
      %3050 = vmatpush1.msra.mxu0 0.0
      %3051 = vmatprep.subr.mxu0 0.0
      %3052 = vmatpush1.msra.mxu0 0.0
      %3053 = vmatprep.subr.mxu0 0.0
      %3054 = vmatpush1.msra.mxu0 0.0
      %3055 = vmatprep.subr.mxu0 0.0
      %3056 = vmatpush1.msra.mxu0 0.0
      %3057 = vmatprep.subr.mxu0 0.0
      %3058 = vmatpush1.msra.mxu0 0.0
      %3059 = vmatprep.subr.mxu0 0.0
      %3060 = vmatpush1.msra.mxu0 0.0
      %3061 = vmatprep.subr.mxu0 0.0
      %3062 = vmatpush1.msra.mxu0 0.0
      %3063 = vmatprep.subr.mxu0 0.0
      %3064 = vmatpush1.msra.mxu0 0.0
      %3065 = vmatprep.subr.mxu0 0.0
      %3066 = vmatpush1.msra.mxu0 0.0
      %3067 = vmatprep.mubr.f32.mxu0 0.0
      %3068 = vmatmul.mubr.f32.gmra.mrb[0].mxu0 %v2905
      %v3069 = vpop.f32.mrb[0].mxu0
      %v3070 = vadd.f32 0.0, %v3069
      %v3071 = vpop.f32.mrb[0].mxu0
      %3072 = vmatprep.mubr.f32.mxu0 0.0
      %3073 = vmatmul.mubr.f32.gmra.mrb[0].mxu0 %v2908
      %v3074 = vpop.f32.mrb[0].mxu0
      %v3075 = vadd.f32 0.0, %v3074
      %v3076 = vpop.f32.mrb[0].mxu0
      %3077 = vmatprep.mubr.f32.mxu0 0.0
      %3078 = vmatmul.mubr.f32.gmra.mrb[0].mxu0 %v2911
      %v3079 = vpop.f32.mrb[0].mxu0
      %v3080 = vadd.f32 0.0, %v3079
      %v3081 = vpop.f32.mrb[0].mxu0
      %3082 = vmatprep.mubr.f32.mxu0 0.0
      %3083 = vmatmul.mubr.f32.gmra.mrb[0].mxu0 %v2914
      %v3084 = vpop.f32.mrb[0].mxu0
      %v3085 = vadd.f32 0.0, %v3084
      %v3086 = vpop.f32.mrb[0].mxu0
      %3087 = vmatprep.mubr.f32.mxu0 0.0
      %3088 = vmatmul.mubr.f32.gmra.mrb[0].mxu0 %v2917
      %v3089 = vpop.f32.mrb[0].mxu0
      %v3090 = vadd.f32 0.0, %v3089
      %v3091 = vpop.f32.mrb[0].mxu0
      %3092 = vmatprep.mubr.f32.mxu0 0.0
      %3093 = vmatmul.mubr.f32.gmra.mrb[0].mxu0 %v2920
      %v3094 = vpop.f32.mrb[0].mxu0
      %v3095 = vadd.f32 0.0, %v3094
      %v3096 = vpop.f32.mrb[0].mxu0
      %3097 = vmatprep.mubr.f32.mxu0 0.0
      %3098 = vmatmul.mubr.f32.gmra.mrb[0].mxu0 %v2923
      %v3099 = vpop.f32.mrb[0].mxu0
      %v3100 = vadd.f32 0.0, %v3099
      %v3101 = vpop.f32.mrb[0].mxu0
      %3102 = vmatprep.mubr.f32.mxu0 0.0
      %3103 = vmatmul.mubr.f32.gmra.mrb[0].mxu0 %v2926
      %v3104 = vpop.f32.mrb[0].mxu0
      %v3105 = vadd.f32 0.0, %v3104
      %v3106 = vpop.f32.mrb[0].mxu0
      %3107 = vmatprep.mubr.f32.mxu0 0.0
      %3108 = vmatmul.mubr.f32.gmra.mrb[0].mxu0 %v2929
      %v3109 = vpop.f32.mrb[0].mxu0
      %v3110 = vadd.f32 0.0, %v3109
      %v3111 = vpop.f32.mrb[0].mxu0
      %3112 = vmatprep.mubr.f32.mxu0 0.0
      %3113 = vmatmul.mubr.f32.gmra.mrb[0].mxu0 %v2932
      %v3114 = vpop.f32.mrb[0].mxu0
      %v3115 = vadd.f32 0.0, %v3114
      %v3116 = vpop.f32.mrb[0].mxu0
      %3117 = vmatprep.mubr.f32.mxu0 0.0
      %3118 = vmatmul.mubr.f32.gmra.mrb[0].mxu0 %v2935
      %v3119 = vpop.f32.mrb[0].mxu0
      %v3120 = vadd.f32 0.0, %v3119
      %v3121 = vpop.f32.mrb[0].mxu0
      %3122 = vmatprep.mubr.f32.mxu0 0.0
      %3123 = vmatmul.mubr.f32.gmra.mrb[0].mxu0 %v2938
      %v3124 = vpop.f32.mrb[0].mxu0
      %v3125 = vadd.f32 0.0, %v3124
      %v3126 = vpop.f32.mrb[0].mxu0
      %3127 = vmatprep.mubr.f32.mxu0 0.0
      %3128 = vmatmul.mubr.f32.gmra.mrb[0].mxu0 %v2941
      %v3129 = vpop.f32.mrb[0].mxu0
      %v3130 = vadd.f32 0.0, %v3129
      %v3131 = vpop.f32.mrb[0].mxu0
      %3132 = vmatprep.mubr.f32.mxu0 0.0
      %3133 = vmatmul.mubr.f32.gmra.mrb[0].mxu0 %v2944
      %v3134 = vpop.f32.mrb[0].mxu0
      %v3135 = vadd.f32 0.0, %v3134
      %v3136 = vpop.f32.mrb[0].mxu0
      %3137 = vmatprep.mubr.f32.mxu0 0.0
      %3138 = vmatmul.mubr.f32.gmra.mrb[0].mxu0 %v2947
      %v3139 = vpop.f32.mrb[0].mxu0
      %v3140 = vadd.f32 0.0, %v3139
      %v3141 = vpop.f32.mrb[0].mxu0
      %3142 = vmatprep.mubr.f32.mxu0 0.0
      %3143 = vmatmul.mubr.f32.gmra.mrb[0].mxu0 %v2950
      %v3144 = vpop.f32.mrb[0].mxu0
      %v3145 = vadd.f32 0.0, %v3144
      %v3146 = vpop.f32.mrb[0].mxu0
      %3147 = vmatprep.mubr.f32.mxu0 0.0
      %3148 = vmatmul.mubr.f32.gmra.mrb[0].mxu0 %v2953
      %v3149 = vpop.f32.mrb[0].mxu0
      %v3150 = vadd.f32 0.0, %v3149
      %v3151 = vpop.f32.mrb[0].mxu0
      %3152 = vmatprep.mubr.f32.mxu0 0.0
      %3153 = vmatmul.mubr.f32.gmra.mrb[0].mxu0 %v2956
      %v3154 = vpop.f32.mrb[0].mxu0
      %v3155 = vadd.f32 0.0, %v3154
      %v3156 = vpop.f32.mrb[0].mxu0
      %3157 = vmatprep.mubr.f32.mxu0 0.0
      %3158 = vmatmul.mubr.f32.gmra.mrb[0].mxu0 %v2959
      %v3159 = vpop.f32.mrb[0].mxu0
      %v3160 = vadd.f32 0.0, %v3159
      %v3161 = vpop.f32.mrb[0].mxu0
      %3162 = vmatprep.mubr.f32.mxu0 0.0
      %3163 = vmatmul.mubr.f32.gmra.mrb[0].mxu0 %v2962
      %v3164 = vpop.f32.mrb[0].mxu0
      %v3165 = vadd.f32 0.0, %v3164
      %v3166 = vpop.f32.mrb[0].mxu0
      %3167 = vmatprep.mubr.f32.mxu0 0.0
      %3168 = vmatmul.mubr.f32.gmra.mrb[0].mxu0 %v2965
      %v3169 = vpop.f32.mrb[0].mxu0
      %v3170 = vadd.f32 0.0, %v3169
      %v3171 = vpop.f32.mrb[0].mxu0
      %3172 = vmatprep.mubr.f32.mxu0 0.0
      %3173 = vmatmul.mubr.f32.gmra.mrb[0].mxu0 %v2968
      %v3174 = vpop.f32.mrb[0].mxu0
      %v3175 = vadd.f32 0.0, %v3174
      %v3176 = vpop.f32.mrb[0].mxu0
      %3177 = vmatprep.mubr.f32.mxu0 0.0
      %3178 = vmatmul.mubr.f32.gmra.mrb[0].mxu0 %v2971
      %v3179 = vpop.f32.mrb[0].mxu0
      %v3180 = vadd.f32 0.0, %v3179
      %v3181 = vpop.f32.mrb[0].mxu0
      %3182 = vmatprep.mubr.f32.mxu0 0.0
      %3183 = vmatmul.mubr.f32.gmra.mrb[0].mxu0 %v2974
      %v3184 = vpop.f32.mrb[0].mxu0
      %v3185 = vadd.f32 0.0, %v3184
      %v3186 = vpop.f32.mrb[0].mxu0
      %3187 = vmatprep.mubr.f32.mxu0 0.0
      %3188 = vmatmul.mubr.f32.gmra.mrb[0].mxu0 %v2977
      %v3189 = vpop.f32.mrb[0].mxu0
      %v3190 = vadd.f32 0.0, %v3189
      %v3191 = vpop.f32.mrb[0].mxu0
      %3192 = vmatprep.mubr.f32.mxu0 0.0
      %3193 = vmatmul.mubr.f32.gmra.mrb[0].mxu0 %v2980
      %v3194 = vpop.f32.mrb[0].mxu0
      %v3195 = vadd.f32 0.0, %v3194
      %v3196 = vpop.f32.mrb[0].mxu0
      %3197 = vmatprep.mubr.f32.mxu0 0.0
      %3198 = vmatmul.mubr.f32.gmra.mrb[0].mxu0 %v2983
      %v3199 = vpop.f32.mrb[0].mxu0
      %v3200 = vadd.f32 0.0, %v3199
      %v3201 = vpop.f32.mrb[0].mxu0
      %3202 = vmatprep.mubr.f32.mxu0 0.0
      %3203 = vmatmul.mubr.f32.gmra.mrb[0].mxu0 %v2986
      %v3204 = vpop.f32.mrb[0].mxu0
      %v3205 = vadd.f32 0.0, %v3204
      %v3206 = vpop.f32.mrb[0].mxu0
      %3207 = vmatprep.mubr.f32.mxu0 0.0
      %3208 = vmatmul.mubr.f32.gmra.mrb[0].mxu0 %v2989
      %v3209 = vpop.f32.mrb[0].mxu0
      %v3210 = vadd.f32 0.0, %v3209
      %v3211 = vpop.f32.mrb[0].mxu0
      %3212 = vmatprep.mubr.f32.mxu0 0.0
      %3213 = vmatmul.mubr.f32.gmra.mrb[0].mxu0 %v2992
      %v3214 = vpop.f32.mrb[0].mxu0
      %v3215 = vadd.f32 0.0, %v3214
      %v3216 = vpop.f32.mrb[0].mxu0
      %3217 = vmatprep.mubr.f32.mxu0 0.0
      %3218 = vmatmul.mubr.f32.gmra.mrb[0].mxu0 %v2995
      %v3219 = vpop.f32.mrb[0].mxu0
      %v3220 = vadd.f32 0.0, %v3219
      %v3221 = vpop.f32.mrb[0].mxu0
      %3222 = vmatprep.mubr.f32.mxu0 0.0
      %3223 = vmatmul.mubr.f32.gmra.mrb[0].mxu0 %v2998
      %v3224 = vpop.f32.mrb[0].mxu0
      %v3225 = vadd.f32 0.0, %v3224
      %v3226 = vpop.f32.mrb[0].mxu0
      %3227 = vdwg.mxu0
      %v3228 = vadd.f32 %v2838, %v3070
      %v3229 = vadd.f32 %v2839, %v3075
      %v3230 = vadd.f32 %v2840, %v3080
      %v3231 = vadd.f32 %v2841, %v3085
      %v3232 = vadd.f32 %v2842, %v3090
      %v3233 = vadd.f32 %v2843, %v3095
      %v3234 = vadd.f32 %v2844, %v3100
      %v3235 = vadd.f32 %v2845, %v3105
      %v3236 = vadd.f32 %v2846, %v3110
      %v3237 = vadd.f32 %v2847, %v3115
      %v3238 = vadd.f32 %v2848, %v3120
      %v3239 = vadd.f32 %v2849, %v3125
      %v3240 = vadd.f32 %v2850, %v3130
      %v3241 = vadd.f32 %v2851, %v3135
      %v3242 = vadd.f32 %v2852, %v3140
      %v3243 = vadd.f32 %v2853, %v3145
      %v3244 = vadd.f32 %v2854, %v3150
      %v3245 = vadd.f32 %v2855, %v3155
      %v3246 = vadd.f32 %v2856, %v3160
      %v3247 = vadd.f32 %v2857, %v3165
      %v3248 = vadd.f32 %v2858, %v3170
      %v3249 = vadd.f32 %v2859, %v3175
      %v3250 = vadd.f32 %v2860, %v3180
      %v3251 = vadd.f32 %v2861, %v3185
      %v3252 = vadd.f32 %v2862, %v3190
      %v3253 = vadd.f32 %v2863, %v3195
      %v3254 = vadd.f32 %v2864, %v3200
      %v3255 = vadd.f32 %v2865, %v3205
      %v3256 = vadd.f32 %v2866, %v3210
      %v3257 = vadd.f32 %v2867, %v3215
      %v3258 = vadd.f32 %v2868, %v3220
      %v3259 = vadd.f32 %v2869, %v3225
      %v3260 = vld [vmem:[%s2479 + $0x2] sm:$0xff]
      %v3261 = vld [vmem:[%s2479 + $0xa] sm:$0xff]
      %v3262 = vld [vmem:[%s2479 + $0x1a] sm:$0xff]
      %v3263 = vld [vmem:[%s2479 + $0x22] sm:$0xff]
      %v3264 = vld [vmem:[%s2479 + $0x32] sm:$0xff]
      %v3265 = vld [vmem:[%s2479 + $0x3a] sm:$0xff]
      %v3266 = vld [vmem:[%s2479 + $0x4a] sm:$0xff]
      %v3267 = vld [vmem:[%s2479 + $0x52] sm:$0xff]
      %v3268 = vld [vmem:[%s2479 + $0x62] sm:$0xff]
      %v3269 = vld [vmem:[%s2479 + $0x6a] sm:$0xff]
      %v3270 = vld [vmem:[%s2479 + $0x7a] sm:$0xff]
      %v3271 = vld [vmem:[%s2479 + $0x82] sm:$0xff]
      %v3272 = vld [vmem:[%s2479 + $0x92] sm:$0xff]
      %v3273 = vld [vmem:[%s2479 + $0x9a] sm:$0xff]
      %v3274 = vld [vmem:[%s2479 + $0xaa] sm:$0xff]
      %v3275 = vld [vmem:[%s2479 + $0xb2] sm:$0xff]
      %v3276 = vld [vmem:[%s2479 + $0xc2] sm:$0xff]
      %v3277 = vld [vmem:[%s2479 + $0xca] sm:$0xff]
      %v3278 = vld [vmem:[%s2479 + $0xda] sm:$0xff]
      %v3279 = vld [vmem:[%s2479 + $0xe2] sm:$0xff]
      %v3280 = vld [vmem:[%s2479 + $0xf2] sm:$0xff]
      %v3281 = vld [vmem:[%s2479 + $0xfa] sm:$0xff]
      %v3282 = vld [vmem:[%s2479 + $0x10a] sm:$0xff]
      %v3283 = vld [vmem:[%s2479 + $0x112] sm:$0xff]
      %v3284 = vld [vmem:[%s2479 + $0x122] sm:$0xff]
      %v3285 = vld [vmem:[%s2479 + $0x12a] sm:$0xff]
      %v3286 = vld [vmem:[%s2479 + $0x13a] sm:$0xff]
      %v3287 = vld [vmem:[%s2479 + $0x142] sm:$0xff]
      %v3288 = vld [vmem:[%s2479 + $0x152] sm:$0xff]
      %v3289 = vld [vmem:[%s2479 + $0x15a] sm:$0xff]
      %v3290 = vld [vmem:[%s2479 + $0x16a] sm:$0xff]
      %v3291 = vld [vmem:[%s2479 + $0x172] sm:$0xff]
      %s3292 = scalar_lea.vmem %s1, 32
      %v3293 = vld [vmem:[%s3292] sm:$0xf]
      %v3295 = vsel %vm264, %v3260, 0
      %v3298 = vsel %vm264, %v3261, 0
      %v3301 = vsel %vm264, %v3262, 0
      %v3304 = vsel %vm264, %v3263, 0
      %v3307 = vsel %vm264, %v3264, 0
      %v3310 = vsel %vm264, %v3265, 0
      %v3313 = vsel %vm264, %v3266, 0
      %v3316 = vsel %vm264, %v3267, 0
      %v3319 = vsel %vm264, %v3268, 0
      %v3322 = vsel %vm264, %v3269, 0
      %v3325 = vsel %vm264, %v3270, 0
      %v3328 = vsel %vm264, %v3271, 0
      %v3331 = vsel %vm264, %v3272, 0
      %v3334 = vsel %vm264, %v3273, 0
      %v3337 = vsel %vm264, %v3274, 0
      %v3340 = vsel %vm264, %v3275, 0
      %v3343 = vsel %vm264, %v3276, 0
      %v3346 = vsel %vm264, %v3277, 0
      %v3349 = vsel %vm264, %v3278, 0
      %v3352 = vsel %vm264, %v3279, 0
      %v3355 = vsel %vm264, %v3280, 0
      %v3358 = vsel %vm264, %v3281, 0
      %v3361 = vsel %vm264, %v3282, 0
      %v3364 = vsel %vm264, %v3283, 0
      %v3367 = vsel %vm264, %v3284, 0
      %v3370 = vsel %vm264, %v3285, 0
      %v3373 = vsel %vm264, %v3286, 0
      %v3376 = vsel %vm264, %v3287, 0
      %v3379 = vsel %vm264, %v3288, 0
      %v3382 = vsel %vm264, %v3289, 0
      %v3385 = vsel %vm264, %v3290, 0
      %v3388 = vsel %vm264, %v3291, 0
      %v3391 = vsel %vm361, %v3293, 0
      %3393 = vmatprep.subr.mxu0 0.0
      %3394 = vmatpush1.msra.mxu0 %v3391
      %3395 = vmatprep.subr.mxu0 0.0
      %3396 = vmatpush1.msra.mxu0 0.0
      %3397 = vmatprep.subr.mxu0 0.0
      %3398 = vmatpush1.msra.mxu0 0.0
      %3399 = vmatprep.subr.mxu0 0.0
      %3400 = vmatpush1.msra.mxu0 0.0
      %3401 = vmatprep.subr.mxu0 0.0
      %3402 = vmatpush1.msra.mxu0 0.0
      %3403 = vmatprep.subr.mxu0 0.0
      %3404 = vmatpush1.msra.mxu0 0.0
      %3405 = vmatprep.subr.mxu0 0.0
      %3406 = vmatpush1.msra.mxu0 0.0
      %3407 = vmatprep.subr.mxu0 0.0
      %3408 = vmatpush1.msra.mxu0 0.0
      %3409 = vmatprep.subr.mxu0 0.0
      %3410 = vmatpush1.msra.mxu0 0.0
      %3411 = vmatprep.subr.mxu0 0.0
      %3412 = vmatpush1.msra.mxu0 0.0
      %3413 = vmatprep.subr.mxu0 0.0
      %3414 = vmatpush1.msra.mxu0 0.0
      %3415 = vmatprep.subr.mxu0 0.0
      %3416 = vmatpush1.msra.mxu0 0.0
      %3417 = vmatprep.subr.mxu0 0.0
      %3418 = vmatpush1.msra.mxu0 0.0
      %3419 = vmatprep.subr.mxu0 0.0
      %3420 = vmatpush1.msra.mxu0 0.0
      %3421 = vmatprep.subr.mxu0 0.0
      %3422 = vmatpush1.msra.mxu0 0.0
      %3423 = vmatprep.subr.mxu0 0.0
      %3424 = vmatpush1.msra.mxu0 0.0
      %3425 = vmatprep.subr.mxu0 0.0
      %3426 = vmatpush1.msra.mxu0 0.0
      %3427 = vmatprep.subr.mxu0 0.0
      %3428 = vmatpush1.msra.mxu0 0.0
      %3429 = vmatprep.subr.mxu0 0.0
      %3430 = vmatpush1.msra.mxu0 0.0
      %3431 = vmatprep.subr.mxu0 0.0
      %3432 = vmatpush1.msra.mxu0 0.0
      %3433 = vmatprep.subr.mxu0 0.0
      %3434 = vmatpush1.msra.mxu0 0.0
      %3435 = vmatprep.subr.mxu0 0.0
      %3436 = vmatpush1.msra.mxu0 0.0
      %3437 = vmatprep.subr.mxu0 0.0
      %3438 = vmatpush1.msra.mxu0 0.0
      %3439 = vmatprep.subr.mxu0 0.0
      %3440 = vmatpush1.msra.mxu0 0.0
      %3441 = vmatprep.subr.mxu0 0.0
      %3442 = vmatpush1.msra.mxu0 0.0
      %3443 = vmatprep.subr.mxu0 0.0
      %3444 = vmatpush1.msra.mxu0 0.0
      %3445 = vmatprep.subr.mxu0 0.0
      %3446 = vmatpush1.msra.mxu0 0.0
      %3447 = vmatprep.subr.mxu0 0.0
      %3448 = vmatpush1.msra.mxu0 0.0
      %3449 = vmatprep.subr.mxu0 0.0
      %3450 = vmatpush1.msra.mxu0 0.0
      %3451 = vmatprep.subr.mxu0 0.0
      %3452 = vmatpush1.msra.mxu0 0.0
      %3453 = vmatprep.subr.mxu0 0.0
      %3454 = vmatpush1.msra.mxu0 0.0
      %3455 = vmatprep.subr.mxu0 0.0
      %3456 = vmatpush1.msra.mxu0 0.0
      %3457 = vmatprep.mubr.f32.mxu0 0.0
      %3458 = vmatmul.mubr.f32.gmra.mrb[0].mxu0 %v3295
      %v3459 = vpop.f32.mrb[0].mxu0
      %v3460 = vadd.f32 0.0, %v3459
      %v3461 = vpop.f32.mrb[0].mxu0
      %3462 = vmatprep.mubr.f32.mxu0 0.0
      %3463 = vmatmul.mubr.f32.gmra.mrb[0].mxu0 %v3298
      %v3464 = vpop.f32.mrb[0].mxu0
      %v3465 = vadd.f32 0.0, %v3464
      %v3466 = vpop.f32.mrb[0].mxu0
      %3467 = vmatprep.mubr.f32.mxu0 0.0
      %3468 = vmatmul.mubr.f32.gmra.mrb[0].mxu0 %v3301
      %v3469 = vpop.f32.mrb[0].mxu0
      %v3470 = vadd.f32 0.0, %v3469
      %v3471 = vpop.f32.mrb[0].mxu0
      %3472 = vmatprep.mubr.f32.mxu0 0.0
      %3473 = vmatmul.mubr.f32.gmra.mrb[0].mxu0 %v3304
      %v3474 = vpop.f32.mrb[0].mxu0
      %v3475 = vadd.f32 0.0, %v3474
      %v3476 = vpop.f32.mrb[0].mxu0
      %3477 = vmatprep.mubr.f32.mxu0 0.0
      %3478 = vmatmul.mubr.f32.gmra.mrb[0].mxu0 %v3307
      %v3479 = vpop.f32.mrb[0].mxu0
      %v3480 = vadd.f32 0.0, %v3479
      %v3481 = vpop.f32.mrb[0].mxu0
      %3482 = vmatprep.mubr.f32.mxu0 0.0
      %3483 = vmatmul.mubr.f32.gmra.mrb[0].mxu0 %v3310
      %v3484 = vpop.f32.mrb[0].mxu0
      %v3485 = vadd.f32 0.0, %v3484
      %v3486 = vpop.f32.mrb[0].mxu0
      %3487 = vmatprep.mubr.f32.mxu0 0.0
      %3488 = vmatmul.mubr.f32.gmra.mrb[0].mxu0 %v3313
      %v3489 = vpop.f32.mrb[0].mxu0
      %v3490 = vadd.f32 0.0, %v3489
      %v3491 = vpop.f32.mrb[0].mxu0
      %3492 = vmatprep.mubr.f32.mxu0 0.0
      %3493 = vmatmul.mubr.f32.gmra.mrb[0].mxu0 %v3316
      %v3494 = vpop.f32.mrb[0].mxu0
      %v3495 = vadd.f32 0.0, %v3494
      %v3496 = vpop.f32.mrb[0].mxu0
      %3497 = vmatprep.mubr.f32.mxu0 0.0
      %3498 = vmatmul.mubr.f32.gmra.mrb[0].mxu0 %v3319
      %v3499 = vpop.f32.mrb[0].mxu0
      %v3500 = vadd.f32 0.0, %v3499
      %v3501 = vpop.f32.mrb[0].mxu0
      %3502 = vmatprep.mubr.f32.mxu0 0.0
      %3503 = vmatmul.mubr.f32.gmra.mrb[0].mxu0 %v3322
      %v3504 = vpop.f32.mrb[0].mxu0
      %v3505 = vadd.f32 0.0, %v3504
      %v3506 = vpop.f32.mrb[0].mxu0
      %3507 = vmatprep.mubr.f32.mxu0 0.0
      %3508 = vmatmul.mubr.f32.gmra.mrb[0].mxu0 %v3325
      %v3509 = vpop.f32.mrb[0].mxu0
      %v3510 = vadd.f32 0.0, %v3509
      %v3511 = vpop.f32.mrb[0].mxu0
      %3512 = vmatprep.mubr.f32.mxu0 0.0
      %3513 = vmatmul.mubr.f32.gmra.mrb[0].mxu0 %v3328
      %v3514 = vpop.f32.mrb[0].mxu0
      %v3515 = vadd.f32 0.0, %v3514
      %v3516 = vpop.f32.mrb[0].mxu0
      %3517 = vmatprep.mubr.f32.mxu0 0.0
      %3518 = vmatmul.mubr.f32.gmra.mrb[0].mxu0 %v3331
      %v3519 = vpop.f32.mrb[0].mxu0
      %v3520 = vadd.f32 0.0, %v3519
      %v3521 = vpop.f32.mrb[0].mxu0
      %3522 = vmatprep.mubr.f32.mxu0 0.0
      %3523 = vmatmul.mubr.f32.gmra.mrb[0].mxu0 %v3334
      %v3524 = vpop.f32.mrb[0].mxu0
      %v3525 = vadd.f32 0.0, %v3524
      %v3526 = vpop.f32.mrb[0].mxu0
      %3527 = vmatprep.mubr.f32.mxu0 0.0
      %3528 = vmatmul.mubr.f32.gmra.mrb[0].mxu0 %v3337
      %v3529 = vpop.f32.mrb[0].mxu0
      %v3530 = vadd.f32 0.0, %v3529
      %v3531 = vpop.f32.mrb[0].mxu0
      %3532 = vmatprep.mubr.f32.mxu0 0.0
      %3533 = vmatmul.mubr.f32.gmra.mrb[0].mxu0 %v3340
      %v3534 = vpop.f32.mrb[0].mxu0
      %v3535 = vadd.f32 0.0, %v3534
      %v3536 = vpop.f32.mrb[0].mxu0
      %3537 = vmatprep.mubr.f32.mxu0 0.0
      %3538 = vmatmul.mubr.f32.gmra.mrb[0].mxu0 %v3343
      %v3539 = vpop.f32.mrb[0].mxu0
      %v3540 = vadd.f32 0.0, %v3539
      %v3541 = vpop.f32.mrb[0].mxu0
      %3542 = vmatprep.mubr.f32.mxu0 0.0
      %3543 = vmatmul.mubr.f32.gmra.mrb[0].mxu0 %v3346
      %v3544 = vpop.f32.mrb[0].mxu0
      %v3545 = vadd.f32 0.0, %v3544
      %v3546 = vpop.f32.mrb[0].mxu0
      %3547 = vmatprep.mubr.f32.mxu0 0.0
      %3548 = vmatmul.mubr.f32.gmra.mrb[0].mxu0 %v3349
      %v3549 = vpop.f32.mrb[0].mxu0
      %v3550 = vadd.f32 0.0, %v3549
      %v3551 = vpop.f32.mrb[0].mxu0
      %3552 = vmatprep.mubr.f32.mxu0 0.0
      %3553 = vmatmul.mubr.f32.gmra.mrb[0].mxu0 %v3352
      %v3554 = vpop.f32.mrb[0].mxu0
      %v3555 = vadd.f32 0.0, %v3554
      %v3556 = vpop.f32.mrb[0].mxu0
      %3557 = vmatprep.mubr.f32.mxu0 0.0
      %3558 = vmatmul.mubr.f32.gmra.mrb[0].mxu0 %v3355
      %v3559 = vpop.f32.mrb[0].mxu0
      %v3560 = vadd.f32 0.0, %v3559
      %v3561 = vpop.f32.mrb[0].mxu0
      %3562 = vmatprep.mubr.f32.mxu0 0.0
      %3563 = vmatmul.mubr.f32.gmra.mrb[0].mxu0 %v3358
      %v3564 = vpop.f32.mrb[0].mxu0
      %v3565 = vadd.f32 0.0, %v3564
      %v3566 = vpop.f32.mrb[0].mxu0
      %3567 = vmatprep.mubr.f32.mxu0 0.0
      %3568 = vmatmul.mubr.f32.gmra.mrb[0].mxu0 %v3361
      %v3569 = vpop.f32.mrb[0].mxu0
      %v3570 = vadd.f32 0.0, %v3569
      %v3571 = vpop.f32.mrb[0].mxu0
      %3572 = vmatprep.mubr.f32.mxu0 0.0
      %3573 = vmatmul.mubr.f32.gmra.mrb[0].mxu0 %v3364
      %v3574 = vpop.f32.mrb[0].mxu0
      %v3575 = vadd.f32 0.0, %v3574
      %v3576 = vpop.f32.mrb[0].mxu0
      %3577 = vmatprep.mubr.f32.mxu0 0.0
      %3578 = vmatmul.mubr.f32.gmra.mrb[0].mxu0 %v3367
      %v3579 = vpop.f32.mrb[0].mxu0
      %v3580 = vadd.f32 0.0, %v3579
      %v3581 = vpop.f32.mrb[0].mxu0
      %3582 = vmatprep.mubr.f32.mxu0 0.0
      %3583 = vmatmul.mubr.f32.gmra.mrb[0].mxu0 %v3370
      %v3584 = vpop.f32.mrb[0].mxu0
      %v3585 = vadd.f32 0.0, %v3584
      %v3586 = vpop.f32.mrb[0].mxu0
      %3587 = vmatprep.mubr.f32.mxu0 0.0
      %3588 = vmatmul.mubr.f32.gmra.mrb[0].mxu0 %v3373
      %v3589 = vpop.f32.mrb[0].mxu0
      %v3590 = vadd.f32 0.0, %v3589
      %v3591 = vpop.f32.mrb[0].mxu0
      %3592 = vmatprep.mubr.f32.mxu0 0.0
      %3593 = vmatmul.mubr.f32.gmra.mrb[0].mxu0 %v3376
      %v3594 = vpop.f32.mrb[0].mxu0
      %v3595 = vadd.f32 0.0, %v3594
      %v3596 = vpop.f32.mrb[0].mxu0
      %3597 = vmatprep.mubr.f32.mxu0 0.0
      %3598 = vmatmul.mubr.f32.gmra.mrb[0].mxu0 %v3379
      %v3599 = vpop.f32.mrb[0].mxu0
      %v3600 = vadd.f32 0.0, %v3599
      %v3601 = vpop.f32.mrb[0].mxu0
      %3602 = vmatprep.mubr.f32.mxu0 0.0
      %3603 = vmatmul.mubr.f32.gmra.mrb[0].mxu0 %v3382
      %v3604 = vpop.f32.mrb[0].mxu0
      %v3605 = vadd.f32 0.0, %v3604
      %v3606 = vpop.f32.mrb[0].mxu0
      %3607 = vmatprep.mubr.f32.mxu0 0.0
      %3608 = vmatmul.mubr.f32.gmra.mrb[0].mxu0 %v3385
      %v3609 = vpop.f32.mrb[0].mxu0
      %v3610 = vadd.f32 0.0, %v3609
      %v3611 = vpop.f32.mrb[0].mxu0
      %3612 = vmatprep.mubr.f32.mxu0 0.0
      %3613 = vmatmul.mubr.f32.gmra.mrb[0].mxu0 %v3388
      %v3614 = vpop.f32.mrb[0].mxu0
      %v3615 = vadd.f32 0.0, %v3614
      %v3616 = vpop.f32.mrb[0].mxu0
      %3617 = vdwg.mxu0
      %v3618 = vadd.f32 %v3228, %v3460
      %v3619 = vadd.f32 %v3229, %v3465
      %v3620 = vadd.f32 %v3230, %v3470
      %v3621 = vadd.f32 %v3231, %v3475
      %v3622 = vadd.f32 %v3232, %v3480
      %v3623 = vadd.f32 %v3233, %v3485
      %v3624 = vadd.f32 %v3234, %v3490
      %v3625 = vadd.f32 %v3235, %v3495
      %v3626 = vadd.f32 %v3236, %v3500
      %v3627 = vadd.f32 %v3237, %v3505
      %v3628 = vadd.f32 %v3238, %v3510
      %v3629 = vadd.f32 %v3239, %v3515
      %v3630 = vadd.f32 %v3240, %v3520
      %v3631 = vadd.f32 %v3241, %v3525
      %v3632 = vadd.f32 %v3242, %v3530
      %v3633 = vadd.f32 %v3243, %v3535
      %v3634 = vadd.f32 %v3244, %v3540
      %v3635 = vadd.f32 %v3245, %v3545
      %v3636 = vadd.f32 %v3246, %v3550
      %v3637 = vadd.f32 %v3247, %v3555
      %v3638 = vadd.f32 %v3248, %v3560
      %v3639 = vadd.f32 %v3249, %v3565
      %v3640 = vadd.f32 %v3250, %v3570
      %v3641 = vadd.f32 %v3251, %v3575
      %v3642 = vadd.f32 %v3252, %v3580
      %v3643 = vadd.f32 %v3253, %v3585
      %v3644 = vadd.f32 %v3254, %v3590
      %v3645 = vadd.f32 %v3255, %v3595
      %v3646 = vadd.f32 %v3256, %v3600
      %v3647 = vadd.f32 %v3257, %v3605
      %v3648 = vadd.f32 %v3258, %v3610
      %v3649 = vadd.f32 %v3259, %v3615
      %v3650 = vld [vmem:[%s2] sm:$0x1]
      %v3652 = vlaneseq
      %v3653 = vshrl.u32 %v3652, 7
      %v3654 = vsub.s32 0, %v3653
      %v3655 = vrot.slane %v3650, %v3654
      %v3657 = vadd.f32 %v3618, %v3655
      %v3658 = vadd.f32 %v3619, %v3655
      %v3659 = vadd.f32 %v3620, %v3655
      %v3660 = vadd.f32 %v3621, %v3655
      %v3661 = vadd.f32 %v3622, %v3655
      %v3662 = vadd.f32 %v3623, %v3655
      %v3663 = vadd.f32 %v3624, %v3655
      %v3664 = vadd.f32 %v3625, %v3655
      %v3665 = vadd.f32 %v3626, %v3655
      %v3666 = vadd.f32 %v3627, %v3655
      %v3667 = vadd.f32 %v3628, %v3655
      %v3668 = vadd.f32 %v3629, %v3655
      %v3669 = vadd.f32 %v3630, %v3655
      %v3670 = vadd.f32 %v3631, %v3655
      %v3671 = vadd.f32 %v3632, %v3655
      %v3672 = vadd.f32 %v3633, %v3655
      %v3673 = vadd.f32 %v3634, %v3655
      %v3674 = vadd.f32 %v3635, %v3655
      %v3675 = vadd.f32 %v3636, %v3655
      %v3676 = vadd.f32 %v3637, %v3655
      %v3677 = vadd.f32 %v3638, %v3655
      %v3678 = vadd.f32 %v3639, %v3655
      %v3679 = vadd.f32 %v3640, %v3655
      %v3680 = vadd.f32 %v3641, %v3655
      %v3681 = vadd.f32 %v3642, %v3655
      %v3682 = vadd.f32 %v3643, %v3655
      %v3683 = vadd.f32 %v3644, %v3655
      %v3684 = vadd.f32 %v3645, %v3655
      %v3685 = vadd.f32 %v3646, %v3655
      %v3686 = vadd.f32 %v3647, %v3655
      %v3687 = vadd.f32 %v3648, %v3655
      %v3688 = vadd.f32 %v3649, %v3655
      %v3689 = vmax.f32 %v3657, 0.0
      %v3690 = vmax.f32 %v3658, 0.0
      %v3691 = vmax.f32 %v3659, 0.0
      %v3692 = vmax.f32 %v3660, 0.0
      %v3693 = vmax.f32 %v3661, 0.0
      %v3694 = vmax.f32 %v3662, 0.0
      %v3695 = vmax.f32 %v3663, 0.0
      %v3696 = vmax.f32 %v3664, 0.0
      %v3697 = vmax.f32 %v3665, 0.0
      %v3698 = vmax.f32 %v3666, 0.0
      %v3699 = vmax.f32 %v3667, 0.0
      %v3700 = vmax.f32 %v3668, 0.0
      %v3701 = vmax.f32 %v3669, 0.0
      %v3702 = vmax.f32 %v3670, 0.0
      %v3703 = vmax.f32 %v3671, 0.0
      %v3704 = vmax.f32 %v3672, 0.0
      %v3705 = vmax.f32 %v3673, 0.0
      %v3706 = vmax.f32 %v3674, 0.0
      %v3707 = vmax.f32 %v3675, 0.0
      %v3708 = vmax.f32 %v3676, 0.0
      %v3709 = vmax.f32 %v3677, 0.0
      %v3710 = vmax.f32 %v3678, 0.0
      %v3711 = vmax.f32 %v3679, 0.0
      %v3712 = vmax.f32 %v3680, 0.0
      %v3713 = vmax.f32 %v3681, 0.0
      %v3714 = vmax.f32 %v3682, 0.0
      %v3715 = vmax.f32 %v3683, 0.0
      %v3716 = vmax.f32 %v3684, 0.0
      %v3717 = vmax.f32 %v3685, 0.0
      %v3718 = vmax.f32 %v3686, 0.0
      %v3719 = vmax.f32 %v3687, 0.0
      %v3720 = vmax.f32 %v3688, 0.0
      %vm3721 = vcmask 64512
      %3722 = vst.msk [vmem:[%s192] sm:$0xff] %vm3721, %v3689
      %3723 = vst.msk [vmem:[%s192 + $0x8] sm:$0xff] %vm3721, %v3690
      %3724 = vst.msk [vmem:[%s192 + $0x10] sm:$0xff] %vm3721, %v3691
      %3725 = vst.msk [vmem:[%s192 + $0x18] sm:$0xff] %vm3721, %v3692
      %3726 = vst.msk [vmem:[%s192 + $0x20] sm:$0xff] %vm3721, %v3693
      %3727 = vst.msk [vmem:[%s192 + $0x28] sm:$0xff] %vm3721, %v3694
      %3728 = vst.msk [vmem:[%s192 + $0x30] sm:$0xff] %vm3721, %v3695
      %3729 = vst.msk [vmem:[%s192 + $0x38] sm:$0xff] %vm3721, %v3696
      %3730 = vst.msk [vmem:[%s192 + $0x40] sm:$0xff] %vm3721, %v3697
      %3731 = vst.msk [vmem:[%s192 + $0x48] sm:$0xff] %vm3721, %v3698
      %3732 = vst.msk [vmem:[%s192 + $0x50] sm:$0xff] %vm3721, %v3699
      %3733 = vst.msk [vmem:[%s192 + $0x58] sm:$0xff] %vm3721, %v3700
      %3734 = vst.msk [vmem:[%s192 + $0x60] sm:$0xff] %vm3721, %v3701
      %3735 = vst.msk [vmem:[%s192 + $0x68] sm:$0xff] %vm3721, %v3702
      %3736 = vst.msk [vmem:[%s192 + $0x70] sm:$0xff] %vm3721, %v3703
      %3737 = vst.msk [vmem:[%s192 + $0x78] sm:$0xff] %vm3721, %v3704
      %3738 = vst.msk [vmem:[%s192 + $0x80] sm:$0xff] %vm3721, %v3705
      %3739 = vst.msk [vmem:[%s192 + $0x88] sm:$0xff] %vm3721, %v3706
      %3740 = vst.msk [vmem:[%s192 + $0x90] sm:$0xff] %vm3721, %v3707
      %3741 = vst.msk [vmem:[%s192 + $0x98] sm:$0xff] %vm3721, %v3708
      %3742 = vst.msk [vmem:[%s192 + $0xa0] sm:$0xff] %vm3721, %v3709
      %3743 = vst.msk [vmem:[%s192 + $0xa8] sm:$0xff] %vm3721, %v3710
      %3744 = vst.msk [vmem:[%s192 + $0xb0] sm:$0xff] %vm3721, %v3711
      %3745 = vst.msk [vmem:[%s192 + $0xb8] sm:$0xff] %vm3721, %v3712
      %3746 = vst.msk [vmem:[%s192 + $0xc0] sm:$0xff] %vm3721, %v3713
      %3747 = vst.msk [vmem:[%s192 + $0xc8] sm:$0xff] %vm3721, %v3714
      %3748 = vst.msk [vmem:[%s192 + $0xd0] sm:$0xff] %vm3721, %v3715
      %3749 = vst.msk [vmem:[%s192 + $0xd8] sm:$0xff] %vm3721, %v3716
      %3750 = vst.msk [vmem:[%s192 + $0xe0] sm:$0xff] %vm3721, %v3717
      %3751 = vst.msk [vmem:[%s192 + $0xe8] sm:$0xff] %vm3721, %v3718
      %3752 = vst.msk [vmem:[%s192 + $0xf0] sm:$0xff] %vm3721, %v3719
      %3753 = vst.msk [vmem:[%s192 + $0xf8] sm:$0xff] %vm3721, %v3720
      %s3754 = smul.u32 32, %s19
      %p3755 = scmp.lt.s32.totalorder %s18, 1
      %s3756 = scalar_select %p3755, %s18, 1
      %p3757 = scmp.lt.s32.totalorder %s3754, 31
      %s3758 = scalar_select %p3757, %s3754, 31
      %s3759 = smul.addr %s3756, 32
      %s3760 = sadd.s32 %s3758, %s3759
      %s3761 = smul.addr %s3760, 8
      %s3762 = scalar_lea.vmem %s3, %s3761
      // Predicated region
      $region33: #{tpu_custom_call.1} parent=31 // pred_check
        %p3763 = pneg %p114
      $region34: #{tpu_custom_call.1} parent=31 // pred_check_branch
        %3765 = sbr.rel (%p3763) target = $region36
      $region35: #{tpu_custom_call.1} parent=31 // pred_region
        %s3766 = smul.u32 32, %s19
      $region36: #{tpu_custom_call.1} parent=31 // pred_fallthru
        _
    $region32: #{tpu_custom_call.1} parent=5 // pred_fallthru
      _
    %p3767 = scmp.le.s32.totalorder 2, %s9
    // Predicated region
    $region37: #{tpu_custom_call.1} parent=5 // pred_check
      %p3768 = pneg %p3767
    $region38: #{tpu_custom_call.1} parent=5 // pred_check_branch
      %3770 = sbr.rel (%p3768) target = $region40
    $region39: #{tpu_custom_call.1} parent=5 // pred_region
      %s3771 = ssub.s32 %s9, 2
      // Predicated region
      $region41: #{tpu_custom_call.1} parent=39 // pred_check
        %p3772 = pneg %p120
      $region42: #{tpu_custom_call.1} parent=39 // pred_check_branch
        %3774 = sbr.rel (%p3772) target = $region44
      $region43: #{tpu_custom_call.1} parent=39 // pred_region
        %s3775 = smul.u32 32, %s21
        %p3776 = scmp.lt.s32.totalorder %s20, 1
        %s3777 = scalar_select %p3776, %s20, 1
        %p3778 = scmp.lt.s32.totalorder %s3775, 31
        %s3779 = scalar_select %p3778, %s3775, 31
        %s3780 = smul.addr %s3777, 32
        %s3781 = sadd.s32 %s3779, %s3780
        %s3782 = smul.addr %s3781, 8
        %s3783 = scalar_lea.vmem %s3, %s3782
      $region44: #{tpu_custom_call.1} parent=39 // pred_fallthru
        _
    $region40: #{tpu_custom_call.1} parent=5 // pred_fallthru
      _
  $region6: #{tpu_custom_call.1} parent=0 // loop_footer
    %s13 = sadd.s32 1, %s9
  $region7: #{tpu_custom_call.1} parent=0 // loop_footer_branch
    %8 = sbr.rel target = $region3
  $region8: #{tpu_custom_call.1} parent=0 // loop_exit
    _

</llo_original>
